<compile_context>
chip_gen: v7x
topology: tpu7x:2x2x1
jax: 0.10.0
libtpu: 0.0.40
codegen_flags: <defaults>
</compile_context>

<pallas_src>
import math

import jax
import jax.numpy as jnp
import numpy as np
from jax.experimental import pallas as pl
from jax.experimental.pallas import tpu as pltpu


def _positional_encoding(d_model, length):
    """Matches PositionalEncoding() from the PyTorch source (returns (length, d_model))."""
    pe = np.zeros((length, d_model), dtype=np.float32)
    position = np.arange(0, length, dtype=np.float32)[:, None]
    div_term = np.exp(np.arange(0, d_model, 2, dtype=np.float32) * (-math.log(10000.0) / d_model))
    pe[:, 0::2] = np.sin(position * div_term)
    pe[:, 1::2] = np.cos(position * div_term)
    return jnp.asarray(pe)


def _xavier_uniform(key, out_dim, in_dim):
    # PyTorch Linear weight is (out, in); return its transpose so y = x @ W_t + b.
    bound = math.sqrt(6.0 / (in_dim + out_dim))
    w = jax.random.uniform(key, (out_dim, in_dim), dtype=jnp.float32, minval=-bound, maxval=bound)
    return w.T


def make_params(d_model, d_k, d_v, h, key):
    ks = jax.random.split(key, 4)
    return dict(
        wq=_xavier_uniform(ks[0], h * d_k, d_model), bq=jnp.zeros((1, h * d_k), jnp.float32),
        wk=_xavier_uniform(ks[1], h * d_k, d_model), bk=jnp.zeros((1, h * d_k), jnp.float32),
        wv=_xavier_uniform(ks[2], h * d_v, d_model), bv=jnp.zeros((1, h * d_v), jnp.float32),
        wo=_xavier_uniform(ks[3], d_model, h * d_v), bo=jnp.zeros((1, d_model), jnp.float32),
        gamma=jnp.ones((1, d_model), jnp.float32),   beta=jnp.zeros((1, d_model), jnp.float32),
        ratio=0.8,  # nn.Parameter(torch.tensor(0.8))
        bias=0.7,   # nn.Parameter(torch.tensor(0.7))
    )


def _tpu_generation_budget():
    """Generation-aware activation budget / scoped VMEM limit / TensorCore count hint."""
    try:
        info = pltpu.get_tpu_info()
        vmem_cap = int(getattr(info, "vmem_capacity_bytes", 64 << 20))
    except Exception:
        vmem_cap = 64 << 20  # conservative fallback (treat like v7x)
    if vmem_cap >= (100 << 20):
        # v5e / v6e: 128 MiB physical VMEM, single TensorCore per chip.
        return dict(budget=64 << 20, limit=96 << 20, two_tc=False)
    # v7x-like: 64 MiB VMEM per TensorCore, 2 TensorCores per chip.
    return dict(budget=20 << 20, limit=32 << 20, two_tc=True)


def _pick_batch_tile(b_s, nq, nk, d_model, h, d_k, d_v, budget, two_tc, rows_cap=256):
    """How many batch elements each grid step processes.

    The streamed q/k/v/out blocks are counted twice (Pallas double-buffers them);
    live in-kernel temporaries are counted once.  rows_cap bounds rq = bt*nq so
    the per-head (rq, nk) temporaries stay a modest number of vregs/VMEM tiles.
    """
    stream = 2 * (2 * nq * d_model + 2 * nk * d_model)              # q+out, k, v blocks (x2 buffers)
    live = (nq * d_model + 2 * nk * d_model                         # xq, xk, xv row views
            + nq * h * d_k + nk * h * d_k + nk * h * d_v            # Q, K, V
            + 8 * nq * nk                                           # att/counts/z/e/p + slack
            + 3 * nq * d_model)                                     # concat heads, out, res/y
    per_b = 4 * (stream + live)
    fixed = 4 * 2 * (3 * d_model * h * d_k + h * d_v * d_model + 8 * d_model)  # weights (2 buffers)
    avail = max(budget - fixed, per_b)
    bt = max(1, min(b_s, avail // max(per_b, 1), max(1, rows_cap // max(nq, 1))))
    while b_s % bt:
        bt -= 1
    # Only force >= 2 grid programs on 2-TensorCore parts; on single-TC chips a
    # split just doubles fixed per-step overhead for zero parallelism.
    if two_tc and b_s >= 2 and b_s // bt < 2:
        bt = max(1, b_s // 2)
        while b_s % bt:
            bt -= 1
    return max(bt, 1)


def multi_head_attention1(queries, keys, values, params, d_k, d_v, h):
    b_s, nq, d_model = queries.shape
    nk = keys.shape[1]

    # Positional-encoding bias pos2 = pos @ pos1.T  (setup / glue, plain JAX).
    pos = _positional_encoding(d_k, nq)     # (nq, d_k)
    pos1 = _positional_encoding(d_k, nk)    # (nk, d_k)
    pos2 = pos @ pos1.T                     # (nq, nk)

    ratio = 1.0 / (1.0 + math.exp(-float(params["ratio"])))   # sigmoid(ratio)
    top_k = int(ratio * nk)                                    # static, as in int(ratio*att.shape[-1])
    assert 1 <= top_k <= nk, f"degenerate top_k={top_k} for nk={nk}"
    bias_val = float(params["bias"])
    scale = 1.0 / math.sqrt(d_k)
    eps = 1e-5

    gen = _tpu_generation_budget()
    bt = _pick_batch_tile(b_s, nq, nk, d_model, h, d_k, d_v,
                          budget=gen["budget"], two_tc=gen["two_tc"])
    rq = bt * nq
    f32 = jnp.float32

    def kernel(q_ref, k_ref, v_ref, pos2_ref,
               wq_ref, bq_ref, wk_ref, bk_ref, wv_ref, bv_ref,
               wo_ref, bo_ref, g_ref, b_ref, o_ref):
        # Fold the batch tile into rows so the projections are full-width MXU matmuls.
        xq = q_ref[...].reshape(rq, d_model)          # (Bt*nq, d_model)
        xk = k_ref[...].reshape(bt * nk, d_model)     # (Bt*nk, d_model)
        xv = v_ref[...].reshape(bt * nk, d_model)

        def mm(a, b):
            return jnp.dot(a, b, preferred_element_type=f32)

        Q = mm(xq, wq_ref[...]) + bq_ref[...]         # (Bt*nq, h*d_k)
        K = mm(xk, wk_ref[...]) + bk_ref[...]         # (Bt*nk, h*d_k)
        V = mm(xv, wv_ref[...]) + bv_ref[...]         # (Bt*nk, h*d_v)

        Qs = Q * scale                                # fold 1/sqrt(d_k) into Q once

        # Positional bias: broadcast & flatten once (not per head).
        p2 = jnp.broadcast_to(pos2_ref[...][None], (bt, nq, nk)).reshape(rq, nk)

        head_outs = []
        for hh in range(h):                           # static unroll, h is small;
            # only the (rq, d_v) head output survives each iteration.
            qh = Qs[:, hh * d_k:(hh + 1) * d_k].reshape(bt, nq, d_k)
            kh = K[:,  hh * d_k:(hh + 1) * d_k].reshape(bt, nk, d_k)
            vh = V[:,  hh * d_v:(hh + 1) * d_v].reshape(bt, nk, d_v)

            att = jnp.einsum('bqd,bkd->bqk', qh, kh,
                             preferred_element_type=f32).reshape(rq, nk) + p2

            # ---- top-k threshold per row, 2-D lane-dense counting ----
            # counts[r, j] = #{j' : att[r, j'] >= att[r, j]}, accumulated over j'
            # with (rows, nk) compares only (no rank-3 compare tensor).
            counts = jnp.zeros_like(att)
            for j in range(nk):
                counts = counts + (att[:, j:j + 1] >= att).astype(f32)
            thresh = jnp.max(jnp.where(counts >= float(top_k), att, -jnp.inf),
                             axis=-1, keepdims=True)             # k-th largest value

            # softmax_with_bias1: softmax(att * bias) over kept entries.
            # Mask the exponent directly (robust even if bias <= 0) and subtract
            # the row max (mathematically identical, numerically stable).
            z = jnp.where(att < thresh, -jnp.inf, att * bias_val)
            z = z - jnp.max(z, axis=-1, keepdims=True)
            e = jnp.exp(z)
            inv = pl.reciprocal(jnp.sum(e, axis=-1, keepdims=True), approx=True)  # EUP
            p = e * inv

            oh = jnp.einsum('bqk,bkd->bqd', p.reshape(bt, nq, nk), vh,
                            preferred_element_type=f32).reshape(rq, d_v)
            head_outs.append(oh)

        # One fc_o matmul with a K = h*d_v contraction instead of h K=d_v pushes.
        o_cat = jnp.concatenate(head_outs, axis=-1)   # (rq, h*d_v)
        out = mm(o_cat, wo_ref[...]) + bo_ref[...]    # (rq, d_model)

        # TODO(synk): nn.Dropout layers are identity here (inference semantics).
        res = xq + out
        mu = jnp.mean(res, axis=-1, keepdims=True)
        var = jnp.mean((res - mu) ** 2, axis=-1, keepdims=True)
        y = (res - mu) * jax.lax.rsqrt(var + eps) * g_ref[...] + b_ref[...]
        o_ref[...] = y.reshape(bt, nq, d_model).astype(o_ref.dtype)

    def full(shape):
        return pl.BlockSpec(shape, lambda b, _s=shape: tuple(0 for _ in _s))

    grid_spec = pltpu.PrefetchScalarGridSpec(
        num_scalar_prefetch=0,
        grid=(b_s // bt,),
        in_specs=[
            pl.BlockSpec((bt, nq, d_model), lambda b: (b, 0, 0)),
            pl.BlockSpec((bt, nk, d_model), lambda b: (b, 0, 0)),
            pl.BlockSpec((bt, nk, d_model), lambda b: (b, 0, 0)),
            full((nq, nk)),
            full((d_model, h * d_k)), full((1, h * d_k)),
            full((d_model, h * d_k)), full((1, h * d_k)),
            full((d_model, h * d_v)), full((1, h * d_v)),
            full((h * d_v, d_model)), full((1, d_model)),
            full((1, d_model)), full((1, d_model)),
        ],
        out_specs=pl.BlockSpec((bt, nq, d_model), lambda b: (b, 0, 0)),
    )

    flops = 2 * b_s * (
        nq * d_model * h * d_k            # Q projection
        + nk * d_model * h * d_k          # K projection
        + nk * d_model * h * d_v          # V projection
        + h * nq * nk * d_k               # scores
        + h * nq * nk * d_v               # p @ V
        + nq * h * d_v * d_model          # output projection
        + h * nq * nk * nk                # top-k counting (VPU compares)
    )
    transcendentals = b_s * h * nq * nk   # exp
    bytes_accessed = 4 * (
        2 * b_s * nq * d_model + 2 * b_s * nk * d_model + nq * nk
        + 2 * d_model * h * d_k + d_model * h * d_v + h * d_v * d_model
        + 2 * h * d_k + h * d_v + 3 * d_model
    )

    return pl.pallas_call(
        kernel,
        out_shape=jax.ShapeDtypeStruct((b_s, nq, d_model), jnp.float32),
        grid_spec=grid_spec,
        compiler_params=pltpu.CompilerParams(
            dimension_semantics=("parallel",),
            vmem_limit_bytes=int(gen["limit"]),
        ),
        cost_estimate=pl.CostEstimate(flops=flops, transcendentals=transcendentals,
                                      bytes_accessed=bytes_accessed),
    )(queries, keys, values, pos2,
      params["wq"], params["bq"], params["wk"], params["bk"],
      params["wv"], params["bv"], params["wo"], params["bo"],
      params["gamma"], params["beta"])


def reference(queries, keys, values, params, d_k, d_v, h):
    """Pure-JAX mirror of the PyTorch forward (dropout = identity)."""
    b_s, nq, d_model = queries.shape
    nk = keys.shape[1]
    q = (queries @ params["wq"] + params["bq"]).reshape(b_s, nq, h, d_k).transpose(0, 2, 1, 3)
    k = (keys @ params["wk"] + params["bk"]).reshape(b_s, nk, h, d_k).transpose(0, 2, 3, 1)
    v = (values @ params["wv"] + params["bv"]).reshape(b_s, nk, h, d_v).transpose(0, 2, 1, 3)
    att = jnp.matmul(q, k) / math.sqrt(d_k)
    att = att + _positional_encoding(d_k, nq) @ _positional_encoding(d_k, nk).T
    ratio = 1.0 / (1.0 + math.exp(-float(params["ratio"])))
    top_k = int(ratio * nk)
    val, _ = jax.lax.top_k(att, top_k)
    thresh = val[..., -1:]
    att_ = jnp.where(att < thresh, -jnp.inf, att)
    e = jnp.exp(att_ * params["bias"])
    b = e / jnp.sum(e, axis=-1, keepdims=True)
    out = jnp.matmul(b, v).transpose(0, 2, 1, 3).reshape(b_s, nq, h * d_v)
    out = out @ params["wo"] + params["bo"]
    res = queries + out
    mu = jnp.mean(res, axis=-1, keepdims=True)
    var = jnp.mean((res - mu) ** 2, axis=-1, keepdims=True)
    return (res - mu) / jnp.sqrt(var + 1e-5) * params["gamma"] + params["beta"]


if __name__ == "__main__":
    d_model, d_k, d_v, h = 32, 8, 8, 4
    b_s, nq, nk = 2, 16, 16

    key = jax.random.PRNGKey(0)
    kq, kk, kv, kp = jax.random.split(key, 4)
    queries = jax.random.normal(kq, (b_s, nq, d_model), jnp.float32)
    keys = jax.random.normal(kk, (b_s, nk, d_model), jnp.float32)
    values = jax.random.normal(kv, (b_s, nk, d_model), jnp.float32)
    params = make_params(d_model, d_k, d_v, h, kp)

    out = multi_head_attention1(queries, keys, values, params, d_k, d_v, h)
    out = jax.block_until_ready(out)

    ref = jax.block_until_ready(reference(queries, keys, values, params, d_k, d_v, h))
    assert out.shape == (b_s, nq, d_model)
    # Tolerance accounts for the EUP approximate reciprocal (~1e-4 relative) used
    # in the kernel's softmax normalization; everything else is exact f32.
    np.testing.assert_allclose(np.asarray(out), np.asarray(ref), rtol=2e-3, atol=2e-3)
    print("KERNEL_OK")
</pallas_src>

<mosaic_0001>
module attributes {stable_mosaic.version = 11 : i64} {
  func.func @kernel(%arg0: i32, %arg1: memref<1x16x32xf32, #tpu.memory_space<vmem>>, %arg2: memref<1x16x32xf32, #tpu.memory_space<vmem>>, %arg3: memref<1x16x32xf32, #tpu.memory_space<vmem>>, %arg4: memref<16x16xf32, #tpu.memory_space<vmem>>, %arg5: memref<32x32xf32, #tpu.memory_space<vmem>>, %arg6: memref<1x32xf32, #tpu.memory_space<vmem>>, %arg7: memref<32x32xf32, #tpu.memory_space<vmem>>, %arg8: memref<1x32xf32, #tpu.memory_space<vmem>>, %arg9: memref<32x32xf32, #tpu.memory_space<vmem>>, %arg10: memref<1x32xf32, #tpu.memory_space<vmem>>, %arg11: memref<32x32xf32, #tpu.memory_space<vmem>>, %arg12: memref<1x32xf32, #tpu.memory_space<vmem>>, %arg13: memref<1x32xf32, #tpu.memory_space<vmem>>, %arg14: memref<1x32xf32, #tpu.memory_space<vmem>>, %arg15: memref<1x16x32xf32, #tpu.memory_space<vmem>>) attributes {dimension_semantics = [#tpu.dimension_semantics<parallel>], iteration_bounds = array<i64: 2>, scalar_prefetch = 0 : i64, scratch_operands = 0 : i64, tpu.core_type = #tpu.core_type<tc>, window_params = [{transform_indices = @transform_0, window_bounds = array<i64: 1, 16, 32>}, {transform_indices = @transform_1, window_bounds = array<i64: 1, 16, 32>}, {transform_indices = @transform_2, window_bounds = array<i64: 1, 16, 32>}, {pipeline_mode = #tpu.pipeline_mode<synchronous>, transform_indices = @transform_3, window_bounds = array<i64: 16, 16>}, {pipeline_mode = #tpu.pipeline_mode<synchronous>, transform_indices = @transform_4, window_bounds = array<i64: 32, 32>}, {pipeline_mode = #tpu.pipeline_mode<synchronous>, transform_indices = @transform_5, window_bounds = array<i64: 1, 32>}, {pipeline_mode = #tpu.pipeline_mode<synchronous>, transform_indices = @transform_6, window_bounds = array<i64: 32, 32>}, {pipeline_mode = #tpu.pipeline_mode<synchronous>, transform_indices = @transform_7, window_bounds = array<i64: 1, 32>}, {pipeline_mode = #tpu.pipeline_mode<synchronous>, transform_indices = @transform_8, window_bounds = array<i64: 32, 32>}, {pipeline_mode = #tpu.pipeline_mode<synchronous>, transform_indices = @transform_9, window_bounds = array<i64: 1, 32>}, {pipeline_mode = #tpu.pipeline_mode<synchronous>, transform_indices = @transform_10, window_bounds = array<i64: 32, 32>}, {pipeline_mode = #tpu.pipeline_mode<synchronous>, transform_indices = @transform_11, window_bounds = array<i64: 1, 32>}, {pipeline_mode = #tpu.pipeline_mode<synchronous>, transform_indices = @transform_12, window_bounds = array<i64: 1, 32>}, {pipeline_mode = #tpu.pipeline_mode<synchronous>, transform_indices = @transform_13, window_bounds = array<i64: 1, 32>}, {transform_indices = @transform_14, window_bounds = array<i64: 1, 16, 32>}]} {
    %c0 = arith.constant 0 : index
    %c0_0 = arith.constant 0 : index
    %c0_1 = arith.constant 0 : index
    %0 = vector.load %arg1[%c0, %c0_0, %c0_1] : memref<1x16x32xf32, #tpu.memory_space<vmem>>, vector<1x16x32xf32>
    %1 = vector.shape_cast %0 : vector<1x16x32xf32> to vector<16x32xf32>
    %c0_2 = arith.constant 0 : index
    %c0_3 = arith.constant 0 : index
    %c0_4 = arith.constant 0 : index
    %2 = vector.load %arg2[%c0_2, %c0_3, %c0_4] : memref<1x16x32xf32, #tpu.memory_space<vmem>>, vector<1x16x32xf32>
    %3 = vector.shape_cast %2 : vector<1x16x32xf32> to vector<16x32xf32>
    %c0_5 = arith.constant 0 : index
    %c0_6 = arith.constant 0 : index
    %c0_7 = arith.constant 0 : index
    %4 = vector.load %arg3[%c0_5, %c0_6, %c0_7] : memref<1x16x32xf32, #tpu.memory_space<vmem>>, vector<1x16x32xf32>
    %5 = vector.shape_cast %4 : vector<1x16x32xf32> to vector<16x32xf32>
    %c0_8 = arith.constant 0 : index
    %c0_9 = arith.constant 0 : index
    %6 = vector.load %arg5[%c0_8, %c0_9] : memref<32x32xf32, #tpu.memory_space<vmem>>, vector<32x32xf32>
    %cst = arith.constant dense<0.000000e+00> : vector<16x32xf32>
    %7 = tpu.matmul %1, %6, %cst {dimension_numbers = #tpu.dot_dimension_numbers<[1], [0], [0], [1], [0, 0, 1, 1], [], []>} : vector<16x32xf32>, vector<32x32xf32>, vector<16x32xf32> -> vector<16x32xf32>
    %c0_10 = arith.constant 0 : index
    %c0_11 = arith.constant 0 : index
    %8 = vector.load %arg6[%c0_10, %c0_11] : memref<1x32xf32, #tpu.memory_space<vmem>>, vector<1x32xf32>
    %9 = vector.broadcast %8 : vector<1x32xf32> to vector<16x32xf32>
    %10 = arith.addf %7, %9 : vector<16x32xf32>
    %c0_12 = arith.constant 0 : index
    %c0_13 = arith.constant 0 : index
    %11 = vector.load %arg7[%c0_12, %c0_13] : memref<32x32xf32, #tpu.memory_space<vmem>>, vector<32x32xf32>
    %cst_14 = arith.constant dense<0.000000e+00> : vector<16x32xf32>
    %12 = tpu.matmul %3, %11, %cst_14 {dimension_numbers = #tpu.dot_dimension_numbers<[1], [0], [0], [1], [0, 0, 1, 1], [], []>} : vector<16x32xf32>, vector<32x32xf32>, vector<16x32xf32> -> vector<16x32xf32>
    %c0_15 = arith.constant 0 : index
    %c0_16 = arith.constant 0 : index
    %13 = vector.load %arg8[%c0_15, %c0_16] : memref<1x32xf32, #tpu.memory_space<vmem>>, vector<1x32xf32>
    %14 = vector.broadcast %13 : vector<1x32xf32> to vector<16x32xf32>
    %15 = arith.addf %12, %14 : vector<16x32xf32>
    %c0_17 = arith.constant 0 : index
    %c0_18 = arith.constant 0 : index
    %16 = vector.load %arg9[%c0_17, %c0_18] : memref<32x32xf32, #tpu.memory_space<vmem>>, vector<32x32xf32>
    %cst_19 = arith.constant dense<0.000000e+00> : vector<16x32xf32>
    %17 = tpu.matmul %5, %16, %cst_19 {dimension_numbers = #tpu.dot_dimension_numbers<[1], [0], [0], [1], [0, 0, 1, 1], [], []>} : vector<16x32xf32>, vector<32x32xf32>, vector<16x32xf32> -> vector<16x32xf32>
    %c0_20 = arith.constant 0 : index
    %c0_21 = arith.constant 0 : index
    %18 = vector.load %arg10[%c0_20, %c0_21] : memref<1x32xf32, #tpu.memory_space<vmem>>, vector<1x32xf32>
    %19 = vector.broadcast %18 : vector<1x32xf32> to vector<16x32xf32>
    %20 = arith.addf %17, %19 : vector<16x32xf32>
    %cst_22 = arith.constant 0.353553385 : f32
    %21 = vector.broadcast %cst_22 : f32 to vector<16x32xf32>
    %22 = arith.mulf %10, %21 : vector<16x32xf32>
    %c0_23 = arith.constant 0 : index
    %c0_24 = arith.constant 0 : index
    %23 = vector.load %arg4[%c0_23, %c0_24] : memref<16x16xf32, #tpu.memory_space<vmem>>, vector<16x16xf32>
    %24 = vector.shape_cast %23 : vector<16x16xf32> to vector<1x16x16xf32>
    %25 = vector.shape_cast %24 : vector<1x16x16xf32> to vector<16x16xf32>
    %26 = vector.extract_strided_slice %22 {offsets = [0, 0], sizes = [16, 8], strides = [1, 1]} : vector<16x32xf32> to vector<16x8xf32>
    %27 = vector.shape_cast %26 : vector<16x8xf32> to vector<1x16x8xf32>
    %28 = vector.extract_strided_slice %15 {offsets = [0, 0], sizes = [16, 8], strides = [1, 1]} : vector<16x32xf32> to vector<16x8xf32>
    %29 = vector.shape_cast %28 : vector<16x8xf32> to vector<1x16x8xf32>
    %30 = vector.extract_strided_slice %20 {offsets = [0, 0], sizes = [16, 8], strides = [1, 1]} : vector<16x32xf32> to vector<16x8xf32>
    %31 = vector.shape_cast %30 : vector<16x8xf32> to vector<1x16x8xf32>
    "tpu.trace_start"() <{level = 10 : i32, message = "bqd,bkd->bqk"}> : () -> ()
    %cst_25 = arith.constant dense<0.000000e+00> : vector<1x16x16xf32>
    %32 = tpu.matmul %27, %29, %cst_25 {dimension_numbers = #tpu.dot_dimension_numbers<[2], [2], [1], [1], [0, 0, 0, 1, 1, 1], [0], [0]>} : vector<1x16x8xf32>, vector<1x16x8xf32>, vector<1x16x16xf32> -> vector<1x16x16xf32>
    "tpu.trace_stop"() : () -> ()
    %33 = vector.shape_cast %32 : vector<1x16x16xf32> to vector<16x16xf32>
    %34 = arith.addf %33, %25 : vector<16x16xf32>
    %cst_26 = arith.constant 0.000000e+00 : f32
    %35 = vector.broadcast %cst_26 : f32 to vector<16x16xf32>
    %36 = vector.extract_strided_slice %34 {offsets = [0, 0], sizes = [16, 1], strides = [1, 1]} : vector<16x16xf32> to vector<16x1xf32>
    %37 = vector.broadcast %36 : vector<16x1xf32> to vector<16x16xf32>
    %38 = arith.cmpf oge, %37, %34 : vector<16x16xf32>
    %39 = arith.extui %38 : vector<16x16xi1> to vector<16x16xi32>
    %40 = arith.sitofp %39 : vector<16x16xi32> to vector<16x16xf32>
    %41 = arith.addf %35, %40 : vector<16x16xf32>
    %42 = vector.extract_strided_slice %34 {offsets = [0, 1], sizes = [16, 1], strides = [1, 1]} : vector<16x16xf32> to vector<16x1xf32>
    %43 = vector.broadcast %42 : vector<16x1xf32> to vector<16x16xf32>
    %44 = arith.cmpf oge, %43, %34 : vector<16x16xf32>
    %45 = arith.extui %44 : vector<16x16xi1> to vector<16x16xi32>
    %46 = arith.sitofp %45 : vector<16x16xi32> to vector<16x16xf32>
    %47 = arith.addf %41, %46 : vector<16x16xf32>
    %48 = vector.extract_strided_slice %34 {offsets = [0, 2], sizes = [16, 1], strides = [1, 1]} : vector<16x16xf32> to vector<16x1xf32>
    %49 = vector.broadcast %48 : vector<16x1xf32> to vector<16x16xf32>
    %50 = arith.cmpf oge, %49, %34 : vector<16x16xf32>
    %51 = arith.extui %50 : vector<16x16xi1> to vector<16x16xi32>
    %52 = arith.sitofp %51 : vector<16x16xi32> to vector<16x16xf32>
    %53 = arith.addf %47, %52 : vector<16x16xf32>
    %54 = vector.extract_strided_slice %34 {offsets = [0, 3], sizes = [16, 1], strides = [1, 1]} : vector<16x16xf32> to vector<16x1xf32>
    %55 = vector.broadcast %54 : vector<16x1xf32> to vector<16x16xf32>
    %56 = arith.cmpf oge, %55, %34 : vector<16x16xf32>
    %57 = arith.extui %56 : vector<16x16xi1> to vector<16x16xi32>
    %58 = arith.sitofp %57 : vector<16x16xi32> to vector<16x16xf32>
    %59 = arith.addf %53, %58 : vector<16x16xf32>
    %60 = vector.extract_strided_slice %34 {offsets = [0, 4], sizes = [16, 1], strides = [1, 1]} : vector<16x16xf32> to vector<16x1xf32>
    %61 = vector.broadcast %60 : vector<16x1xf32> to vector<16x16xf32>
    %62 = arith.cmpf oge, %61, %34 : vector<16x16xf32>
    %63 = arith.extui %62 : vector<16x16xi1> to vector<16x16xi32>
    %64 = arith.sitofp %63 : vector<16x16xi32> to vector<16x16xf32>
    %65 = arith.addf %59, %64 : vector<16x16xf32>
    %66 = vector.extract_strided_slice %34 {offsets = [0, 5], sizes = [16, 1], strides = [1, 1]} : vector<16x16xf32> to vector<16x1xf32>
    %67 = vector.broadcast %66 : vector<16x1xf32> to vector<16x16xf32>
    %68 = arith.cmpf oge, %67, %34 : vector<16x16xf32>
    %69 = arith.extui %68 : vector<16x16xi1> to vector<16x16xi32>
    %70 = arith.sitofp %69 : vector<16x16xi32> to vector<16x16xf32>
    %71 = arith.addf %65, %70 : vector<16x16xf32>
    %72 = vector.extract_strided_slice %34 {offsets = [0, 6], sizes = [16, 1], strides = [1, 1]} : vector<16x16xf32> to vector<16x1xf32>
    %73 = vector.broadcast %72 : vector<16x1xf32> to vector<16x16xf32>
    %74 = arith.cmpf oge, %73, %34 : vector<16x16xf32>
    %75 = arith.extui %74 : vector<16x16xi1> to vector<16x16xi32>
    %76 = arith.sitofp %75 : vector<16x16xi32> to vector<16x16xf32>
    %77 = arith.addf %71, %76 : vector<16x16xf32>
    %78 = vector.extract_strided_slice %34 {offsets = [0, 7], sizes = [16, 1], strides = [1, 1]} : vector<16x16xf32> to vector<16x1xf32>
    %79 = vector.broadcast %78 : vector<16x1xf32> to vector<16x16xf32>
    %80 = arith.cmpf oge, %79, %34 : vector<16x16xf32>
    %81 = arith.extui %80 : vector<16x16xi1> to vector<16x16xi32>
    %82 = arith.sitofp %81 : vector<16x16xi32> to vector<16x16xf32>
    %83 = arith.addf %77, %82 : vector<16x16xf32>
    %84 = vector.extract_strided_slice %34 {offsets = [0, 8], sizes = [16, 1], strides = [1, 1]} : vector<16x16xf32> to vector<16x1xf32>
    %85 = vector.broadcast %84 : vector<16x1xf32> to vector<16x16xf32>
    %86 = arith.cmpf oge, %85, %34 : vector<16x16xf32>
    %87 = arith.extui %86 : vector<16x16xi1> to vector<16x16xi32>
    %88 = arith.sitofp %87 : vector<16x16xi32> to vector<16x16xf32>
    %89 = arith.addf %83, %88 : vector<16x16xf32>
    %90 = vector.extract_strided_slice %34 {offsets = [0, 9], sizes = [16, 1], strides = [1, 1]} : vector<16x16xf32> to vector<16x1xf32>
    %91 = vector.broadcast %90 : vector<16x1xf32> to vector<16x16xf32>
    %92 = arith.cmpf oge, %91, %34 : vector<16x16xf32>
    %93 = arith.extui %92 : vector<16x16xi1> to vector<16x16xi32>
    %94 = arith.sitofp %93 : vector<16x16xi32> to vector<16x16xf32>
    %95 = arith.addf %89, %94 : vector<16x16xf32>
    %96 = vector.extract_strided_slice %34 {offsets = [0, 10], sizes = [16, 1], strides = [1, 1]} : vector<16x16xf32> to vector<16x1xf32>
    %97 = vector.broadcast %96 : vector<16x1xf32> to vector<16x16xf32>
    %98 = arith.cmpf oge, %97, %34 : vector<16x16xf32>
    %99 = arith.extui %98 : vector<16x16xi1> to vector<16x16xi32>
    %100 = arith.sitofp %99 : vector<16x16xi32> to vector<16x16xf32>
    %101 = arith.addf %95, %100 : vector<16x16xf32>
    %102 = vector.extract_strided_slice %34 {offsets = [0, 11], sizes = [16, 1], strides = [1, 1]} : vector<16x16xf32> to vector<16x1xf32>
    %103 = vector.broadcast %102 : vector<16x1xf32> to vector<16x16xf32>
    %104 = arith.cmpf oge, %103, %34 : vector<16x16xf32>
    %105 = arith.extui %104 : vector<16x16xi1> to vector<16x16xi32>
    %106 = arith.sitofp %105 : vector<16x16xi32> to vector<16x16xf32>
    %107 = arith.addf %101, %106 : vector<16x16xf32>
    %108 = vector.extract_strided_slice %34 {offsets = [0, 12], sizes = [16, 1], strides = [1, 1]} : vector<16x16xf32> to vector<16x1xf32>
    %109 = vector.broadcast %108 : vector<16x1xf32> to vector<16x16xf32>
    %110 = arith.cmpf oge, %109, %34 : vector<16x16xf32>
    %111 = arith.extui %110 : vector<16x16xi1> to vector<16x16xi32>
    %112 = arith.sitofp %111 : vector<16x16xi32> to vector<16x16xf32>
    %113 = arith.addf %107, %112 : vector<16x16xf32>
    %114 = vector.extract_strided_slice %34 {offsets = [0, 13], sizes = [16, 1], strides = [1, 1]} : vector<16x16xf32> to vector<16x1xf32>
    %115 = vector.broadcast %114 : vector<16x1xf32> to vector<16x16xf32>
    %116 = arith.cmpf oge, %115, %34 : vector<16x16xf32>
    %117 = arith.extui %116 : vector<16x16xi1> to vector<16x16xi32>
    %118 = arith.sitofp %117 : vector<16x16xi32> to vector<16x16xf32>
    %119 = arith.addf %113, %118 : vector<16x16xf32>
    %120 = vector.extract_strided_slice %34 {offsets = [0, 14], sizes = [16, 1], strides = [1, 1]} : vector<16x16xf32> to vector<16x1xf32>
    %121 = vector.broadcast %120 : vector<16x1xf32> to vector<16x16xf32>
    %122 = arith.cmpf oge, %121, %34 : vector<16x16xf32>
    %123 = arith.extui %122 : vector<16x16xi1> to vector<16x16xi32>
    %124 = arith.sitofp %123 : vector<16x16xi32> to vector<16x16xf32>
    %125 = arith.addf %119, %124 : vector<16x16xf32>
    %126 = vector.extract_strided_slice %34 {offsets = [0, 15], sizes = [16, 1], strides = [1, 1]} : vector<16x16xf32> to vector<16x1xf32>
    %127 = vector.broadcast %126 : vector<16x1xf32> to vector<16x16xf32>
    %128 = arith.cmpf oge, %127, %34 : vector<16x16xf32>
    %129 = arith.extui %128 : vector<16x16xi1> to vector<16x16xi32>
    %130 = arith.sitofp %129 : vector<16x16xi32> to vector<16x16xf32>
    %131 = arith.addf %125, %130 : vector<16x16xf32>
    %cst_27 = arith.constant 1.100000e+01 : f32
    %132 = vector.broadcast %cst_27 : f32 to vector<16x16xf32>
    %133 = arith.cmpf oge, %131, %132 : vector<16x16xf32>
    %cst_28 = arith.constant 0xFF800000 : f32
    %134 = vector.broadcast %cst_28 : f32 to vector<16x16xf32>
    %135 = arith.select %133, %34, %134 : vector<16x16xi1>, vector<16x16xf32>
    %cst_29 = arith.constant dense<0xFF800000> : vector<16xf32>
    %136 = vector.multi_reduction <maximumf>, %135, %cst_29 [1] : vector<16x16xf32> to vector<16xf32>
    %137 = vector.shape_cast %136 : vector<16xf32> to vector<16x1xf32>
    %138 = vector.broadcast %137 : vector<16x1xf32> to vector<16x16xf32>
    %139 = arith.cmpf olt, %34, %138 : vector<16x16xf32>
    %cst_30 = arith.constant 0.699999988 : f32
    %140 = vector.broadcast %cst_30 : f32 to vector<16x16xf32>
    %141 = arith.mulf %34, %140 : vector<16x16xf32>
    %cst_31 = arith.constant 0xFF800000 : f32
    %142 = vector.broadcast %cst_31 : f32 to vector<16x16xf32>
    %143 = arith.select %139, %142, %141 : vector<16x16xi1>, vector<16x16xf32>
    %cst_32 = arith.constant dense<0xFF800000> : vector<16xf32>
    %144 = vector.multi_reduction <maximumf>, %143, %cst_32 [1] : vector<16x16xf32> to vector<16xf32>
    %145 = vector.shape_cast %144 : vector<16xf32> to vector<16x1xf32>
    %146 = vector.broadcast %145 : vector<16x1xf32> to vector<16x16xf32>
    %147 = arith.subf %143, %146 : vector<16x16xf32>
    %148 = math.exp %147 : vector<16x16xf32>
    %cst_33 = arith.constant dense<0.000000e+00> : vector<16xf32>
    %149 = vector.multi_reduction <add>, %148, %cst_33 [1] : vector<16x16xf32> to vector<16xf32>
    %150 = vector.shape_cast %149 : vector<16xf32> to vector<16x1xf32>
    %151 = tpu.reciprocal %150 {approx = true} : vector<16x1xf32> -> vector<16x1xf32>
    %152 = vector.broadcast %151 : vector<16x1xf32> to vector<16x16xf32>
    %153 = arith.mulf %148, %152 : vector<16x16xf32>
    %154 = vector.shape_cast %153 : vector<16x16xf32> to vector<1x16x16xf32>
    "tpu.trace_start"() <{level = 10 : i32, message = "bqk,bkd->bqd"}> : () -> ()
    %cst_34 = arith.constant dense<0.000000e+00> : vector<1x16x8xf32>
    %155 = tpu.matmul %154, %31, %cst_34 {dimension_numbers = #tpu.dot_dimension_numbers<[2], [1], [1], [2], [0, 0, 0, 1, 1, 2], [0], [0]>} : vector<1x16x16xf32>, vector<1x16x8xf32>, vector<1x16x8xf32> -> vector<1x16x8xf32>
    "tpu.trace_stop"() : () -> ()
    %156 = vector.shape_cast %155 : vector<1x16x8xf32> to vector<16x8xf32>
    %157 = vector.extract_strided_slice %22 {offsets = [0, 8], sizes = [16, 8], strides = [1, 1]} : vector<16x32xf32> to vector<16x8xf32>
    %158 = vector.shape_cast %157 : vector<16x8xf32> to vector<1x16x8xf32>
    %159 = vector.extract_strided_slice %15 {offsets = [0, 8], sizes = [16, 8], strides = [1, 1]} : vector<16x32xf32> to vector<16x8xf32>
    %160 = vector.shape_cast %159 : vector<16x8xf32> to vector<1x16x8xf32>
    %161 = vector.extract_strided_slice %20 {offsets = [0, 8], sizes = [16, 8], strides = [1, 1]} : vector<16x32xf32> to vector<16x8xf32>
    %162 = vector.shape_cast %161 : vector<16x8xf32> to vector<1x16x8xf32>
    "tpu.trace_start"() <{level = 10 : i32, message = "bqd,bkd->bqk"}> : () -> ()
    %cst_35 = arith.constant dense<0.000000e+00> : vector<1x16x16xf32>
    %163 = tpu.matmul %158, %160, %cst_35 {dimension_numbers = #tpu.dot_dimension_numbers<[2], [2], [1], [1], [0, 0, 0, 1, 1, 1], [0], [0]>} : vector<1x16x8xf32>, vector<1x16x8xf32>, vector<1x16x16xf32> -> vector<1x16x16xf32>
    "tpu.trace_stop"() : () -> ()
    %164 = vector.shape_cast %163 : vector<1x16x16xf32> to vector<16x16xf32>
    %165 = arith.addf %164, %25 : vector<16x16xf32>
    %cst_36 = arith.constant 0.000000e+00 : f32
    %166 = vector.broadcast %cst_36 : f32 to vector<16x16xf32>
    %167 = vector.extract_strided_slice %165 {offsets = [0, 0], sizes = [16, 1], strides = [1, 1]} : vector<16x16xf32> to vector<16x1xf32>
    %168 = vector.broadcast %167 : vector<16x1xf32> to vector<16x16xf32>
    %169 = arith.cmpf oge, %168, %165 : vector<16x16xf32>
    %170 = arith.extui %169 : vector<16x16xi1> to vector<16x16xi32>
    %171 = arith.sitofp %170 : vector<16x16xi32> to vector<16x16xf32>
    %172 = arith.addf %166, %171 : vector<16x16xf32>
    %173 = vector.extract_strided_slice %165 {offsets = [0, 1], sizes = [16, 1], strides = [1, 1]} : vector<16x16xf32> to vector<16x1xf32>
    %174 = vector.broadcast %173 : vector<16x1xf32> to vector<16x16xf32>
    %175 = arith.cmpf oge, %174, %165 : vector<16x16xf32>
    %176 = arith.extui %175 : vector<16x16xi1> to vector<16x16xi32>
    %177 = arith.sitofp %176 : vector<16x16xi32> to vector<16x16xf32>
    %178 = arith.addf %172, %177 : vector<16x16xf32>
    %179 = vector.extract_strided_slice %165 {offsets = [0, 2], sizes = [16, 1], strides = [1, 1]} : vector<16x16xf32> to vector<16x1xf32>
    %180 = vector.broadcast %179 : vector<16x1xf32> to vector<16x16xf32>
    %181 = arith.cmpf oge, %180, %165 : vector<16x16xf32>
    %182 = arith.extui %181 : vector<16x16xi1> to vector<16x16xi32>
    %183 = arith.sitofp %182 : vector<16x16xi32> to vector<16x16xf32>
    %184 = arith.addf %178, %183 : vector<16x16xf32>
    %185 = vector.extract_strided_slice %165 {offsets = [0, 3], sizes = [16, 1], strides = [1, 1]} : vector<16x16xf32> to vector<16x1xf32>
    %186 = vector.broadcast %185 : vector<16x1xf32> to vector<16x16xf32>
    %187 = arith.cmpf oge, %186, %165 : vector<16x16xf32>
    %188 = arith.extui %187 : vector<16x16xi1> to vector<16x16xi32>
    %189 = arith.sitofp %188 : vector<16x16xi32> to vector<16x16xf32>
    %190 = arith.addf %184, %189 : vector<16x16xf32>
    %191 = vector.extract_strided_slice %165 {offsets = [0, 4], sizes = [16, 1], strides = [1, 1]} : vector<16x16xf32> to vector<16x1xf32>
    %192 = vector.broadcast %191 : vector<16x1xf32> to vector<16x16xf32>
    %193 = arith.cmpf oge, %192, %165 : vector<16x16xf32>
    %194 = arith.extui %193 : vector<16x16xi1> to vector<16x16xi32>
    %195 = arith.sitofp %194 : vector<16x16xi32> to vector<16x16xf32>
    %196 = arith.addf %190, %195 : vector<16x16xf32>
    %197 = vector.extract_strided_slice %165 {offsets = [0, 5], sizes = [16, 1], strides = [1, 1]} : vector<16x16xf32> to vector<16x1xf32>
    %198 = vector.broadcast %197 : vector<16x1xf32> to vector<16x16xf32>
    %199 = arith.cmpf oge, %198, %165 : vector<16x16xf32>
    %200 = arith.extui %199 : vector<16x16xi1> to vector<16x16xi32>
    %201 = arith.sitofp %200 : vector<16x16xi32> to vector<16x16xf32>
    %202 = arith.addf %196, %201 : vector<16x16xf32>
    %203 = vector.extract_strided_slice %165 {offsets = [0, 6], sizes = [16, 1], strides = [1, 1]} : vector<16x16xf32> to vector<16x1xf32>
    %204 = vector.broadcast %203 : vector<16x1xf32> to vector<16x16xf32>
    %205 = arith.cmpf oge, %204, %165 : vector<16x16xf32>
    %206 = arith.extui %205 : vector<16x16xi1> to vector<16x16xi32>
    %207 = arith.sitofp %206 : vector<16x16xi32> to vector<16x16xf32>
    %208 = arith.addf %202, %207 : vector<16x16xf32>
    %209 = vector.extract_strided_slice %165 {offsets = [0, 7], sizes = [16, 1], strides = [1, 1]} : vector<16x16xf32> to vector<16x1xf32>
    %210 = vector.broadcast %209 : vector<16x1xf32> to vector<16x16xf32>
    %211 = arith.cmpf oge, %210, %165 : vector<16x16xf32>
    %212 = arith.extui %211 : vector<16x16xi1> to vector<16x16xi32>
    %213 = arith.sitofp %212 : vector<16x16xi32> to vector<16x16xf32>
    %214 = arith.addf %208, %213 : vector<16x16xf32>
    %215 = vector.extract_strided_slice %165 {offsets = [0, 8], sizes = [16, 1], strides = [1, 1]} : vector<16x16xf32> to vector<16x1xf32>
    %216 = vector.broadcast %215 : vector<16x1xf32> to vector<16x16xf32>
    %217 = arith.cmpf oge, %216, %165 : vector<16x16xf32>
    %218 = arith.extui %217 : vector<16x16xi1> to vector<16x16xi32>
    %219 = arith.sitofp %218 : vector<16x16xi32> to vector<16x16xf32>
    %220 = arith.addf %214, %219 : vector<16x16xf32>
    %221 = vector.extract_strided_slice %165 {offsets = [0, 9], sizes = [16, 1], strides = [1, 1]} : vector<16x16xf32> to vector<16x1xf32>
    %222 = vector.broadcast %221 : vector<16x1xf32> to vector<16x16xf32>
    %223 = arith.cmpf oge, %222, %165 : vector<16x16xf32>
    %224 = arith.extui %223 : vector<16x16xi1> to vector<16x16xi32>
    %225 = arith.sitofp %224 : vector<16x16xi32> to vector<16x16xf32>
    %226 = arith.addf %220, %225 : vector<16x16xf32>
    %227 = vector.extract_strided_slice %165 {offsets = [0, 10], sizes = [16, 1], strides = [1, 1]} : vector<16x16xf32> to vector<16x1xf32>
    %228 = vector.broadcast %227 : vector<16x1xf32> to vector<16x16xf32>
    %229 = arith.cmpf oge, %228, %165 : vector<16x16xf32>
    %230 = arith.extui %229 : vector<16x16xi1> to vector<16x16xi32>
    %231 = arith.sitofp %230 : vector<16x16xi32> to vector<16x16xf32>
    %232 = arith.addf %226, %231 : vector<16x16xf32>
    %233 = vector.extract_strided_slice %165 {offsets = [0, 11], sizes = [16, 1], strides = [1, 1]} : vector<16x16xf32> to vector<16x1xf32>
    %234 = vector.broadcast %233 : vector<16x1xf32> to vector<16x16xf32>
    %235 = arith.cmpf oge, %234, %165 : vector<16x16xf32>
    %236 = arith.extui %235 : vector<16x16xi1> to vector<16x16xi32>
    %237 = arith.sitofp %236 : vector<16x16xi32> to vector<16x16xf32>
    %238 = arith.addf %232, %237 : vector<16x16xf32>
    %239 = vector.extract_strided_slice %165 {offsets = [0, 12], sizes = [16, 1], strides = [1, 1]} : vector<16x16xf32> to vector<16x1xf32>
    %240 = vector.broadcast %239 : vector<16x1xf32> to vector<16x16xf32>
    %241 = arith.cmpf oge, %240, %165 : vector<16x16xf32>
    %242 = arith.extui %241 : vector<16x16xi1> to vector<16x16xi32>
    %243 = arith.sitofp %242 : vector<16x16xi32> to vector<16x16xf32>
    %244 = arith.addf %238, %243 : vector<16x16xf32>
    %245 = vector.extract_strided_slice %165 {offsets = [0, 13], sizes = [16, 1], strides = [1, 1]} : vector<16x16xf32> to vector<16x1xf32>
    %246 = vector.broadcast %245 : vector<16x1xf32> to vector<16x16xf32>
    %247 = arith.cmpf oge, %246, %165 : vector<16x16xf32>
    %248 = arith.extui %247 : vector<16x16xi1> to vector<16x16xi32>
    %249 = arith.sitofp %248 : vector<16x16xi32> to vector<16x16xf32>
    %250 = arith.addf %244, %249 : vector<16x16xf32>
    %251 = vector.extract_strided_slice %165 {offsets = [0, 14], sizes = [16, 1], strides = [1, 1]} : vector<16x16xf32> to vector<16x1xf32>
    %252 = vector.broadcast %251 : vector<16x1xf32> to vector<16x16xf32>
    %253 = arith.cmpf oge, %252, %165 : vector<16x16xf32>
    %254 = arith.extui %253 : vector<16x16xi1> to vector<16x16xi32>
    %255 = arith.sitofp %254 : vector<16x16xi32> to vector<16x16xf32>
    %256 = arith.addf %250, %255 : vector<16x16xf32>
    %257 = vector.extract_strided_slice %165 {offsets = [0, 15], sizes = [16, 1], strides = [1, 1]} : vector<16x16xf32> to vector<16x1xf32>
    %258 = vector.broadcast %257 : vector<16x1xf32> to vector<16x16xf32>
    %259 = arith.cmpf oge, %258, %165 : vector<16x16xf32>
    %260 = arith.extui %259 : vector<16x16xi1> to vector<16x16xi32>
    %261 = arith.sitofp %260 : vector<16x16xi32> to vector<16x16xf32>
    %262 = arith.addf %256, %261 : vector<16x16xf32>
    %cst_37 = arith.constant 1.100000e+01 : f32
    %263 = vector.broadcast %cst_37 : f32 to vector<16x16xf32>
    %264 = arith.cmpf oge, %262, %263 : vector<16x16xf32>
    %cst_38 = arith.constant 0xFF800000 : f32
    %265 = vector.broadcast %cst_38 : f32 to vector<16x16xf32>
    %266 = arith.select %264, %165, %265 : vector<16x16xi1>, vector<16x16xf32>
    %cst_39 = arith.constant dense<0xFF800000> : vector<16xf32>
    %267 = vector.multi_reduction <maximumf>, %266, %cst_39 [1] : vector<16x16xf32> to vector<16xf32>
    %268 = vector.shape_cast %267 : vector<16xf32> to vector<16x1xf32>
    %269 = vector.broadcast %268 : vector<16x1xf32> to vector<16x16xf32>
    %270 = arith.cmpf olt, %165, %269 : vector<16x16xf32>
    %cst_40 = arith.constant 0.699999988 : f32
    %271 = vector.broadcast %cst_40 : f32 to vector<16x16xf32>
    %272 = arith.mulf %165, %271 : vector<16x16xf32>
    %cst_41 = arith.constant 0xFF800000 : f32
    %273 = vector.broadcast %cst_41 : f32 to vector<16x16xf32>
    %274 = arith.select %270, %273, %272 : vector<16x16xi1>, vector<16x16xf32>
    %cst_42 = arith.constant dense<0xFF800000> : vector<16xf32>
    %275 = vector.multi_reduction <maximumf>, %274, %cst_42 [1] : vector<16x16xf32> to vector<16xf32>
    %276 = vector.shape_cast %275 : vector<16xf32> to vector<16x1xf32>
    %277 = vector.broadcast %276 : vector<16x1xf32> to vector<16x16xf32>
    %278 = arith.subf %274, %277 : vector<16x16xf32>
    %279 = math.exp %278 : vector<16x16xf32>
    %cst_43 = arith.constant dense<0.000000e+00> : vector<16xf32>
    %280 = vector.multi_reduction <add>, %279, %cst_43 [1] : vector<16x16xf32> to vector<16xf32>
    %281 = vector.shape_cast %280 : vector<16xf32> to vector<16x1xf32>
    %282 = tpu.reciprocal %281 {approx = true} : vector<16x1xf32> -> vector<16x1xf32>
    %283 = vector.broadcast %282 : vector<16x1xf32> to vector<16x16xf32>
    %284 = arith.mulf %279, %283 : vector<16x16xf32>
    %285 = vector.shape_cast %284 : vector<16x16xf32> to vector<1x16x16xf32>
    "tpu.trace_start"() <{level = 10 : i32, message = "bqk,bkd->bqd"}> : () -> ()
    %cst_44 = arith.constant dense<0.000000e+00> : vector<1x16x8xf32>
    %286 = tpu.matmul %285, %162, %cst_44 {dimension_numbers = #tpu.dot_dimension_numbers<[2], [1], [1], [2], [0, 0, 0, 1, 1, 2], [0], [0]>} : vector<1x16x16xf32>, vector<1x16x8xf32>, vector<1x16x8xf32> -> vector<1x16x8xf32>
    "tpu.trace_stop"() : () -> ()
    %287 = vector.shape_cast %286 : vector<1x16x8xf32> to vector<16x8xf32>
    %288 = vector.extract_strided_slice %22 {offsets = [0, 16], sizes = [16, 8], strides = [1, 1]} : vector<16x32xf32> to vector<16x8xf32>
    %289 = vector.shape_cast %288 : vector<16x8xf32> to vector<1x16x8xf32>
    %290 = vector.extract_strided_slice %15 {offsets = [0, 16], sizes = [16, 8], strides = [1, 1]} : vector<16x32xf32> to vector<16x8xf32>
    %291 = vector.shape_cast %290 : vector<16x8xf32> to vector<1x16x8xf32>
    %292 = vector.extract_strided_slice %20 {offsets = [0, 16], sizes = [16, 8], strides = [1, 1]} : vector<16x32xf32> to vector<16x8xf32>
    %293 = vector.shape_cast %292 : vector<16x8xf32> to vector<1x16x8xf32>
    "tpu.trace_start"() <{level = 10 : i32, message = "bqd,bkd->bqk"}> : () -> ()
    %cst_45 = arith.constant dense<0.000000e+00> : vector<1x16x16xf32>
    %294 = tpu.matmul %289, %291, %cst_45 {dimension_numbers = #tpu.dot_dimension_numbers<[2], [2], [1], [1], [0, 0, 0, 1, 1, 1], [0], [0]>} : vector<1x16x8xf32>, vector<1x16x8xf32>, vector<1x16x16xf32> -> vector<1x16x16xf32>
    "tpu.trace_stop"() : () -> ()
    %295 = vector.shape_cast %294 : vector<1x16x16xf32> to vector<16x16xf32>
    %296 = arith.addf %295, %25 : vector<16x16xf32>
    %cst_46 = arith.constant 0.000000e+00 : f32
    %297 = vector.broadcast %cst_46 : f32 to vector<16x16xf32>
    %298 = vector.extract_strided_slice %296 {offsets = [0, 0], sizes = [16, 1], strides = [1, 1]} : vector<16x16xf32> to vector<16x1xf32>
    %299 = vector.broadcast %298 : vector<16x1xf32> to vector<16x16xf32>
    %300 = arith.cmpf oge, %299, %296 : vector<16x16xf32>
    %301 = arith.extui %300 : vector<16x16xi1> to vector<16x16xi32>
    %302 = arith.sitofp %301 : vector<16x16xi32> to vector<16x16xf32>
    %303 = arith.addf %297, %302 : vector<16x16xf32>
    %304 = vector.extract_strided_slice %296 {offsets = [0, 1], sizes = [16, 1], strides = [1, 1]} : vector<16x16xf32> to vector<16x1xf32>
    %305 = vector.broadcast %304 : vector<16x1xf32> to vector<16x16xf32>
    %306 = arith.cmpf oge, %305, %296 : vector<16x16xf32>
    %307 = arith.extui %306 : vector<16x16xi1> to vector<16x16xi32>
    %308 = arith.sitofp %307 : vector<16x16xi32> to vector<16x16xf32>
    %309 = arith.addf %303, %308 : vector<16x16xf32>
    %310 = vector.extract_strided_slice %296 {offsets = [0, 2], sizes = [16, 1], strides = [1, 1]} : vector<16x16xf32> to vector<16x1xf32>
    %311 = vector.broadcast %310 : vector<16x1xf32> to vector<16x16xf32>
    %312 = arith.cmpf oge, %311, %296 : vector<16x16xf32>
    %313 = arith.extui %312 : vector<16x16xi1> to vector<16x16xi32>
    %314 = arith.sitofp %313 : vector<16x16xi32> to vector<16x16xf32>
    %315 = arith.addf %309, %314 : vector<16x16xf32>
    %316 = vector.extract_strided_slice %296 {offsets = [0, 3], sizes = [16, 1], strides = [1, 1]} : vector<16x16xf32> to vector<16x1xf32>
    %317 = vector.broadcast %316 : vector<16x1xf32> to vector<16x16xf32>
    %318 = arith.cmpf oge, %317, %296 : vector<16x16xf32>
    %319 = arith.extui %318 : vector<16x16xi1> to vector<16x16xi32>
    %320 = arith.sitofp %319 : vector<16x16xi32> to vector<16x16xf32>
    %321 = arith.addf %315, %320 : vector<16x16xf32>
    %322 = vector.extract_strided_slice %296 {offsets = [0, 4], sizes = [16, 1], strides = [1, 1]} : vector<16x16xf32> to vector<16x1xf32>
    %323 = vector.broadcast %322 : vector<16x1xf32> to vector<16x16xf32>
    %324 = arith.cmpf oge, %323, %296 : vector<16x16xf32>
    %325 = arith.extui %324 : vector<16x16xi1> to vector<16x16xi32>
    %326 = arith.sitofp %325 : vector<16x16xi32> to vector<16x16xf32>
    %327 = arith.addf %321, %326 : vector<16x16xf32>
    %328 = vector.extract_strided_slice %296 {offsets = [0, 5], sizes = [16, 1], strides = [1, 1]} : vector<16x16xf32> to vector<16x1xf32>
    %329 = vector.broadcast %328 : vector<16x1xf32> to vector<16x16xf32>
    %330 = arith.cmpf oge, %329, %296 : vector<16x16xf32>
    %331 = arith.extui %330 : vector<16x16xi1> to vector<16x16xi32>
    %332 = arith.sitofp %331 : vector<16x16xi32> to vector<16x16xf32>
    %333 = arith.addf %327, %332 : vector<16x16xf32>
    %334 = vector.extract_strided_slice %296 {offsets = [0, 6], sizes = [16, 1], strides = [1, 1]} : vector<16x16xf32> to vector<16x1xf32>
    %335 = vector.broadcast %334 : vector<16x1xf32> to vector<16x16xf32>
    %336 = arith.cmpf oge, %335, %296 : vector<16x16xf32>
    %337 = arith.extui %336 : vector<16x16xi1> to vector<16x16xi32>
    %338 = arith.sitofp %337 : vector<16x16xi32> to vector<16x16xf32>
    %339 = arith.addf %333, %338 : vector<16x16xf32>
    %340 = vector.extract_strided_slice %296 {offsets = [0, 7], sizes = [16, 1], strides = [1, 1]} : vector<16x16xf32> to vector<16x1xf32>
    %341 = vector.broadcast %340 : vector<16x1xf32> to vector<16x16xf32>
    %342 = arith.cmpf oge, %341, %296 : vector<16x16xf32>
    %343 = arith.extui %342 : vector<16x16xi1> to vector<16x16xi32>
    %344 = arith.sitofp %343 : vector<16x16xi32> to vector<16x16xf32>
    %345 = arith.addf %339, %344 : vector<16x16xf32>
    %346 = vector.extract_strided_slice %296 {offsets = [0, 8], sizes = [16, 1], strides = [1, 1]} : vector<16x16xf32> to vector<16x1xf32>
    %347 = vector.broadcast %346 : vector<16x1xf32> to vector<16x16xf32>
    %348 = arith.cmpf oge, %347, %296 : vector<16x16xf32>
    %349 = arith.extui %348 : vector<16x16xi1> to vector<16x16xi32>
    %350 = arith.sitofp %349 : vector<16x16xi32> to vector<16x16xf32>
    %351 = arith.addf %345, %350 : vector<16x16xf32>
    %352 = vector.extract_strided_slice %296 {offsets = [0, 9], sizes = [16, 1], strides = [1, 1]} : vector<16x16xf32> to vector<16x1xf32>
    %353 = vector.broadcast %352 : vector<16x1xf32> to vector<16x16xf32>
    %354 = arith.cmpf oge, %353, %296 : vector<16x16xf32>
    %355 = arith.extui %354 : vector<16x16xi1> to vector<16x16xi32>
    %356 = arith.sitofp %355 : vector<16x16xi32> to vector<16x16xf32>
    %357 = arith.addf %351, %356 : vector<16x16xf32>
    %358 = vector.extract_strided_slice %296 {offsets = [0, 10], sizes = [16, 1], strides = [1, 1]} : vector<16x16xf32> to vector<16x1xf32>
    %359 = vector.broadcast %358 : vector<16x1xf32> to vector<16x16xf32>
    %360 = arith.cmpf oge, %359, %296 : vector<16x16xf32>
    %361 = arith.extui %360 : vector<16x16xi1> to vector<16x16xi32>
    %362 = arith.sitofp %361 : vector<16x16xi32> to vector<16x16xf32>
    %363 = arith.addf %357, %362 : vector<16x16xf32>
    %364 = vector.extract_strided_slice %296 {offsets = [0, 11], sizes = [16, 1], strides = [1, 1]} : vector<16x16xf32> to vector<16x1xf32>
    %365 = vector.broadcast %364 : vector<16x1xf32> to vector<16x16xf32>
    %366 = arith.cmpf oge, %365, %296 : vector<16x16xf32>
    %367 = arith.extui %366 : vector<16x16xi1> to vector<16x16xi32>
    %368 = arith.sitofp %367 : vector<16x16xi32> to vector<16x16xf32>
    %369 = arith.addf %363, %368 : vector<16x16xf32>
    %370 = vector.extract_strided_slice %296 {offsets = [0, 12], sizes = [16, 1], strides = [1, 1]} : vector<16x16xf32> to vector<16x1xf32>
    %371 = vector.broadcast %370 : vector<16x1xf32> to vector<16x16xf32>
    %372 = arith.cmpf oge, %371, %296 : vector<16x16xf32>
    %373 = arith.extui %372 : vector<16x16xi1> to vector<16x16xi32>
    %374 = arith.sitofp %373 : vector<16x16xi32> to vector<16x16xf32>
    %375 = arith.addf %369, %374 : vector<16x16xf32>
    %376 = vector.extract_strided_slice %296 {offsets = [0, 13], sizes = [16, 1], strides = [1, 1]} : vector<16x16xf32> to vector<16x1xf32>
    %377 = vector.broadcast %376 : vector<16x1xf32> to vector<16x16xf32>
    %378 = arith.cmpf oge, %377, %296 : vector<16x16xf32>
    %379 = arith.extui %378 : vector<16x16xi1> to vector<16x16xi32>
    %380 = arith.sitofp %379 : vector<16x16xi32> to vector<16x16xf32>
    %381 = arith.addf %375, %380 : vector<16x16xf32>
    %382 = vector.extract_strided_slice %296 {offsets = [0, 14], sizes = [16, 1], strides = [1, 1]} : vector<16x16xf32> to vector<16x1xf32>
    %383 = vector.broadcast %382 : vector<16x1xf32> to vector<16x16xf32>
    %384 = arith.cmpf oge, %383, %296 : vector<16x16xf32>
    %385 = arith.extui %384 : vector<16x16xi1> to vector<16x16xi32>
    %386 = arith.sitofp %385 : vector<16x16xi32> to vector<16x16xf32>
    %387 = arith.addf %381, %386 : vector<16x16xf32>
    %388 = vector.extract_strided_slice %296 {offsets = [0, 15], sizes = [16, 1], strides = [1, 1]} : vector<16x16xf32> to vector<16x1xf32>
    %389 = vector.broadcast %388 : vector<16x1xf32> to vector<16x16xf32>
    %390 = arith.cmpf oge, %389, %296 : vector<16x16xf32>
    %391 = arith.extui %390 : vector<16x16xi1> to vector<16x16xi32>
    %392 = arith.sitofp %391 : vector<16x16xi32> to vector<16x16xf32>
    %393 = arith.addf %387, %392 : vector<16x16xf32>
    %cst_47 = arith.constant 1.100000e+01 : f32
    %394 = vector.broadcast %cst_47 : f32 to vector<16x16xf32>
    %395 = arith.cmpf oge, %393, %394 : vector<16x16xf32>
    %cst_48 = arith.constant 0xFF800000 : f32
    %396 = vector.broadcast %cst_48 : f32 to vector<16x16xf32>
    %397 = arith.select %395, %296, %396 : vector<16x16xi1>, vector<16x16xf32>
    %cst_49 = arith.constant dense<0xFF800000> : vector<16xf32>
    %398 = vector.multi_reduction <maximumf>, %397, %cst_49 [1] : vector<16x16xf32> to vector<16xf32>
    %399 = vector.shape_cast %398 : vector<16xf32> to vector<16x1xf32>
    %400 = vector.broadcast %399 : vector<16x1xf32> to vector<16x16xf32>
    %401 = arith.cmpf olt, %296, %400 : vector<16x16xf32>
    %cst_50 = arith.constant 0.699999988 : f32
    %402 = vector.broadcast %cst_50 : f32 to vector<16x16xf32>
    %403 = arith.mulf %296, %402 : vector<16x16xf32>
    %cst_51 = arith.constant 0xFF800000 : f32
    %404 = vector.broadcast %cst_51 : f32 to vector<16x16xf32>
    %405 = arith.select %401, %404, %403 : vector<16x16xi1>, vector<16x16xf32>
    %cst_52 = arith.constant dense<0xFF800000> : vector<16xf32>
    %406 = vector.multi_reduction <maximumf>, %405, %cst_52 [1] : vector<16x16xf32> to vector<16xf32>
    %407 = vector.shape_cast %406 : vector<16xf32> to vector<16x1xf32>
    %408 = vector.broadcast %407 : vector<16x1xf32> to vector<16x16xf32>
    %409 = arith.subf %405, %408 : vector<16x16xf32>
    %410 = math.exp %409 : vector<16x16xf32>
    %cst_53 = arith.constant dense<0.000000e+00> : vector<16xf32>
    %411 = vector.multi_reduction <add>, %410, %cst_53 [1] : vector<16x16xf32> to vector<16xf32>
    %412 = vector.shape_cast %411 : vector<16xf32> to vector<16x1xf32>
    %413 = tpu.reciprocal %412 {approx = true} : vector<16x1xf32> -> vector<16x1xf32>
    %414 = vector.broadcast %413 : vector<16x1xf32> to vector<16x16xf32>
    %415 = arith.mulf %410, %414 : vector<16x16xf32>
    %416 = vector.shape_cast %415 : vector<16x16xf32> to vector<1x16x16xf32>
    "tpu.trace_start"() <{level = 10 : i32, message = "bqk,bkd->bqd"}> : () -> ()
    %cst_54 = arith.constant dense<0.000000e+00> : vector<1x16x8xf32>
    %417 = tpu.matmul %416, %293, %cst_54 {dimension_numbers = #tpu.dot_dimension_numbers<[2], [1], [1], [2], [0, 0, 0, 1, 1, 2], [0], [0]>} : vector<1x16x16xf32>, vector<1x16x8xf32>, vector<1x16x8xf32> -> vector<1x16x8xf32>
    "tpu.trace_stop"() : () -> ()
    %418 = vector.shape_cast %417 : vector<1x16x8xf32> to vector<16x8xf32>
    %419 = vector.extract_strided_slice %22 {offsets = [0, 24], sizes = [16, 8], strides = [1, 1]} : vector<16x32xf32> to vector<16x8xf32>
    %420 = vector.shape_cast %419 : vector<16x8xf32> to vector<1x16x8xf32>
    %421 = vector.extract_strided_slice %15 {offsets = [0, 24], sizes = [16, 8], strides = [1, 1]} : vector<16x32xf32> to vector<16x8xf32>
    %422 = vector.shape_cast %421 : vector<16x8xf32> to vector<1x16x8xf32>
    %423 = vector.extract_strided_slice %20 {offsets = [0, 24], sizes = [16, 8], strides = [1, 1]} : vector<16x32xf32> to vector<16x8xf32>
    %424 = vector.shape_cast %423 : vector<16x8xf32> to vector<1x16x8xf32>
    "tpu.trace_start"() <{level = 10 : i32, message = "bqd,bkd->bqk"}> : () -> ()
    %cst_55 = arith.constant dense<0.000000e+00> : vector<1x16x16xf32>
    %425 = tpu.matmul %420, %422, %cst_55 {dimension_numbers = #tpu.dot_dimension_numbers<[2], [2], [1], [1], [0, 0, 0, 1, 1, 1], [0], [0]>} : vector<1x16x8xf32>, vector<1x16x8xf32>, vector<1x16x16xf32> -> vector<1x16x16xf32>
    "tpu.trace_stop"() : () -> ()
    %426 = vector.shape_cast %425 : vector<1x16x16xf32> to vector<16x16xf32>
    %427 = arith.addf %426, %25 : vector<16x16xf32>
    %cst_56 = arith.constant 0.000000e+00 : f32
    %428 = vector.broadcast %cst_56 : f32 to vector<16x16xf32>
    %429 = vector.extract_strided_slice %427 {offsets = [0, 0], sizes = [16, 1], strides = [1, 1]} : vector<16x16xf32> to vector<16x1xf32>
    %430 = vector.broadcast %429 : vector<16x1xf32> to vector<16x16xf32>
    %431 = arith.cmpf oge, %430, %427 : vector<16x16xf32>
    %432 = arith.extui %431 : vector<16x16xi1> to vector<16x16xi32>
    %433 = arith.sitofp %432 : vector<16x16xi32> to vector<16x16xf32>
    %434 = arith.addf %428, %433 : vector<16x16xf32>
    %435 = vector.extract_strided_slice %427 {offsets = [0, 1], sizes = [16, 1], strides = [1, 1]} : vector<16x16xf32> to vector<16x1xf32>
    %436 = vector.broadcast %435 : vector<16x1xf32> to vector<16x16xf32>
    %437 = arith.cmpf oge, %436, %427 : vector<16x16xf32>
    %438 = arith.extui %437 : vector<16x16xi1> to vector<16x16xi32>
    %439 = arith.sitofp %438 : vector<16x16xi32> to vector<16x16xf32>
    %440 = arith.addf %434, %439 : vector<16x16xf32>
    %441 = vector.extract_strided_slice %427 {offsets = [0, 2], sizes = [16, 1], strides = [1, 1]} : vector<16x16xf32> to vector<16x1xf32>
    %442 = vector.broadcast %441 : vector<16x1xf32> to vector<16x16xf32>
    %443 = arith.cmpf oge, %442, %427 : vector<16x16xf32>
    %444 = arith.extui %443 : vector<16x16xi1> to vector<16x16xi32>
    %445 = arith.sitofp %444 : vector<16x16xi32> to vector<16x16xf32>
    %446 = arith.addf %440, %445 : vector<16x16xf32>
    %447 = vector.extract_strided_slice %427 {offsets = [0, 3], sizes = [16, 1], strides = [1, 1]} : vector<16x16xf32> to vector<16x1xf32>
    %448 = vector.broadcast %447 : vector<16x1xf32> to vector<16x16xf32>
    %449 = arith.cmpf oge, %448, %427 : vector<16x16xf32>
    %450 = arith.extui %449 : vector<16x16xi1> to vector<16x16xi32>
    %451 = arith.sitofp %450 : vector<16x16xi32> to vector<16x16xf32>
    %452 = arith.addf %446, %451 : vector<16x16xf32>
    %453 = vector.extract_strided_slice %427 {offsets = [0, 4], sizes = [16, 1], strides = [1, 1]} : vector<16x16xf32> to vector<16x1xf32>
    %454 = vector.broadcast %453 : vector<16x1xf32> to vector<16x16xf32>
    %455 = arith.cmpf oge, %454, %427 : vector<16x16xf32>
    %456 = arith.extui %455 : vector<16x16xi1> to vector<16x16xi32>
    %457 = arith.sitofp %456 : vector<16x16xi32> to vector<16x16xf32>
    %458 = arith.addf %452, %457 : vector<16x16xf32>
    %459 = vector.extract_strided_slice %427 {offsets = [0, 5], sizes = [16, 1], strides = [1, 1]} : vector<16x16xf32> to vector<16x1xf32>
    %460 = vector.broadcast %459 : vector<16x1xf32> to vector<16x16xf32>
    %461 = arith.cmpf oge, %460, %427 : vector<16x16xf32>
    %462 = arith.extui %461 : vector<16x16xi1> to vector<16x16xi32>
    %463 = arith.sitofp %462 : vector<16x16xi32> to vector<16x16xf32>
    %464 = arith.addf %458, %463 : vector<16x16xf32>
    %465 = vector.extract_strided_slice %427 {offsets = [0, 6], sizes = [16, 1], strides = [1, 1]} : vector<16x16xf32> to vector<16x1xf32>
    %466 = vector.broadcast %465 : vector<16x1xf32> to vector<16x16xf32>
    %467 = arith.cmpf oge, %466, %427 : vector<16x16xf32>
    %468 = arith.extui %467 : vector<16x16xi1> to vector<16x16xi32>
    %469 = arith.sitofp %468 : vector<16x16xi32> to vector<16x16xf32>
    %470 = arith.addf %464, %469 : vector<16x16xf32>
    %471 = vector.extract_strided_slice %427 {offsets = [0, 7], sizes = [16, 1], strides = [1, 1]} : vector<16x16xf32> to vector<16x1xf32>
    %472 = vector.broadcast %471 : vector<16x1xf32> to vector<16x16xf32>
    %473 = arith.cmpf oge, %472, %427 : vector<16x16xf32>
    %474 = arith.extui %473 : vector<16x16xi1> to vector<16x16xi32>
    %475 = arith.sitofp %474 : vector<16x16xi32> to vector<16x16xf32>
    %476 = arith.addf %470, %475 : vector<16x16xf32>
    %477 = vector.extract_strided_slice %427 {offsets = [0, 8], sizes = [16, 1], strides = [1, 1]} : vector<16x16xf32> to vector<16x1xf32>
    %478 = vector.broadcast %477 : vector<16x1xf32> to vector<16x16xf32>
    %479 = arith.cmpf oge, %478, %427 : vector<16x16xf32>
    %480 = arith.extui %479 : vector<16x16xi1> to vector<16x16xi32>
    %481 = arith.sitofp %480 : vector<16x16xi32> to vector<16x16xf32>
    %482 = arith.addf %476, %481 : vector<16x16xf32>
    %483 = vector.extract_strided_slice %427 {offsets = [0, 9], sizes = [16, 1], strides = [1, 1]} : vector<16x16xf32> to vector<16x1xf32>
    %484 = vector.broadcast %483 : vector<16x1xf32> to vector<16x16xf32>
    %485 = arith.cmpf oge, %484, %427 : vector<16x16xf32>
    %486 = arith.extui %485 : vector<16x16xi1> to vector<16x16xi32>
    %487 = arith.sitofp %486 : vector<16x16xi32> to vector<16x16xf32>
    %488 = arith.addf %482, %487 : vector<16x16xf32>
    %489 = vector.extract_strided_slice %427 {offsets = [0, 10], sizes = [16, 1], strides = [1, 1]} : vector<16x16xf32> to vector<16x1xf32>
    %490 = vector.broadcast %489 : vector<16x1xf32> to vector<16x16xf32>
    %491 = arith.cmpf oge, %490, %427 : vector<16x16xf32>
    %492 = arith.extui %491 : vector<16x16xi1> to vector<16x16xi32>
    %493 = arith.sitofp %492 : vector<16x16xi32> to vector<16x16xf32>
    %494 = arith.addf %488, %493 : vector<16x16xf32>
    %495 = vector.extract_strided_slice %427 {offsets = [0, 11], sizes = [16, 1], strides = [1, 1]} : vector<16x16xf32> to vector<16x1xf32>
    %496 = vector.broadcast %495 : vector<16x1xf32> to vector<16x16xf32>
    %497 = arith.cmpf oge, %496, %427 : vector<16x16xf32>
    %498 = arith.extui %497 : vector<16x16xi1> to vector<16x16xi32>
    %499 = arith.sitofp %498 : vector<16x16xi32> to vector<16x16xf32>
    %500 = arith.addf %494, %499 : vector<16x16xf32>
    %501 = vector.extract_strided_slice %427 {offsets = [0, 12], sizes = [16, 1], strides = [1, 1]} : vector<16x16xf32> to vector<16x1xf32>
    %502 = vector.broadcast %501 : vector<16x1xf32> to vector<16x16xf32>
    %503 = arith.cmpf oge, %502, %427 : vector<16x16xf32>
    %504 = arith.extui %503 : vector<16x16xi1> to vector<16x16xi32>
    %505 = arith.sitofp %504 : vector<16x16xi32> to vector<16x16xf32>
    %506 = arith.addf %500, %505 : vector<16x16xf32>
    %507 = vector.extract_strided_slice %427 {offsets = [0, 13], sizes = [16, 1], strides = [1, 1]} : vector<16x16xf32> to vector<16x1xf32>
    %508 = vector.broadcast %507 : vector<16x1xf32> to vector<16x16xf32>
    %509 = arith.cmpf oge, %508, %427 : vector<16x16xf32>
    %510 = arith.extui %509 : vector<16x16xi1> to vector<16x16xi32>
    %511 = arith.sitofp %510 : vector<16x16xi32> to vector<16x16xf32>
    %512 = arith.addf %506, %511 : vector<16x16xf32>
    %513 = vector.extract_strided_slice %427 {offsets = [0, 14], sizes = [16, 1], strides = [1, 1]} : vector<16x16xf32> to vector<16x1xf32>
    %514 = vector.broadcast %513 : vector<16x1xf32> to vector<16x16xf32>
    %515 = arith.cmpf oge, %514, %427 : vector<16x16xf32>
    %516 = arith.extui %515 : vector<16x16xi1> to vector<16x16xi32>
    %517 = arith.sitofp %516 : vector<16x16xi32> to vector<16x16xf32>
    %518 = arith.addf %512, %517 : vector<16x16xf32>
    %519 = vector.extract_strided_slice %427 {offsets = [0, 15], sizes = [16, 1], strides = [1, 1]} : vector<16x16xf32> to vector<16x1xf32>
    %520 = vector.broadcast %519 : vector<16x1xf32> to vector<16x16xf32>
    %521 = arith.cmpf oge, %520, %427 : vector<16x16xf32>
    %522 = arith.extui %521 : vector<16x16xi1> to vector<16x16xi32>
    %523 = arith.sitofp %522 : vector<16x16xi32> to vector<16x16xf32>
    %524 = arith.addf %518, %523 : vector<16x16xf32>
    %cst_57 = arith.constant 1.100000e+01 : f32
    %525 = vector.broadcast %cst_57 : f32 to vector<16x16xf32>
    %526 = arith.cmpf oge, %524, %525 : vector<16x16xf32>
    %cst_58 = arith.constant 0xFF800000 : f32
    %527 = vector.broadcast %cst_58 : f32 to vector<16x16xf32>
    %528 = arith.select %526, %427, %527 : vector<16x16xi1>, vector<16x16xf32>
    %cst_59 = arith.constant dense<0xFF800000> : vector<16xf32>
    %529 = vector.multi_reduction <maximumf>, %528, %cst_59 [1] : vector<16x16xf32> to vector<16xf32>
    %530 = vector.shape_cast %529 : vector<16xf32> to vector<16x1xf32>
    %531 = vector.broadcast %530 : vector<16x1xf32> to vector<16x16xf32>
    %532 = arith.cmpf olt, %427, %531 : vector<16x16xf32>
    %cst_60 = arith.constant 0.699999988 : f32
    %533 = vector.broadcast %cst_60 : f32 to vector<16x16xf32>
    %534 = arith.mulf %427, %533 : vector<16x16xf32>
    %cst_61 = arith.constant 0xFF800000 : f32
    %535 = vector.broadcast %cst_61 : f32 to vector<16x16xf32>
    %536 = arith.select %532, %535, %534 : vector<16x16xi1>, vector<16x16xf32>
    %cst_62 = arith.constant dense<0xFF800000> : vector<16xf32>
    %537 = vector.multi_reduction <maximumf>, %536, %cst_62 [1] : vector<16x16xf32> to vector<16xf32>
    %538 = vector.shape_cast %537 : vector<16xf32> to vector<16x1xf32>
    %539 = vector.broadcast %538 : vector<16x1xf32> to vector<16x16xf32>
    %540 = arith.subf %536, %539 : vector<16x16xf32>
    %541 = math.exp %540 : vector<16x16xf32>
    %cst_63 = arith.constant dense<0.000000e+00> : vector<16xf32>
    %542 = vector.multi_reduction <add>, %541, %cst_63 [1] : vector<16x16xf32> to vector<16xf32>
    %543 = vector.shape_cast %542 : vector<16xf32> to vector<16x1xf32>
    %544 = tpu.reciprocal %543 {approx = true} : vector<16x1xf32> -> vector<16x1xf32>
    %545 = vector.broadcast %544 : vector<16x1xf32> to vector<16x16xf32>
    %546 = arith.mulf %541, %545 : vector<16x16xf32>
    %547 = vector.shape_cast %546 : vector<16x16xf32> to vector<1x16x16xf32>
    "tpu.trace_start"() <{level = 10 : i32, message = "bqk,bkd->bqd"}> : () -> ()
    %cst_64 = arith.constant dense<0.000000e+00> : vector<1x16x8xf32>
    %548 = tpu.matmul %547, %424, %cst_64 {dimension_numbers = #tpu.dot_dimension_numbers<[2], [1], [1], [2], [0, 0, 0, 1, 1, 2], [0], [0]>} : vector<1x16x16xf32>, vector<1x16x8xf32>, vector<1x16x8xf32> -> vector<1x16x8xf32>
    "tpu.trace_stop"() : () -> ()
    %549 = vector.shape_cast %548 : vector<1x16x8xf32> to vector<16x8xf32>
    %550 = tpu.concatenate %156, %287, %418, %549 in 1 : vector<16x8xf32>, vector<16x8xf32>, vector<16x8xf32>, vector<16x8xf32> -> vector<16x32xf32>
    %c0_65 = arith.constant 0 : index
    %c0_66 = arith.constant 0 : index
    %551 = vector.load %arg11[%c0_65, %c0_66] : memref<32x32xf32, #tpu.memory_space<vmem>>, vector<32x32xf32>
    %cst_67 = arith.constant dense<0.000000e+00> : vector<16x32xf32>
    %552 = tpu.matmul %550, %551, %cst_67 {dimension_numbers = #tpu.dot_dimension_numbers<[1], [0], [0], [1], [0, 0, 1, 1], [], []>} : vector<16x32xf32>, vector<32x32xf32>, vector<16x32xf32> -> vector<16x32xf32>
    %c0_68 = arith.constant 0 : index
    %c0_69 = arith.constant 0 : index
    %553 = vector.load %arg12[%c0_68, %c0_69] : memref<1x32xf32, #tpu.memory_space<vmem>>, vector<1x32xf32>
    %554 = vector.broadcast %553 : vector<1x32xf32> to vector<16x32xf32>
    %555 = arith.addf %552, %554 : vector<16x32xf32>
    %556 = arith.addf %1, %555 : vector<16x32xf32>
    %cst_70 = arith.constant dense<0.000000e+00> : vector<16xf32>
    %557 = vector.multi_reduction <add>, %556, %cst_70 [1] : vector<16x32xf32> to vector<16xf32>
    %558 = vector.shape_cast %557 : vector<16xf32> to vector<16x1xf32>
    %cst_71 = arith.constant 3.200000e+01 : f32
    %559 = vector.broadcast %cst_71 : f32 to vector<16x1xf32>
    %560 = arith.divf %558, %559 : vector<16x1xf32>
    %561 = vector.broadcast %560 : vector<16x1xf32> to vector<16x32xf32>
    %562 = arith.subf %556, %561 : vector<16x32xf32>
    %563 = arith.mulf %562, %562 : vector<16x32xf32>
    %cst_72 = arith.constant dense<0.000000e+00> : vector<16xf32>
    %564 = vector.multi_reduction <add>, %563, %cst_72 [1] : vector<16x32xf32> to vector<16xf32>
    %565 = vector.shape_cast %564 : vector<16xf32> to vector<16x1xf32>
    %cst_73 = arith.constant 3.200000e+01 : f32
    %566 = vector.broadcast %cst_73 : f32 to vector<16x1xf32>
    %567 = arith.divf %565, %566 : vector<16x1xf32>
    %568 = vector.broadcast %560 : vector<16x1xf32> to vector<16x32xf32>
    %569 = arith.subf %556, %568 : vector<16x32xf32>
    %cst_74 = arith.constant 9.99999974E-6 : f32
    %570 = vector.broadcast %cst_74 : f32 to vector<16x1xf32>
    %571 = arith.addf %567, %570 : vector<16x1xf32>
    %572 = math.rsqrt %571 : vector<16x1xf32>
    %573 = vector.broadcast %572 : vector<16x1xf32> to vector<16x32xf32>
    %574 = arith.mulf %569, %573 : vector<16x32xf32>
    %c0_75 = arith.constant 0 : index
    %c0_76 = arith.constant 0 : index
    %575 = vector.load %arg13[%c0_75, %c0_76] : memref<1x32xf32, #tpu.memory_space<vmem>>, vector<1x32xf32>
    %576 = vector.broadcast %575 : vector<1x32xf32> to vector<16x32xf32>
    %577 = arith.mulf %574, %576 : vector<16x32xf32>
    %c0_77 = arith.constant 0 : index
    %c0_78 = arith.constant 0 : index
    %578 = vector.load %arg14[%c0_77, %c0_78] : memref<1x32xf32, #tpu.memory_space<vmem>>, vector<1x32xf32>
    %579 = vector.broadcast %578 : vector<1x32xf32> to vector<16x32xf32>
    %580 = arith.addf %577, %579 : vector<16x32xf32>
    %581 = vector.shape_cast %580 : vector<16x32xf32> to vector<1x16x32xf32>
    %c0_79 = arith.constant 0 : index
    %c0_80 = arith.constant 0 : index
    %c0_81 = arith.constant 0 : index
    %582 = vector.load %arg15[%c0_79, %c0_80, %c0_81] : memref<1x16x32xf32, #tpu.memory_space<vmem>>, vector<1x16x32xf32>
    tpu.vector_store %arg15[%c0_79, %c0_80, %c0_81], %581 {strides = array<i32>} : memref<1x16x32xf32, #tpu.memory_space<vmem>>, vector<1x16x32xf32>,
    return
  }
  func.func @transform_0(%arg0: i32) -> (i32, i32, i32) {
    %c0_i32 = arith.constant 0 : i32
    %c0_i32_0 = arith.constant 0 : i32
    %c0_i32_1 = arith.constant 0 : i32
    return %arg0, %c0_i32, %c0_i32_0 : i32, i32, i32
  }
  func.func @transform_1(%arg0: i32) -> (i32, i32, i32) {
    %c0_i32 = arith.constant 0 : i32
    %c0_i32_0 = arith.constant 0 : i32
    %c0_i32_1 = arith.constant 0 : i32
    return %arg0, %c0_i32, %c0_i32_0 : i32, i32, i32
  }
  func.func @transform_2(%arg0: i32) -> (i32, i32, i32) {
    %c0_i32 = arith.constant 0 : i32
    %c0_i32_0 = arith.constant 0 : i32
    %c0_i32_1 = arith.constant 0 : i32
    return %arg0, %c0_i32, %c0_i32_0 : i32, i32, i32
  }
  func.func @transform_3(%arg0: i32) -> (i32, i32) {
    %c0_i32 = arith.constant 0 : i32
    %c0_i32_0 = arith.constant 0 : i32
    %c0_i32_1 = arith.constant 0 : i32
    return %c0_i32, %c0_i32_0 : i32, i32
  }
  func.func @transform_4(%arg0: i32) -> (i32, i32) {
    %c0_i32 = arith.constant 0 : i32
    %c0_i32_0 = arith.constant 0 : i32
    %c0_i32_1 = arith.constant 0 : i32
    return %c0_i32, %c0_i32_0 : i32, i32
  }
  func.func @transform_5(%arg0: i32) -> (i32, i32) {
    %c0_i32 = arith.constant 0 : i32
    %c0_i32_0 = arith.constant 0 : i32
    %c0_i32_1 = arith.constant 0 : i32
    return %c0_i32, %c0_i32_0 : i32, i32
  }
  func.func @transform_6(%arg0: i32) -> (i32, i32) {
    %c0_i32 = arith.constant 0 : i32
    %c0_i32_0 = arith.constant 0 : i32
    %c0_i32_1 = arith.constant 0 : i32
    return %c0_i32, %c0_i32_0 : i32, i32
  }
  func.func @transform_7(%arg0: i32) -> (i32, i32) {
    %c0_i32 = arith.constant 0 : i32
    %c0_i32_0 = arith.constant 0 : i32
    %c0_i32_1 = arith.constant 0 : i32
    return %c0_i32, %c0_i32_0 : i32, i32
  }
  func.func @transform_8(%arg0: i32) -> (i32, i32) {
    %c0_i32 = arith.constant 0 : i32
    %c0_i32_0 = arith.constant 0 : i32
    %c0_i32_1 = arith.constant 0 : i32
    return %c0_i32, %c0_i32_0 : i32, i32
  }
  func.func @transform_9(%arg0: i32) -> (i32, i32) {
    %c0_i32 = arith.constant 0 : i32
    %c0_i32_0 = arith.constant 0 : i32
    %c0_i32_1 = arith.constant 0 : i32
    return %c0_i32, %c0_i32_0 : i32, i32
  }
  func.func @transform_10(%arg0: i32) -> (i32, i32) {
    %c0_i32 = arith.constant 0 : i32
    %c0_i32_0 = arith.constant 0 : i32
    %c0_i32_1 = arith.constant 0 : i32
    return %c0_i32, %c0_i32_0 : i32, i32
  }
  func.func @transform_11(%arg0: i32) -> (i32, i32) {
    %c0_i32 = arith.constant 0 : i32
    %c0_i32_0 = arith.constant 0 : i32
    %c0_i32_1 = arith.constant 0 : i32
    return %c0_i32, %c0_i32_0 : i32, i32
  }
  func.func @transform_12(%arg0: i32) -> (i32, i32) {
    %c0_i32 = arith.constant 0 : i32
    %c0_i32_0 = arith.constant 0 : i32
    %c0_i32_1 = arith.constant 0 : i32
    return %c0_i32, %c0_i32_0 : i32, i32
  }
  func.func @transform_13(%arg0: i32) -> (i32, i32) {
    %c0_i32 = arith.constant 0 : i32
    %c0_i32_0 = arith.constant 0 : i32
    %c0_i32_1 = arith.constant 0 : i32
    return %c0_i32, %c0_i32_0 : i32, i32
  }
  func.func @transform_14(%arg0: i32) -> (i32, i32, i32) {
    %c0_i32 = arith.constant 0 : i32
    %c0_i32_0 = arith.constant 0 : i32
    %c0_i32_1 = arith.constant 0 : i32
    return %arg0, %c0_i32, %c0_i32_0 : i32, i32, i32
  }
}

</mosaic_0001>

<llo_original>
// kernel: tpu_custom_call.1
$region0: #{tpu_custom_call.1}
  #allocation0 [shape = 'u32[]', space=smem, size = 0x4, offset = 0x4, fixed_abs, tag = 'smem constant byte address 0x4 - core index']
  #allocation1 [shape = 'u32[144,128]{1,0:T(1,128)}', space=vmem, size = 0x12000, scoped, tag = 'internal scratch']
  %s0 = inlined_call_operand.hbm [shape: f32[2,16,32], index: 0, kind: input, shape index: {}]
  %s1 = inlined_call_operand.hbm [shape: f32[2,16,32], index: 1, kind: input, shape index: {}]
  %s2 = inlined_call_operand.hbm [shape: f32[2,16,32], index: 2, kind: input, shape index: {}]
  %s3 = inlined_call_operand.hbm [shape: f32[16,16], index: 3, kind: input, shape index: {}]
  %s4 = inlined_call_operand.hbm [shape: f32[32,32], index: 4, kind: input, shape index: {}]
  %s5 = inlined_call_operand.vmem [shape: f32[1,32], index: 5, kind: input, shape index: {}]
  %s6 = inlined_call_operand.hbm [shape: f32[32,32], index: 6, kind: input, shape index: {}]
  %s7 = inlined_call_operand.vmem [shape: f32[1,32], index: 7, kind: input, shape index: {}]
  %s8 = inlined_call_operand.hbm [shape: f32[32,32], index: 8, kind: input, shape index: {}]
  %s9 = inlined_call_operand.vmem [shape: f32[1,32], index: 9, kind: input, shape index: {}]
  %s10 = inlined_call_operand.vmem [shape: f32[32,32], index: 10, kind: input, shape index: {}]
  %s11 = inlined_call_operand.vmem [shape: f32[1,32], index: 11, kind: input, shape index: {}]
  %s12 = inlined_call_operand.vmem [shape: f32[1,32], index: 12, kind: input, shape index: {}]
  %s13 = inlined_call_operand.vmem [shape: f32[1,32], index: 13, kind: input, shape index: {}]
  %s14 = inlined_call_operand.hbm [shape: f32[2,16,32], index: 14, kind: output, shape index: {}]
  %s15 = sld [smem:[#allocation0]]
  $region117: #{tpu_custom_call.1} parent=0
    _
  %s17 = ssub.s32 1, %s15
  %s18 = scalar_select 0, %s17, %s15
  $region1: #{tpu_custom_call.1} parent=0
    #allocation2 [shape = 'u8[16384]{0}', space=vmem, size = 0x4000, scoped, tag = 'input window, operand 0']
    #allocation3 [shape = 's32[2]{0}', space=sflag, size = 0x8, scoped, tag = 'scoped memory for tpu_custom_call.1']
    #allocation4 [shape = 's32[2]{0}', space=sflag, size = 0x8, scoped, tag = 'scoped memory for tpu_custom_call.1']
    #allocation5 [shape = 'u8[16384]{0}', space=vmem, size = 0x4000, scoped, tag = 'input window, operand 1']
    #allocation6 [shape = 's32[2]{0}', space=sflag, size = 0x8, scoped, tag = 'scoped memory for tpu_custom_call.1']
    #allocation7 [shape = 'u8[16384]{0}', space=vmem, size = 0x4000, scoped, tag = 'input window, operand 2']
    #allocation8 [shape = 'u8[8192]{0}', space=vmem, size = 0x2000, scoped, tag = 'input window, operand 3, single buffered']
    #allocation9 [shape = 's32[1]{0}', space=sflag, size = 0x4, scoped, tag = 'scoped memory for tpu_custom_call.1']
    #allocation10 [shape = 'u8[16384]{0}', space=vmem, size = 0x4000, scoped, tag = 'input window, operand 4, single buffered']
    #allocation11 [shape = 'u8[16384]{0}', space=vmem, size = 0x4000, scoped, tag = 'input window, operand 6, single buffered']
    #allocation12 [shape = 's32[1]{0}', space=sflag, size = 0x4, scoped, tag = 'scoped memory for tpu_custom_call.1']
    #allocation13 [shape = 'u8[16384]{0}', space=vmem, size = 0x4000, scoped, tag = 'input window, operand 8, single buffered']
    #allocation14 [shape = 'u8[16384]{0}', space=vmem, size = 0x4000, scoped, tag = 'output window, operand 0']
    %19 = vsyncpa [#allocation3], 0
    %s20 = scalar_lea.sflag [#allocation3], 1
    %21 = vsyncpa %s20, 0
    %22 = vsyncpa [#allocation6], 0
    %s23 = scalar_lea.sflag [#allocation6], 1
    %24 = vsyncpa %s23, 0
    %25 = vsyncpa [#allocation9], 0
    %26 = vsyncpa [#allocation12], 0
    %27 = vsyncpa [#allocation4], 0
    %s28 = scalar_lea.sflag [#allocation4], 1
    %29 = vsyncpa %s28, 0
    loop: start=0, step=1, limit=4
    $region2: #{tpu_custom_call.1} parent=1 // loop_pre_header
      _
    $region3: #{tpu_custom_call.1} parent=1 // loop_header
      %s31 = sphi 0, %s35
      %p32 = scmp.ge.s32.totalorder %s31, 4
      %s41 = sphi 0, %s43
      %s44 = sphi 0, %s41
      %s45 = sphi 0, %s44
      %s61 = sphi 0, %s45
      %s67 = sphi 0, %s69
      %s70 = sphi 0, %s67
      %s71 = sphi 0, %s70
      %s87 = sphi 0, %s71
      %s93 = sphi 0, %s95
      %s96 = sphi 0, %s93
      %s97 = sphi 0, %s96
      %s113 = sphi 0, %s97
      %s117 = sphi 0, %s117
      %s119 = sphi 0, %s117
      %s120 = sphi 0, %s119
      %s134 = sphi 0, %s120
      %s138 = sphi 0, %s138
      %s140 = sphi 0, %s138
      %s141 = sphi 0, %s140
      %s155 = sphi 0, %s141
      %s159 = sphi 0, %s159
      %s161 = sphi 0, %s159
      %s162 = sphi 0, %s161
      %s176 = sphi 0, %s162
      %s180 = sphi 0, %s180
      %s182 = sphi 0, %s180
      %s183 = sphi 0, %s182
      %s197 = sphi 0, %s183
      %s201 = sphi 0, %s201
      %s203 = sphi 0, %s201
      %s204 = sphi 0, %s203
      %s218 = sphi 0, %s204
      %s222 = sphi 0, %s222
      %s224 = sphi 0, %s222
      %s225 = sphi 0, %s224
      %s239 = sphi 0, %s225
      %s243 = sphi 0, %s243
      %s245 = sphi 0, %s243
      %s246 = sphi 0, %s245
      %s260 = sphi 0, %s246
      %s264 = sphi 0, %s264
      %s266 = sphi 0, %s264
      %s267 = sphi 0, %s266
      %s281 = sphi 0, %s267
      %s285 = sphi 0, %s285
      %s287 = sphi 0, %s285
      %s288 = sphi 0, %s287
      %s302 = sphi 0, %s288
      %s306 = sphi 0, %s306
      %s308 = sphi 0, %s306
      %s309 = sphi 0, %s308
      %s323 = sphi 0, %s309
      %s327 = sphi 0, %s327
      %s329 = sphi 0, %s327
      %s330 = sphi 0, %s329
      %s344 = sphi 0, %s330
      %s350 = sphi 0, %s352
      %s353 = sphi 0, %s350
      %s354 = sphi 0, %s353
      %s370 = sphi 0, %s354
    $region4: #{tpu_custom_call.1} parent=1 // loop_header_branch
      %34 = sbr.rel (%p32) target = $region8
    $region5: #{tpu_custom_call.1} parent=1 // loop_body
      %s36 = ssub.s32 %s31, 1
      %s37 = ssub.s32 %s31, 2
      %s38 = sadd.s32 %s31, 1
      %s39 = ssub.s32 %s31, %s38
      %p40 = scmp.eq.s32.totalorder %s39, 0
      %s42 = sadd.s32 %s41, 1
      %s43 = scalar_select %p40, %s41, %s42
      %p46 = pneg %p40
      %p47 = scmp.eq.s32.totalorder %s31, 1
      %p48 = por %p46, %p47
      %p49 = scmp.ne.s32.totalorder %s41, %s44
      %p50 = scmp.eq.s32.totalorder %s31, 0
      %p51 = por %p49, %p50
      %p52 = scmp.ne.s32.totalorder %s41, %s44
      %p53 = scmp.eq.s32.totalorder %s36, 1
      %p54 = por %p52, %p53
      %p55 = scmp.ne.s32.totalorder %s44, %s45
      %p56 = scmp.eq.s32.totalorder %s36, 0
      %p57 = por %p55, %p56
      %p58 = scmp.ne.s32.totalorder %s44, %s45
      %p59 = scmp.eq.s32.totalorder %s37, 1
      %p60 = por %p58, %p59
      %p62 = scmp.ne.s32.totalorder %s45, %s61
      %p63 = scmp.eq.s32.totalorder %s37, 0
      %p64 = por %p62, %p63
      %s65 = ssub.s32 %s31, %s38
      %p66 = scmp.eq.s32.totalorder %s65, 0
      %s68 = sadd.s32 %s67, 1
      %s69 = scalar_select %p66, %s67, %s68
      %p72 = pneg %p66
      %p73 = scmp.eq.s32.totalorder %s31, 1
      %p74 = por %p72, %p73
      %p75 = scmp.ne.s32.totalorder %s67, %s70
      %p76 = scmp.eq.s32.totalorder %s31, 0
      %p77 = por %p75, %p76
      %p78 = scmp.ne.s32.totalorder %s67, %s70
      %p79 = scmp.eq.s32.totalorder %s36, 1
      %p80 = por %p78, %p79
      %p81 = scmp.ne.s32.totalorder %s70, %s71
      %p82 = scmp.eq.s32.totalorder %s36, 0
      %p83 = por %p81, %p82
      %p84 = scmp.ne.s32.totalorder %s70, %s71
      %p85 = scmp.eq.s32.totalorder %s37, 1
      %p86 = por %p84, %p85
      %p88 = scmp.ne.s32.totalorder %s71, %s87
      %p89 = scmp.eq.s32.totalorder %s37, 0
      %p90 = por %p88, %p89
      %s91 = ssub.s32 %s31, %s38
      %p92 = scmp.eq.s32.totalorder %s91, 0
      %s94 = sadd.s32 %s93, 1
      %s95 = scalar_select %p92, %s93, %s94
      %p98 = pneg %p92
      %p99 = scmp.eq.s32.totalorder %s31, 1
      %p100 = por %p98, %p99
      %p101 = scmp.ne.s32.totalorder %s93, %s96
      %p102 = scmp.eq.s32.totalorder %s31, 0
      %p103 = por %p101, %p102
      %p104 = scmp.ne.s32.totalorder %s93, %s96
      %p105 = scmp.eq.s32.totalorder %s36, 1
      %p106 = por %p104, %p105
      %p107 = scmp.ne.s32.totalorder %s96, %s97
      %p108 = scmp.eq.s32.totalorder %s36, 0
      %p109 = por %p107, %p108
      %p110 = scmp.ne.s32.totalorder %s96, %s97
      %p111 = scmp.eq.s32.totalorder %s37, 1
      %p112 = por %p110, %p111
      %p114 = scmp.ne.s32.totalorder %s97, %s113
      %p115 = scmp.eq.s32.totalorder %s37, 0
      %p116 = por %p114, %p115
      %s118 = sadd.s32 %s117, 1
      %p121 = scmp.eq.s32.totalorder %s31, 1
      %p122 = scmp.ne.s32.totalorder %s117, %s119
      %p123 = scmp.eq.s32.totalorder %s31, 0
      %p124 = por %p122, %p123
      %p125 = scmp.ne.s32.totalorder %s117, %s119
      %p126 = scmp.eq.s32.totalorder %s36, 1
      %p127 = por %p125, %p126
      %p128 = scmp.ne.s32.totalorder %s119, %s120
      %p129 = scmp.eq.s32.totalorder %s36, 0
      %p130 = por %p128, %p129
      %p131 = scmp.ne.s32.totalorder %s119, %s120
      %p132 = scmp.eq.s32.totalorder %s37, 1
      %p133 = por %p131, %p132
      %p135 = scmp.ne.s32.totalorder %s120, %s134
      %p136 = scmp.eq.s32.totalorder %s37, 0
      %p137 = por %p135, %p136
      %s139 = sadd.s32 %s138, 1
      %p142 = scmp.eq.s32.totalorder %s31, 1
      %p143 = scmp.ne.s32.totalorder %s138, %s140
      %p144 = scmp.eq.s32.totalorder %s31, 0
      %p145 = por %p143, %p144
      %p146 = scmp.ne.s32.totalorder %s138, %s140
      %p147 = scmp.eq.s32.totalorder %s36, 1
      %p148 = por %p146, %p147
      %p149 = scmp.ne.s32.totalorder %s140, %s141
      %p150 = scmp.eq.s32.totalorder %s36, 0
      %p151 = por %p149, %p150
      %p152 = scmp.ne.s32.totalorder %s140, %s141
      %p153 = scmp.eq.s32.totalorder %s37, 1
      %p154 = por %p152, %p153
      %p156 = scmp.ne.s32.totalorder %s141, %s155
      %p157 = scmp.eq.s32.totalorder %s37, 0
      %p158 = por %p156, %p157
      %s160 = sadd.s32 %s159, 1
      %p163 = scmp.eq.s32.totalorder %s31, 1
      %p164 = scmp.ne.s32.totalorder %s159, %s161
      %p165 = scmp.eq.s32.totalorder %s31, 0
      %p166 = por %p164, %p165
      %p167 = scmp.ne.s32.totalorder %s159, %s161
      %p168 = scmp.eq.s32.totalorder %s36, 1
      %p169 = por %p167, %p168
      %p170 = scmp.ne.s32.totalorder %s161, %s162
      %p171 = scmp.eq.s32.totalorder %s36, 0
      %p172 = por %p170, %p171
      %p173 = scmp.ne.s32.totalorder %s161, %s162
      %p174 = scmp.eq.s32.totalorder %s37, 1
      %p175 = por %p173, %p174
      %p177 = scmp.ne.s32.totalorder %s162, %s176
      %p178 = scmp.eq.s32.totalorder %s37, 0
      %p179 = por %p177, %p178
      %s181 = sadd.s32 %s180, 1
      %p184 = scmp.eq.s32.totalorder %s31, 1
      %p185 = scmp.ne.s32.totalorder %s180, %s182
      %p186 = scmp.eq.s32.totalorder %s31, 0
      %p187 = por %p185, %p186
      %p188 = scmp.ne.s32.totalorder %s180, %s182
      %p189 = scmp.eq.s32.totalorder %s36, 1
      %p190 = por %p188, %p189
      %p191 = scmp.ne.s32.totalorder %s182, %s183
      %p192 = scmp.eq.s32.totalorder %s36, 0
      %p193 = por %p191, %p192
      %p194 = scmp.ne.s32.totalorder %s182, %s183
      %p195 = scmp.eq.s32.totalorder %s37, 1
      %p196 = por %p194, %p195
      %p198 = scmp.ne.s32.totalorder %s183, %s197
      %p199 = scmp.eq.s32.totalorder %s37, 0
      %p200 = por %p198, %p199
      %s202 = sadd.s32 %s201, 1
      %p205 = scmp.eq.s32.totalorder %s31, 1
      %p206 = scmp.ne.s32.totalorder %s201, %s203
      %p207 = scmp.eq.s32.totalorder %s31, 0
      %p208 = por %p206, %p207
      %p209 = scmp.ne.s32.totalorder %s201, %s203
      %p210 = scmp.eq.s32.totalorder %s36, 1
      %p211 = por %p209, %p210
      %p212 = scmp.ne.s32.totalorder %s203, %s204
      %p213 = scmp.eq.s32.totalorder %s36, 0
      %p214 = por %p212, %p213
      %p215 = scmp.ne.s32.totalorder %s203, %s204
      %p216 = scmp.eq.s32.totalorder %s37, 1
      %p217 = por %p215, %p216
      %p219 = scmp.ne.s32.totalorder %s204, %s218
      %p220 = scmp.eq.s32.totalorder %s37, 0
      %p221 = por %p219, %p220
      %s223 = sadd.s32 %s222, 1
      %p226 = scmp.eq.s32.totalorder %s31, 1
      %p227 = scmp.ne.s32.totalorder %s222, %s224
      %p228 = scmp.eq.s32.totalorder %s31, 0
      %p229 = por %p227, %p228
      %p230 = scmp.ne.s32.totalorder %s222, %s224
      %p231 = scmp.eq.s32.totalorder %s36, 1
      %p232 = por %p230, %p231
      %p233 = scmp.ne.s32.totalorder %s224, %s225
      %p234 = scmp.eq.s32.totalorder %s36, 0
      %p235 = por %p233, %p234
      %p236 = scmp.ne.s32.totalorder %s224, %s225
      %p237 = scmp.eq.s32.totalorder %s37, 1
      %p238 = por %p236, %p237
      %p240 = scmp.ne.s32.totalorder %s225, %s239
      %p241 = scmp.eq.s32.totalorder %s37, 0
      %p242 = por %p240, %p241
      %s244 = sadd.s32 %s243, 1
      %p247 = scmp.eq.s32.totalorder %s31, 1
      %p248 = scmp.ne.s32.totalorder %s243, %s245
      %p249 = scmp.eq.s32.totalorder %s31, 0
      %p250 = por %p248, %p249
      %p251 = scmp.ne.s32.totalorder %s243, %s245
      %p252 = scmp.eq.s32.totalorder %s36, 1
      %p253 = por %p251, %p252
      %p254 = scmp.ne.s32.totalorder %s245, %s246
      %p255 = scmp.eq.s32.totalorder %s36, 0
      %p256 = por %p254, %p255
      %p257 = scmp.ne.s32.totalorder %s245, %s246
      %p258 = scmp.eq.s32.totalorder %s37, 1
      %p259 = por %p257, %p258
      %p261 = scmp.ne.s32.totalorder %s246, %s260
      %p262 = scmp.eq.s32.totalorder %s37, 0
      %p263 = por %p261, %p262
      %s265 = sadd.s32 %s264, 1
      %p268 = scmp.eq.s32.totalorder %s31, 1
      %p269 = scmp.ne.s32.totalorder %s264, %s266
      %p270 = scmp.eq.s32.totalorder %s31, 0
      %p271 = por %p269, %p270
      %p272 = scmp.ne.s32.totalorder %s264, %s266
      %p273 = scmp.eq.s32.totalorder %s36, 1
      %p274 = por %p272, %p273
      %p275 = scmp.ne.s32.totalorder %s266, %s267
      %p276 = scmp.eq.s32.totalorder %s36, 0
      %p277 = por %p275, %p276
      %p278 = scmp.ne.s32.totalorder %s266, %s267
      %p279 = scmp.eq.s32.totalorder %s37, 1
      %p280 = por %p278, %p279
      %p282 = scmp.ne.s32.totalorder %s267, %s281
      %p283 = scmp.eq.s32.totalorder %s37, 0
      %p284 = por %p282, %p283
      %s286 = sadd.s32 %s285, 1
      %p289 = scmp.eq.s32.totalorder %s31, 1
      %p290 = scmp.ne.s32.totalorder %s285, %s287
      %p291 = scmp.eq.s32.totalorder %s31, 0
      %p292 = por %p290, %p291
      %p293 = scmp.ne.s32.totalorder %s285, %s287
      %p294 = scmp.eq.s32.totalorder %s36, 1
      %p295 = por %p293, %p294
      %p296 = scmp.ne.s32.totalorder %s287, %s288
      %p297 = scmp.eq.s32.totalorder %s36, 0
      %p298 = por %p296, %p297
      %p299 = scmp.ne.s32.totalorder %s287, %s288
      %p300 = scmp.eq.s32.totalorder %s37, 1
      %p301 = por %p299, %p300
      %p303 = scmp.ne.s32.totalorder %s288, %s302
      %p304 = scmp.eq.s32.totalorder %s37, 0
      %p305 = por %p303, %p304
      %s307 = sadd.s32 %s306, 1
      %p310 = scmp.eq.s32.totalorder %s31, 1
      %p311 = scmp.ne.s32.totalorder %s306, %s308
      %p312 = scmp.eq.s32.totalorder %s31, 0
      %p313 = por %p311, %p312
      %p314 = scmp.ne.s32.totalorder %s306, %s308
      %p315 = scmp.eq.s32.totalorder %s36, 1
      %p316 = por %p314, %p315
      %p317 = scmp.ne.s32.totalorder %s308, %s309
      %p318 = scmp.eq.s32.totalorder %s36, 0
      %p319 = por %p317, %p318
      %p320 = scmp.ne.s32.totalorder %s308, %s309
      %p321 = scmp.eq.s32.totalorder %s37, 1
      %p322 = por %p320, %p321
      %p324 = scmp.ne.s32.totalorder %s309, %s323
      %p325 = scmp.eq.s32.totalorder %s37, 0
      %p326 = por %p324, %p325
      %s328 = sadd.s32 %s327, 1
      %p331 = scmp.eq.s32.totalorder %s31, 1
      %p332 = scmp.ne.s32.totalorder %s327, %s329
      %p333 = scmp.eq.s32.totalorder %s31, 0
      %p334 = por %p332, %p333
      %p335 = scmp.ne.s32.totalorder %s327, %s329
      %p336 = scmp.eq.s32.totalorder %s36, 1
      %p337 = por %p335, %p336
      %p338 = scmp.ne.s32.totalorder %s329, %s330
      %p339 = scmp.eq.s32.totalorder %s36, 0
      %p340 = por %p338, %p339
      %p341 = scmp.ne.s32.totalorder %s329, %s330
      %p342 = scmp.eq.s32.totalorder %s37, 1
      %p343 = por %p341, %p342
      %p345 = scmp.ne.s32.totalorder %s330, %s344
      %p346 = scmp.eq.s32.totalorder %s37, 0
      %p347 = por %p345, %p346
      %s348 = ssub.s32 %s31, %s38
      %p349 = scmp.eq.s32.totalorder %s348, 0
      %s351 = sadd.s32 %s350, 1
      %s352 = scalar_select %p349, %s350, %s351
      %p355 = pneg %p349
      %p356 = scmp.eq.s32.totalorder %s31, 1
      %p357 = por %p355, %p356
      %p358 = scmp.ne.s32.totalorder %s350, %s353
      %p359 = scmp.eq.s32.totalorder %s31, 0
      %p360 = por %p358, %p359
      %p361 = scmp.ne.s32.totalorder %s350, %s353
      %p362 = scmp.eq.s32.totalorder %s36, 1
      %p363 = por %p361, %p362
      %p364 = scmp.ne.s32.totalorder %s353, %s354
      %p365 = scmp.eq.s32.totalorder %s36, 0
      %p366 = por %p364, %p365
      %p367 = scmp.ne.s32.totalorder %s353, %s354
      %p368 = scmp.eq.s32.totalorder %s37, 1
      %p369 = por %p367, %p368
      %p371 = scmp.ne.s32.totalorder %s354, %s370
      %p372 = scmp.eq.s32.totalorder %s37, 0
      %p373 = por %p371, %p372
      %p374 = scmp.le.s32.totalorder 1, %s31
      %p375 = scmp.lt.s32.totalorder %s31, 3
      %p376 = pnand %p374, %p375
      %p377 = pneg %p376
      // Predicated region
      $region9: #{tpu_custom_call.1} parent=5 // pred_check
        _
      $region10: #{tpu_custom_call.1} parent=5 // pred_check_branch
        %379 = sbr.rel (%p376) target = $region12
      $region11: #{tpu_custom_call.1} parent=5 // pred_region
        %s380 = ssub.s32 %s31, 1
        // Predicated region
        $region13: #{tpu_custom_call.1} parent=11 // pred_check
          %p381 = pneg %p130
        $region14: #{tpu_custom_call.1} parent=11 // pred_check_branch
          %383 = sbr.rel (%p381) target = $region16
        $region15: #{tpu_custom_call.1} parent=11 // pred_region
          %s385 = ssub.s32 256, 256
          %386 = vsyncadd [#allocation9], %s385
          %s387 = sshll.u32 [#allocation8], 4
          %s388 = int_to_ptr.vmem [resolvable:$true] %s387
          %393 = dma.hbm_to_vmem [thread:$0]  %s3, 256, %s388, [#allocation9], 128, 128, 8
        $region16: #{tpu_custom_call.1} parent=11 // pred_fallthru
          _
        // Predicated region
        $region17: #{tpu_custom_call.1} parent=11 // pred_check
          %p394 = pneg %p151
        $region18: #{tpu_custom_call.1} parent=11 // pred_check_branch
          %396 = sbr.rel (%p394) target = $region20
        $region19: #{tpu_custom_call.1} parent=11 // pred_region
          %s398 = ssub.s32 512, 512
          %399 = vsyncadd [#allocation9], %s398
          %s400 = sshll.u32 [#allocation10], 4
          %s401 = int_to_ptr.vmem [resolvable:$true] %s400
          %406 = dma.hbm_to_vmem [thread:$0]  %s4, 512, %s401, [#allocation9], 128, 128, 8
        $region20: #{tpu_custom_call.1} parent=11 // pred_fallthru
          _
        // Predicated region
        $region21: #{tpu_custom_call.1} parent=11 // pred_check
          %p407 = pneg %p172
        $region22: #{tpu_custom_call.1} parent=11 // pred_check_branch
          %409 = sbr.rel (%p407) target = $region24
        $region23: #{tpu_custom_call.1} parent=11 // pred_region
          _
        $region24: #{tpu_custom_call.1} parent=11 // pred_fallthru
          _
        // Predicated region
        $region25: #{tpu_custom_call.1} parent=11 // pred_check
          %p410 = pneg %p193
        $region26: #{tpu_custom_call.1} parent=11 // pred_check_branch
          %412 = sbr.rel (%p410) target = $region28
        $region27: #{tpu_custom_call.1} parent=11 // pred_region
          %s414 = ssub.s32 512, 512
          %415 = vsyncadd [#allocation12], %s414
          %s416 = sshll.u32 [#allocation11], 4
          %s417 = int_to_ptr.vmem [resolvable:$true] %s416
          %422 = dma.hbm_to_vmem [thread:$0]  %s6, 512, %s417, [#allocation12], 128, 128, 8
        $region28: #{tpu_custom_call.1} parent=11 // pred_fallthru
          _
        // Predicated region
        $region29: #{tpu_custom_call.1} parent=11 // pred_check
          %p423 = pneg %p214
        $region30: #{tpu_custom_call.1} parent=11 // pred_check_branch
          %425 = sbr.rel (%p423) target = $region32
        $region31: #{tpu_custom_call.1} parent=11 // pred_region
          _
        $region32: #{tpu_custom_call.1} parent=11 // pred_fallthru
          _
        // Predicated region
        $region33: #{tpu_custom_call.1} parent=11 // pred_check
          %p426 = pneg %p235
        $region34: #{tpu_custom_call.1} parent=11 // pred_check_branch
          %428 = sbr.rel (%p426) target = $region36
        $region35: #{tpu_custom_call.1} parent=11 // pred_region
          %s430 = ssub.s32 512, 512
          %431 = vsyncadd [#allocation12], %s430
          %s432 = sshll.u32 [#allocation13], 4
          %s433 = int_to_ptr.vmem [resolvable:$true] %s432
          %438 = dma.hbm_to_vmem [thread:$0]  %s8, 512, %s433, [#allocation12], 128, 128, 8
        $region36: #{tpu_custom_call.1} parent=11 // pred_fallthru
          _
        // Predicated region
        $region37: #{tpu_custom_call.1} parent=11 // pred_check
          %p439 = pneg %p256
        $region38: #{tpu_custom_call.1} parent=11 // pred_check_branch
          %441 = sbr.rel (%p439) target = $region40
        $region39: #{tpu_custom_call.1} parent=11 // pred_region
          _
        $region40: #{tpu_custom_call.1} parent=11 // pred_fallthru
          _
        // Predicated region
        $region41: #{tpu_custom_call.1} parent=11 // pred_check
          %p442 = pneg %p277
        $region42: #{tpu_custom_call.1} parent=11 // pred_check_branch
          %444 = sbr.rel (%p442) target = $region44
        $region43: #{tpu_custom_call.1} parent=11 // pred_region
          _
        $region44: #{tpu_custom_call.1} parent=11 // pred_fallthru
          _
        // Predicated region
        $region45: #{tpu_custom_call.1} parent=11 // pred_check
          %p445 = pneg %p298
        $region46: #{tpu_custom_call.1} parent=11 // pred_check_branch
          %447 = sbr.rel (%p445) target = $region48
        $region47: #{tpu_custom_call.1} parent=11 // pred_region
          _
        $region48: #{tpu_custom_call.1} parent=11 // pred_fallthru
          _
        // Predicated region
        $region49: #{tpu_custom_call.1} parent=11 // pred_check
          %p448 = pneg %p319
        $region50: #{tpu_custom_call.1} parent=11 // pred_check_branch
          %450 = sbr.rel (%p448) target = $region52
        $region51: #{tpu_custom_call.1} parent=11 // pred_region
          _
        $region52: #{tpu_custom_call.1} parent=11 // pred_fallthru
          _
        // Predicated region
        $region53: #{tpu_custom_call.1} parent=11 // pred_check
          %p451 = pneg %p340
        $region54: #{tpu_custom_call.1} parent=11 // pred_check_branch
          %453 = sbr.rel (%p451) target = $region56
        $region55: #{tpu_custom_call.1} parent=11 // pred_region
          _
        $region56: #{tpu_custom_call.1} parent=11 // pred_fallthru
          _
      $region12: #{tpu_custom_call.1} parent=5 // pred_fallthru
        _
      %p454 = scmp.lt.s32.totalorder %s31, 2
      // Predicated region
      $region57: #{tpu_custom_call.1} parent=5 // pred_check
        %p455 = pneg %p454
      $region58: #{tpu_custom_call.1} parent=5 // pred_check_branch
        %457 = sbr.rel (%p455) target = $region60
      $region59: #{tpu_custom_call.1} parent=5 // pred_region
        // Predicated region
        $region61: #{tpu_custom_call.1} parent=59 // pred_check
          %p458 = pneg %p51
        $region62: #{tpu_custom_call.1} parent=59 // pred_check_branch
          %460 = sbr.rel (%p458) target = $region64
        $region63: #{tpu_custom_call.1} parent=59 // pred_region
          %s461 = sand.u32 %s41, 1
          %s462 = scalar_lea.sflag [#allocation3], %s461
          %s463 = sand.u32 %s41, 1
          %s464 = smul.addr %s463, 16
          %s465 = scalar_lea.vmem [#allocation2], %s464
          %s467 = ssub.s32 256, 256
          %468 = vsyncadd %s462, %s467
          %s469 = smul.addr %s31, 2
          %s470 = smul.addr %s469, 128
          %s471 = scalar_lea.hbm %s0, %s470
          %s472 = sshll.u32 %s465, 4
          %s473 = int_to_ptr.vmem [resolvable:$true] %s472
          %478 = dma.hbm_to_vmem [thread:$0]  %s471, 256, %s473, %s462, 128, 128, 8
        $region64: #{tpu_custom_call.1} parent=59 // pred_fallthru
          _
        // Predicated region
        $region65: #{tpu_custom_call.1} parent=59 // pred_check
          %p479 = pneg %p77
        $region66: #{tpu_custom_call.1} parent=59 // pred_check_branch
          %481 = sbr.rel (%p479) target = $region68
        $region67: #{tpu_custom_call.1} parent=59 // pred_region
          %s482 = sand.u32 %s31, 1
          %s483 = scalar_lea.sflag [#allocation6], %s482
          %s484 = sand.u32 %s67, 1
          %s485 = smul.addr %s484, 16
          %s486 = scalar_lea.vmem [#allocation5], %s485
          %s488 = ssub.s32 256, 256
          %489 = vsyncadd %s483, %s488
          %s490 = smul.addr %s31, 2
          %s491 = smul.addr %s490, 128
          %s492 = scalar_lea.hbm %s1, %s491
          %s493 = sshll.u32 %s486, 4
          %s494 = int_to_ptr.vmem [resolvable:$true] %s493
          %499 = dma.hbm_to_vmem [thread:$0]  %s492, 256, %s494, %s483, 128, 128, 8
        $region68: #{tpu_custom_call.1} parent=59 // pred_fallthru
          _
        // Predicated region
        $region69: #{tpu_custom_call.1} parent=59 // pred_check
          %p500 = pneg %p103
        $region70: #{tpu_custom_call.1} parent=59 // pred_check_branch
          %502 = sbr.rel (%p500) target = $region72
        $region71: #{tpu_custom_call.1} parent=59 // pred_region
          %s503 = sand.u32 %s31, 1
          %s504 = scalar_lea.sflag [#allocation6], %s503
          %s505 = sand.u32 %s93, 1
          %s506 = smul.addr %s505, 16
          %s507 = scalar_lea.vmem [#allocation7], %s506
          %s509 = ssub.s32 256, 256
          %510 = vsyncadd %s504, %s509
          %s511 = smul.addr %s31, 2
          %s512 = smul.addr %s511, 128
          %s513 = scalar_lea.hbm %s2, %s512
          %s514 = sshll.u32 %s507, 4
          %s515 = int_to_ptr.vmem [resolvable:$true] %s514
          %520 = dma.hbm_to_vmem [thread:$0]  %s513, 256, %s515, %s504, 128, 128, 8
        $region72: #{tpu_custom_call.1} parent=59 // pred_fallthru
          _
      $region60: #{tpu_custom_call.1} parent=5 // pred_fallthru
        _
      %p521 = scmp.le.s32.totalorder 1, %s31
      %p522 = scmp.lt.s32.totalorder %s31, 3
      %p523 = pnand %p521, %p522
      %p524 = pneg %p523
      // Predicated region
      $region73: #{tpu_custom_call.1} parent=5 // pred_check
        _
      $region74: #{tpu_custom_call.1} parent=5 // pred_check_branch
        %526 = sbr.rel (%p523) target = $region76
      $region75: #{tpu_custom_call.1} parent=5 // pred_region
        %s527 = ssub.s32 %s31, 1
        %s528 = sand.u32 %s44, 1
        %s529 = scalar_lea.sflag [#allocation3], %s528
        %s530 = sand.u32 %s44, 1
        %s531 = smul.addr %s530, 16
        %s532 = scalar_lea.vmem [#allocation2], %s531
        // Predicated region
        $region77: #{tpu_custom_call.1} parent=75 // pred_check
          %p533 = pneg %p57
        $region78: #{tpu_custom_call.1} parent=75 // pred_check_branch
          %535 = sbr.rel (%p533) target = $region80
        $region79: #{tpu_custom_call.1} parent=75 // pred_region
          %536 = dma.done %s529, 256
        $region80: #{tpu_custom_call.1} parent=75 // pred_fallthru
          _
        %s537 = sand.u32 %s36, 1
        %s538 = scalar_lea.sflag [#allocation6], %s537
        %s539 = sand.u32 %s70, 1
        %s540 = smul.addr %s539, 16
        %s541 = scalar_lea.vmem [#allocation5], %s540
        // Predicated region
        $region81: #{tpu_custom_call.1} parent=75 // pred_check
          %p542 = pneg %p83
        $region82: #{tpu_custom_call.1} parent=75 // pred_check_branch
          %544 = sbr.rel (%p542) target = $region84
        $region83: #{tpu_custom_call.1} parent=75 // pred_region
          %545 = dma.done %s538, 256
        $region84: #{tpu_custom_call.1} parent=75 // pred_fallthru
          _
        %s546 = sand.u32 %s36, 1
        %s547 = scalar_lea.sflag [#allocation6], %s546
        %s548 = sand.u32 %s96, 1
        %s549 = smul.addr %s548, 16
        %s550 = scalar_lea.vmem [#allocation7], %s549
        // Predicated region
        $region85: #{tpu_custom_call.1} parent=75 // pred_check
          %p551 = pneg %p109
        $region86: #{tpu_custom_call.1} parent=75 // pred_check_branch
          %553 = sbr.rel (%p551) target = $region88
        $region87: #{tpu_custom_call.1} parent=75 // pred_region
          %554 = dma.done %s547, 256
        $region88: #{tpu_custom_call.1} parent=75 // pred_fallthru
          _
        // Predicated region
        $region89: #{tpu_custom_call.1} parent=75 // pred_check
          %p555 = pneg %p130
        $region90: #{tpu_custom_call.1} parent=75 // pred_check_branch
          %557 = sbr.rel (%p555) target = $region92
        $region91: #{tpu_custom_call.1} parent=75 // pred_region
          %558 = dma.done [#allocation9], 256
        $region92: #{tpu_custom_call.1} parent=75 // pred_fallthru
          _
        // Predicated region
        $region93: #{tpu_custom_call.1} parent=75 // pred_check
          %p559 = pneg %p151
        $region94: #{tpu_custom_call.1} parent=75 // pred_check_branch
          %561 = sbr.rel (%p559) target = $region96
        $region95: #{tpu_custom_call.1} parent=75 // pred_region
          %562 = dma.done [#allocation9], 512
        $region96: #{tpu_custom_call.1} parent=75 // pred_fallthru
          _
        // Predicated region
        $region97: #{tpu_custom_call.1} parent=75 // pred_check
          %p563 = pneg %p193
        $region98: #{tpu_custom_call.1} parent=75 // pred_check_branch
          %565 = sbr.rel (%p563) target = $region100
        $region99: #{tpu_custom_call.1} parent=75 // pred_region
          %566 = dma.done [#allocation12], 512
        $region100: #{tpu_custom_call.1} parent=75 // pred_fallthru
          _
        // Predicated region
        $region101: #{tpu_custom_call.1} parent=75 // pred_check
          %p567 = pneg %p235
        $region102: #{tpu_custom_call.1} parent=75 // pred_check_branch
          %569 = sbr.rel (%p567) target = $region104
        $region103: #{tpu_custom_call.1} parent=75 // pred_region
          %570 = dma.done [#allocation12], 512
        $region104: #{tpu_custom_call.1} parent=75 // pred_fallthru
          _
        %s571 = sand.u32 %s44, 1
        %s572 = scalar_lea.sflag [#allocation3], %s571
        %s573 = sand.u32 %s44, 1
        %s574 = smul.addr %s573, 16
        %s575 = scalar_lea.vmem [#allocation2], %s574
        %p576 = pneg %p57
        %p577 = pneg %p54
        %s578 = sand.u32 %s36, 1
        %s579 = scalar_lea.sflag [#allocation6], %s578
        %s580 = sand.u32 %s70, 1
        %s581 = smul.addr %s580, 16
        %s582 = scalar_lea.vmem [#allocation5], %s581
        %p583 = pneg %p83
        %p584 = pneg %p80
        %s585 = sand.u32 %s36, 1
        %s586 = scalar_lea.sflag [#allocation6], %s585
        %s587 = sand.u32 %s96, 1
        %s588 = smul.addr %s587, 16
        %s589 = scalar_lea.vmem [#allocation7], %s588
        %p590 = pneg %p109
        %p591 = pneg %p106
        %p592 = pneg %p130
        %p593 = pneg %p127
        %p594 = pneg %p151
        %p595 = pneg %p148
        %p596 = pneg %p172
        %p597 = pneg %p169
        %p598 = pneg %p193
        %p599 = pneg %p190
        %p600 = pneg %p214
        %p601 = pneg %p211
        %p602 = pneg %p235
        %p603 = pneg %p232
        %p604 = pneg %p256
        %p605 = pneg %p253
        %p606 = pneg %p277
        %p607 = pneg %p274
        %p608 = pneg %p298
        %p609 = pneg %p295
        %p610 = pneg %p319
        %p611 = pneg %p316
        %p612 = pneg %p340
        %p613 = pneg %p337
        %p614 = pneg %p366
        %p615 = pneg %p363
        %s616 = sand.u32 %s353, 1
        %s617 = scalar_lea.sflag [#allocation4], %s616
        %s618 = sand.u32 %s353, 1
        %s619 = smul.addr %s618, 16
        %s620 = scalar_lea.vmem [#allocation14], %s619
        %v621 = vld [vmem:[%s532] sm:$0xff]
        %v622 = vld [vmem:[%s532 + $0x8] sm:$0xff]
        %v623 = vld [vmem:[%s541] sm:$0xff]
        %v624 = vld [vmem:[%s541 + $0x8] sm:$0xff]
        %v625 = vld [vmem:[%s550] sm:$0xff]
        %v626 = vld [vmem:[%s550 + $0x8] sm:$0xff]
        %v627 = vld [vmem:[#allocation10] sm:$0xff]
        %v628 = vld [vmem:[#allocation10 + $0x8] sm:$0xff]
        %v629 = vld [vmem:[#allocation10 + $0x10] sm:$0xff]
        %v630 = vld [vmem:[#allocation10 + $0x18] sm:$0xff]
        %v631 = vld [vmem:[%s5] sm:$0x1]
        %v633 = vlaneseq
        %v634 = vshrl.u32 %v633, 7
        %v635 = vsub.s32 0, %v634
        %v636 = vrot.slane %v631, %v635
        %vm638 = vcmask 261120
        %v640 = vsel %vm638, %v621, 0
        %v643 = vsel %vm638, %v622, 0
        %645 = vmatprep.subr.mxu0 0.0
        %646 = vmatpush1.msra.mxu0 %v627
        %647 = vmatprep.subr.mxu0 0.0
        %648 = vmatpush1.msra.mxu0 %v628
        %649 = vmatprep.subr.mxu0 0.0
        %650 = vmatpush1.msra.mxu0 %v629
        %651 = vmatprep.subr.mxu0 0.0
        %652 = vmatpush1.msra.mxu0 %v630
        %653 = vmatprep.subr.mxu0 0.0
        %654 = vmatpush1.msra.mxu0 0.0
        %655 = vmatprep.subr.mxu0 0.0
        %656 = vmatpush1.msra.mxu0 0.0
        %657 = vmatprep.subr.mxu0 0.0
        %658 = vmatpush1.msra.mxu0 0.0
        %659 = vmatprep.subr.mxu0 0.0
        %660 = vmatpush1.msra.mxu0 0.0
        %661 = vmatprep.subr.mxu0 0.0
        %662 = vmatpush1.msra.mxu0 0.0
        %663 = vmatprep.subr.mxu0 0.0
        %664 = vmatpush1.msra.mxu0 0.0
        %665 = vmatprep.subr.mxu0 0.0
        %666 = vmatpush1.msra.mxu0 0.0
        %667 = vmatprep.subr.mxu0 0.0
        %668 = vmatpush1.msra.mxu0 0.0
        %669 = vmatprep.subr.mxu0 0.0
        %670 = vmatpush1.msra.mxu0 0.0
        %671 = vmatprep.subr.mxu0 0.0
        %672 = vmatpush1.msra.mxu0 0.0
        %673 = vmatprep.subr.mxu0 0.0
        %674 = vmatpush1.msra.mxu0 0.0
        %675 = vmatprep.subr.mxu0 0.0
        %676 = vmatpush1.msra.mxu0 0.0
        %677 = vmatprep.subr.mxu0 0.0
        %678 = vmatpush1.msra.mxu0 0.0
        %679 = vmatprep.subr.mxu0 0.0
        %680 = vmatpush1.msra.mxu0 0.0
        %681 = vmatprep.subr.mxu0 0.0
        %682 = vmatpush1.msra.mxu0 0.0
        %683 = vmatprep.subr.mxu0 0.0
        %684 = vmatpush1.msra.mxu0 0.0
        %685 = vmatprep.subr.mxu0 0.0
        %686 = vmatpush1.msra.mxu0 0.0
        %687 = vmatprep.subr.mxu0 0.0
        %688 = vmatpush1.msra.mxu0 0.0
        %689 = vmatprep.subr.mxu0 0.0
        %690 = vmatpush1.msra.mxu0 0.0
        %691 = vmatprep.subr.mxu0 0.0
        %692 = vmatpush1.msra.mxu0 0.0
        %693 = vmatprep.subr.mxu0 0.0
        %694 = vmatpush1.msra.mxu0 0.0
        %695 = vmatprep.subr.mxu0 0.0
        %696 = vmatpush1.msra.mxu0 0.0
        %697 = vmatprep.subr.mxu0 0.0
        %698 = vmatpush1.msra.mxu0 0.0
        %699 = vmatprep.subr.mxu0 0.0
        %700 = vmatpush1.msra.mxu0 0.0
        %701 = vmatprep.subr.mxu0 0.0
        %702 = vmatpush1.msra.mxu0 0.0
        %703 = vmatprep.subr.mxu0 0.0
        %704 = vmatpush1.msra.mxu0 0.0
        %705 = vmatprep.subr.mxu0 0.0
        %706 = vmatpush1.msra.mxu0 0.0
        %707 = vmatprep.subr.mxu0 0.0
        %708 = vmatpush1.msra.mxu0 0.0
        %709 = vmatprep.mubr.f32.mxu0 0.0
        %710 = vmatmul.mubr.f32.gmra.mrb[0].mxu0 %v640
        %v711 = vpop.f32.mrb[0].mxu0
        %v712 = vadd.f32 %v636, %v711
        %v713 = vpop.f32.mrb[0].mxu0
        %714 = vmatprep.mubr.f32.mxu0 0.0
        %715 = vmatmul.mubr.f32.gmra.mrb[0].mxu0 %v643
        %v716 = vpop.f32.mrb[0].mxu0
        %v717 = vadd.f32 %v636, %v716
        %v718 = vpop.f32.mrb[0].mxu0
        %719 = vdwg.mxu0
        %v720 = vld [vmem:[#allocation11] sm:$0xff]
        %v721 = vld [vmem:[#allocation11 + $0x8] sm:$0xff]
        %v722 = vld [vmem:[#allocation11 + $0x10] sm:$0xff]
        %v723 = vld [vmem:[#allocation11 + $0x18] sm:$0xff]
        %v724 = vld [vmem:[%s7] sm:$0x1]
        %v726 = vlaneseq
        %v727 = vshrl.u32 %v726, 7
        %v728 = vsub.s32 0, %v727
        %v729 = vrot.slane %v724, %v728
        %v732 = vsel %vm638, %v623, 0
        %v735 = vsel %vm638, %v624, 0
        %737 = vmatprep.subr.mxu0 0.0
        %738 = vmatpush1.msra.mxu0 %v720
        %739 = vmatprep.subr.mxu0 0.0
        %740 = vmatpush1.msra.mxu0 %v721
        %741 = vmatprep.subr.mxu0 0.0
        %742 = vmatpush1.msra.mxu0 %v722
        %743 = vmatprep.subr.mxu0 0.0
        %744 = vmatpush1.msra.mxu0 %v723
        %745 = vmatprep.subr.mxu0 0.0
        %746 = vmatpush1.msra.mxu0 0.0
        %747 = vmatprep.subr.mxu0 0.0
        %748 = vmatpush1.msra.mxu0 0.0
        %749 = vmatprep.subr.mxu0 0.0
        %750 = vmatpush1.msra.mxu0 0.0
        %751 = vmatprep.subr.mxu0 0.0
        %752 = vmatpush1.msra.mxu0 0.0
        %753 = vmatprep.subr.mxu0 0.0
        %754 = vmatpush1.msra.mxu0 0.0
        %755 = vmatprep.subr.mxu0 0.0
        %756 = vmatpush1.msra.mxu0 0.0
        %757 = vmatprep.subr.mxu0 0.0
        %758 = vmatpush1.msra.mxu0 0.0
        %759 = vmatprep.subr.mxu0 0.0
        %760 = vmatpush1.msra.mxu0 0.0
        %761 = vmatprep.subr.mxu0 0.0
        %762 = vmatpush1.msra.mxu0 0.0
        %763 = vmatprep.subr.mxu0 0.0
        %764 = vmatpush1.msra.mxu0 0.0
        %765 = vmatprep.subr.mxu0 0.0
        %766 = vmatpush1.msra.mxu0 0.0
        %767 = vmatprep.subr.mxu0 0.0
        %768 = vmatpush1.msra.mxu0 0.0
        %769 = vmatprep.subr.mxu0 0.0
        %770 = vmatpush1.msra.mxu0 0.0
        %771 = vmatprep.subr.mxu0 0.0
        %772 = vmatpush1.msra.mxu0 0.0
        %773 = vmatprep.subr.mxu0 0.0
        %774 = vmatpush1.msra.mxu0 0.0
        %775 = vmatprep.subr.mxu0 0.0
        %776 = vmatpush1.msra.mxu0 0.0
        %777 = vmatprep.subr.mxu0 0.0
        %778 = vmatpush1.msra.mxu0 0.0
        %779 = vmatprep.subr.mxu0 0.0
        %780 = vmatpush1.msra.mxu0 0.0
        %781 = vmatprep.subr.mxu0 0.0
        %782 = vmatpush1.msra.mxu0 0.0
        %783 = vmatprep.subr.mxu0 0.0
        %784 = vmatpush1.msra.mxu0 0.0
        %785 = vmatprep.subr.mxu0 0.0
        %786 = vmatpush1.msra.mxu0 0.0
        %787 = vmatprep.subr.mxu0 0.0
        %788 = vmatpush1.msra.mxu0 0.0
        %789 = vmatprep.subr.mxu0 0.0
        %790 = vmatpush1.msra.mxu0 0.0
        %791 = vmatprep.subr.mxu0 0.0
        %792 = vmatpush1.msra.mxu0 0.0
        %793 = vmatprep.subr.mxu0 0.0
        %794 = vmatpush1.msra.mxu0 0.0
        %795 = vmatprep.subr.mxu0 0.0
        %796 = vmatpush1.msra.mxu0 0.0
        %797 = vmatprep.subr.mxu0 0.0
        %798 = vmatpush1.msra.mxu0 0.0
        %799 = vmatprep.subr.mxu0 0.0
        %800 = vmatpush1.msra.mxu0 0.0
        %801 = vmatprep.mubr.f32.mxu0 0.0
        %802 = vmatmul.mubr.f32.gmra.mrb[0].mxu0 %v732
        %v803 = vpop.f32.mrb[0].mxu0
        %v804 = vadd.f32 %v729, %v803
        %v805 = vpop.f32.mrb[0].mxu0
        %806 = vmatprep.mubr.f32.mxu0 0.0
        %807 = vmatmul.mubr.f32.gmra.mrb[0].mxu0 %v735
        %v808 = vpop.f32.mrb[0].mxu0
        %v809 = vadd.f32 %v729, %v808
        %v810 = vpop.f32.mrb[0].mxu0
        %811 = vdwg.mxu0
        %v812 = vld [vmem:[#allocation13] sm:$0xff]
        %v813 = vld [vmem:[#allocation13 + $0x8] sm:$0xff]
        %v814 = vld [vmem:[#allocation13 + $0x10] sm:$0xff]
        %v815 = vld [vmem:[#allocation13 + $0x18] sm:$0xff]
        %v816 = vld [vmem:[%s9] sm:$0x1]
        %v818 = vlaneseq
        %v819 = vshrl.u32 %v818, 7
        %v820 = vsub.s32 0, %v819
        %v821 = vrot.slane %v816, %v820
        %v824 = vsel %vm638, %v625, 0
        %v827 = vsel %vm638, %v626, 0
        %829 = vmatprep.subr.mxu0 0.0
        %830 = vmatpush1.msra.mxu0 %v812
        %831 = vmatprep.subr.mxu0 0.0
        %832 = vmatpush1.msra.mxu0 %v813
        %833 = vmatprep.subr.mxu0 0.0
        %834 = vmatpush1.msra.mxu0 %v814
        %835 = vmatprep.subr.mxu0 0.0
        %836 = vmatpush1.msra.mxu0 %v815
        %837 = vmatprep.subr.mxu0 0.0
        %838 = vmatpush1.msra.mxu0 0.0
        %839 = vmatprep.subr.mxu0 0.0
        %840 = vmatpush1.msra.mxu0 0.0
        %841 = vmatprep.subr.mxu0 0.0
        %842 = vmatpush1.msra.mxu0 0.0
        %843 = vmatprep.subr.mxu0 0.0
        %844 = vmatpush1.msra.mxu0 0.0
        %845 = vmatprep.subr.mxu0 0.0
        %846 = vmatpush1.msra.mxu0 0.0
        %847 = vmatprep.subr.mxu0 0.0
        %848 = vmatpush1.msra.mxu0 0.0
        %849 = vmatprep.subr.mxu0 0.0
        %850 = vmatpush1.msra.mxu0 0.0
        %851 = vmatprep.subr.mxu0 0.0
        %852 = vmatpush1.msra.mxu0 0.0
        %853 = vmatprep.subr.mxu0 0.0
        %854 = vmatpush1.msra.mxu0 0.0
        %855 = vmatprep.subr.mxu0 0.0
        %856 = vmatpush1.msra.mxu0 0.0
        %857 = vmatprep.subr.mxu0 0.0
        %858 = vmatpush1.msra.mxu0 0.0
        %859 = vmatprep.subr.mxu0 0.0
        %860 = vmatpush1.msra.mxu0 0.0
        %861 = vmatprep.subr.mxu0 0.0
        %862 = vmatpush1.msra.mxu0 0.0
        %863 = vmatprep.subr.mxu0 0.0
        %864 = vmatpush1.msra.mxu0 0.0
        %865 = vmatprep.subr.mxu0 0.0
        %866 = vmatpush1.msra.mxu0 0.0
        %867 = vmatprep.subr.mxu0 0.0
        %868 = vmatpush1.msra.mxu0 0.0
        %869 = vmatprep.subr.mxu0 0.0
        %870 = vmatpush1.msra.mxu0 0.0
        %871 = vmatprep.subr.mxu0 0.0
        %872 = vmatpush1.msra.mxu0 0.0
        %873 = vmatprep.subr.mxu0 0.0
        %874 = vmatpush1.msra.mxu0 0.0
        %875 = vmatprep.subr.mxu0 0.0
        %876 = vmatpush1.msra.mxu0 0.0
        %877 = vmatprep.subr.mxu0 0.0
        %878 = vmatpush1.msra.mxu0 0.0
        %879 = vmatprep.subr.mxu0 0.0
        %880 = vmatpush1.msra.mxu0 0.0
        %881 = vmatprep.subr.mxu0 0.0
        %882 = vmatpush1.msra.mxu0 0.0
        %883 = vmatprep.subr.mxu0 0.0
        %884 = vmatpush1.msra.mxu0 0.0
        %885 = vmatprep.subr.mxu0 0.0
        %886 = vmatpush1.msra.mxu0 0.0
        %887 = vmatprep.subr.mxu0 0.0
        %888 = vmatpush1.msra.mxu0 0.0
        %889 = vmatprep.subr.mxu0 0.0
        %890 = vmatpush1.msra.mxu0 0.0
        %891 = vmatprep.subr.mxu0 0.0
        %892 = vmatpush1.msra.mxu0 0.0
        %893 = vmatprep.mubr.f32.mxu0 0.0
        %894 = vmatmul.mubr.f32.gmra.mrb[0].mxu0 %v824
        %v895 = vpop.f32.mrb[0].mxu0
        %v896 = vadd.f32 %v821, %v895
        %v897 = vpop.f32.mrb[0].mxu0
        %898 = vmatprep.mubr.f32.mxu0 0.0
        %899 = vmatmul.mubr.f32.gmra.mrb[0].mxu0 %v827
        %v900 = vpop.f32.mrb[0].mxu0
        %v901 = vadd.f32 %v821, %v900
        %v902 = vpop.f32.mrb[0].mxu0
        %903 = vdwg.mxu0
        %v904 = vmul.f32 %v712, 0.35355338
        %v905 = vmul.f32 %v717, 0.35355338
        %v906 = vld [vmem:[#allocation8] sm:$0xff]
        %v907 = vld [vmem:[#allocation8 + $0x8] sm:$0xff]
        %vm908 = vcmask 64512
        %v910 = vsel %vm908, %v904, 0
        %v913 = vsel %vm908, %v905, 0
        %v916 = vsel %vm908, %v804, 0
        %v919 = vsel %vm908, %v809, 0
        %921 = vmatprep.subr.mxu0 0.0
        %922 = vmatpush1.xpose.msra.mxu0 %v916
        %923 = vmatprep.subr.mxu0 0.0
        %924 = vmatpush1.xpose.msra.mxu0 %v919
        %925 = vmatprep.subr.mxu0 0.0
        %926 = vmatpush1.xpose.msra.mxu0 0.0
        %927 = vmatprep.subr.mxu0 0.0
        %928 = vmatpush1.xpose.msra.mxu0 0.0
        %929 = vmatprep.subr.mxu0 0.0
        %930 = vmatpush1.xpose.msra.mxu0 0.0
        %931 = vmatprep.subr.mxu0 0.0
        %932 = vmatpush1.xpose.msra.mxu0 0.0
        %933 = vmatprep.subr.mxu0 0.0
        %934 = vmatpush1.xpose.msra.mxu0 0.0
        %935 = vmatprep.subr.mxu0 0.0
        %936 = vmatpush1.xpose.msra.mxu0 0.0
        %937 = vmatprep.subr.mxu0 0.0
        %938 = vmatpush1.xpose.msra.mxu0 0.0
        %939 = vmatprep.subr.mxu0 0.0
        %940 = vmatpush1.xpose.msra.mxu0 0.0
        %941 = vmatprep.subr.mxu0 0.0
        %942 = vmatpush1.xpose.msra.mxu0 0.0
        %943 = vmatprep.subr.mxu0 0.0
        %944 = vmatpush1.xpose.msra.mxu0 0.0
        %945 = vmatprep.subr.mxu0 0.0
        %946 = vmatpush1.xpose.msra.mxu0 0.0
        %947 = vmatprep.subr.mxu0 0.0
        %948 = vmatpush1.xpose.msra.mxu0 0.0
        %949 = vmatprep.subr.mxu0 0.0
        %950 = vmatpush1.xpose.msra.mxu0 0.0
        %951 = vmatprep.subr.mxu0 0.0
        %952 = vmatpush1.xpose.msra.mxu0 0.0
        %953 = vmatprep.subr.mxu0 0.0
        %954 = vmatpush1.xpose.msra.mxu0 0.0
        %955 = vmatprep.subr.mxu0 0.0
        %956 = vmatpush1.xpose.msra.mxu0 0.0
        %957 = vmatprep.subr.mxu0 0.0
        %958 = vmatpush1.xpose.msra.mxu0 0.0
        %959 = vmatprep.subr.mxu0 0.0
        %960 = vmatpush1.xpose.msra.mxu0 0.0
        %961 = vmatprep.subr.mxu0 0.0
        %962 = vmatpush1.xpose.msra.mxu0 0.0
        %963 = vmatprep.subr.mxu0 0.0
        %964 = vmatpush1.xpose.msra.mxu0 0.0
        %965 = vmatprep.subr.mxu0 0.0
        %966 = vmatpush1.xpose.msra.mxu0 0.0
        %967 = vmatprep.subr.mxu0 0.0
        %968 = vmatpush1.xpose.msra.mxu0 0.0
        %969 = vmatprep.subr.mxu0 0.0
        %970 = vmatpush1.xpose.msra.mxu0 0.0
        %971 = vmatprep.subr.mxu0 0.0
        %972 = vmatpush1.xpose.msra.mxu0 0.0
        %973 = vmatprep.subr.mxu0 0.0
        %974 = vmatpush1.xpose.msra.mxu0 0.0
        %975 = vmatprep.subr.mxu0 0.0
        %976 = vmatpush1.xpose.msra.mxu0 0.0
        %977 = vmatprep.subr.mxu0 0.0
        %978 = vmatpush1.xpose.msra.mxu0 0.0
        %979 = vmatprep.subr.mxu0 0.0
        %980 = vmatpush1.xpose.msra.mxu0 0.0
        %981 = vmatprep.subr.mxu0 0.0
        %982 = vmatpush1.xpose.msra.mxu0 0.0
        %983 = vmatprep.subr.mxu0 0.0
        %984 = vmatpush1.xpose.msra.mxu0 0.0
        %985 = vmatprep.mubr.f32.mxu0 0.0
        %986 = vmatmul.mubr.f32.gmra.mrb[0].mxu0 %v910
        %v987 = vpop.f32.mrb[0].mxu0
        %v988 = vadd.f32 %v906, %v987
        %v989 = vpop.f32.mrb[0].mxu0
        %990 = vmatprep.mubr.f32.mxu0 0.0
        %991 = vmatmul.mubr.f32.gmra.mrb[0].mxu0 %v913
        %v992 = vpop.f32.mrb[0].mxu0
        %v993 = vadd.f32 %v907, %v992
        %v994 = vpop.f32.mrb[0].mxu0
        %995 = vdwg.mxu0
        %997 = vset.pattern.permute.xlu0 0
        %998 = vperm.xlu0 %997, %v988
        %v999 = vpop.permute.xlu0 %998
        %1002 = vset.pattern.permute.xlu0 0
        %1003 = vperm.xlu0 %1002, %v993
        %v1004 = vpop.permute.xlu0 %1003
        %vm1006 = vcmp.ge.f32.partialorder %v999, %v988
        %vm1007 = vcmp.ge.f32.partialorder %v1004, %v993
        %v1008 = vsel %vm1006, 1, 0
        %v1009 = vsel %vm1007, 1, 0
        %v1010 = vcvt.s32.f32 %v1008
        %v1011 = vcvt.s32.f32 %v1009
        %v1012 = vadd.f32 %v1010, 0.0
        %v1013 = vadd.f32 %v1011, 0.0
        %1014 = vset.pattern.permute.xlu0 1
        %1015 = vperm.xlu0 %1014, %v988
        %v1016 = vpop.permute.xlu0 %1015
        %1018 = vset.pattern.permute.xlu0 1
        %1019 = vperm.xlu0 %1018, %v993
        %v1020 = vpop.permute.xlu0 %1019
        %vm1022 = vcmp.ge.f32.partialorder %v1016, %v988
        %vm1023 = vcmp.ge.f32.partialorder %v1020, %v993
        %v1024 = vsel %vm1022, 1, 0
        %v1025 = vsel %vm1023, 1, 0
        %v1026 = vcvt.s32.f32 %v1024
        %v1027 = vcvt.s32.f32 %v1025
        %v1028 = vadd.f32 %v1012, %v1026
        %v1029 = vadd.f32 %v1013, %v1027
        %1030 = vset.pattern.permute.xlu0 2
        %1031 = vperm.xlu0 %1030, %v988
        %v1032 = vpop.permute.xlu0 %1031
        %1034 = vset.pattern.permute.xlu0 2
        %1035 = vperm.xlu0 %1034, %v993
        %v1036 = vpop.permute.xlu0 %1035
        %vm1038 = vcmp.ge.f32.partialorder %v1032, %v988
        %vm1039 = vcmp.ge.f32.partialorder %v1036, %v993
        %v1040 = vsel %vm1038, 1, 0
        %v1041 = vsel %vm1039, 1, 0
        %v1042 = vcvt.s32.f32 %v1040
        %v1043 = vcvt.s32.f32 %v1041
        %v1044 = vadd.f32 %v1028, %v1042
        %v1045 = vadd.f32 %v1029, %v1043
        %1046 = vset.pattern.permute.xlu0 3
        %1047 = vperm.xlu0 %1046, %v988
        %v1048 = vpop.permute.xlu0 %1047
        %1050 = vset.pattern.permute.xlu0 3
        %1051 = vperm.xlu0 %1050, %v993
        %v1052 = vpop.permute.xlu0 %1051
        %vm1054 = vcmp.ge.f32.partialorder %v1048, %v988
        %vm1055 = vcmp.ge.f32.partialorder %v1052, %v993
        %v1056 = vsel %vm1054, 1, 0
        %v1057 = vsel %vm1055, 1, 0
        %v1058 = vcvt.s32.f32 %v1056
        %v1059 = vcvt.s32.f32 %v1057
        %v1060 = vadd.f32 %v1044, %v1058
        %v1061 = vadd.f32 %v1045, %v1059
        %1062 = vset.pattern.permute.xlu0 4
        %1063 = vperm.xlu0 %1062, %v988
        %v1064 = vpop.permute.xlu0 %1063
        %1066 = vset.pattern.permute.xlu0 4
        %1067 = vperm.xlu0 %1066, %v993
        %v1068 = vpop.permute.xlu0 %1067
        %vm1070 = vcmp.ge.f32.partialorder %v1064, %v988
        %vm1071 = vcmp.ge.f32.partialorder %v1068, %v993
        %v1072 = vsel %vm1070, 1, 0
        %v1073 = vsel %vm1071, 1, 0
        %v1074 = vcvt.s32.f32 %v1072
        %v1075 = vcvt.s32.f32 %v1073
        %v1076 = vadd.f32 %v1060, %v1074
        %v1077 = vadd.f32 %v1061, %v1075
        %1078 = vset.pattern.permute.xlu0 5
        %1079 = vperm.xlu0 %1078, %v988
        %v1080 = vpop.permute.xlu0 %1079
        %1082 = vset.pattern.permute.xlu0 5
        %1083 = vperm.xlu0 %1082, %v993
        %v1084 = vpop.permute.xlu0 %1083
        %vm1086 = vcmp.ge.f32.partialorder %v1080, %v988
        %vm1087 = vcmp.ge.f32.partialorder %v1084, %v993
        %v1088 = vsel %vm1086, 1, 0
        %v1089 = vsel %vm1087, 1, 0
        %v1090 = vcvt.s32.f32 %v1088
        %v1091 = vcvt.s32.f32 %v1089
        %v1092 = vadd.f32 %v1076, %v1090
        %v1093 = vadd.f32 %v1077, %v1091
        %1094 = vset.pattern.permute.xlu0 6
        %1095 = vperm.xlu0 %1094, %v988
        %v1096 = vpop.permute.xlu0 %1095
        %1098 = vset.pattern.permute.xlu0 6
        %1099 = vperm.xlu0 %1098, %v993
        %v1100 = vpop.permute.xlu0 %1099
        %vm1102 = vcmp.ge.f32.partialorder %v1096, %v988
        %vm1103 = vcmp.ge.f32.partialorder %v1100, %v993
        %v1104 = vsel %vm1102, 1, 0
        %v1105 = vsel %vm1103, 1, 0
        %v1106 = vcvt.s32.f32 %v1104
        %v1107 = vcvt.s32.f32 %v1105
        %v1108 = vadd.f32 %v1092, %v1106
        %v1109 = vadd.f32 %v1093, %v1107
        %1110 = vset.pattern.permute.xlu0 7
        %1111 = vperm.xlu0 %1110, %v988
        %v1112 = vpop.permute.xlu0 %1111
        %1114 = vset.pattern.permute.xlu0 7
        %1115 = vperm.xlu0 %1114, %v993
        %v1116 = vpop.permute.xlu0 %1115
        %vm1118 = vcmp.ge.f32.partialorder %v1112, %v988
        %vm1119 = vcmp.ge.f32.partialorder %v1116, %v993
        %v1120 = vsel %vm1118, 1, 0
        %v1121 = vsel %vm1119, 1, 0
        %v1122 = vcvt.s32.f32 %v1120
        %v1123 = vcvt.s32.f32 %v1121
        %v1124 = vadd.f32 %v1108, %v1122
        %v1125 = vadd.f32 %v1109, %v1123
        %1126 = vset.pattern.permute.xlu0 8
        %1127 = vperm.xlu0 %1126, %v988
        %v1128 = vpop.permute.xlu0 %1127
        %1130 = vset.pattern.permute.xlu0 8
        %1131 = vperm.xlu0 %1130, %v993
        %v1132 = vpop.permute.xlu0 %1131
        %vm1134 = vcmp.ge.f32.partialorder %v1128, %v988
        %vm1135 = vcmp.ge.f32.partialorder %v1132, %v993
        %v1136 = vsel %vm1134, 1, 0
        %v1137 = vsel %vm1135, 1, 0
        %v1138 = vcvt.s32.f32 %v1136
        %v1139 = vcvt.s32.f32 %v1137
        %v1140 = vadd.f32 %v1124, %v1138
        %v1141 = vadd.f32 %v1125, %v1139
        %1142 = vset.pattern.permute.xlu0 9
        %1143 = vperm.xlu0 %1142, %v988
        %v1144 = vpop.permute.xlu0 %1143
        %1146 = vset.pattern.permute.xlu0 9
        %1147 = vperm.xlu0 %1146, %v993
        %v1148 = vpop.permute.xlu0 %1147
        %vm1150 = vcmp.ge.f32.partialorder %v1144, %v988
        %vm1151 = vcmp.ge.f32.partialorder %v1148, %v993
        %v1152 = vsel %vm1150, 1, 0
        %v1153 = vsel %vm1151, 1, 0
        %v1154 = vcvt.s32.f32 %v1152
        %v1155 = vcvt.s32.f32 %v1153
        %v1156 = vadd.f32 %v1140, %v1154
        %v1157 = vadd.f32 %v1141, %v1155
        %1158 = vset.pattern.permute.xlu0 10
        %1159 = vperm.xlu0 %1158, %v988
        %v1160 = vpop.permute.xlu0 %1159
        %1162 = vset.pattern.permute.xlu0 10
        %1163 = vperm.xlu0 %1162, %v993
        %v1164 = vpop.permute.xlu0 %1163
        %vm1166 = vcmp.ge.f32.partialorder %v1160, %v988
        %vm1167 = vcmp.ge.f32.partialorder %v1164, %v993
        %v1168 = vsel %vm1166, 1, 0
        %v1169 = vsel %vm1167, 1, 0
        %v1170 = vcvt.s32.f32 %v1168
        %v1171 = vcvt.s32.f32 %v1169
        %v1172 = vadd.f32 %v1156, %v1170
        %v1173 = vadd.f32 %v1157, %v1171
        %1174 = vset.pattern.permute.xlu0 11
        %1175 = vperm.xlu0 %1174, %v988
        %v1176 = vpop.permute.xlu0 %1175
        %1178 = vset.pattern.permute.xlu0 11
        %1179 = vperm.xlu0 %1178, %v993
        %v1180 = vpop.permute.xlu0 %1179
        %vm1182 = vcmp.ge.f32.partialorder %v1176, %v988
        %vm1183 = vcmp.ge.f32.partialorder %v1180, %v993
        %v1184 = vsel %vm1182, 1, 0
        %v1185 = vsel %vm1183, 1, 0
        %v1186 = vcvt.s32.f32 %v1184
        %v1187 = vcvt.s32.f32 %v1185
        %v1188 = vadd.f32 %v1172, %v1186
        %v1189 = vadd.f32 %v1173, %v1187
        %1190 = vset.pattern.permute.xlu0 12
        %1191 = vperm.xlu0 %1190, %v988
        %v1192 = vpop.permute.xlu0 %1191
        %1194 = vset.pattern.permute.xlu0 12
        %1195 = vperm.xlu0 %1194, %v993
        %v1196 = vpop.permute.xlu0 %1195
        %vm1198 = vcmp.ge.f32.partialorder %v1192, %v988
        %vm1199 = vcmp.ge.f32.partialorder %v1196, %v993
        %v1200 = vsel %vm1198, 1, 0
        %v1201 = vsel %vm1199, 1, 0
        %v1202 = vcvt.s32.f32 %v1200
        %v1203 = vcvt.s32.f32 %v1201
        %v1204 = vadd.f32 %v1188, %v1202
        %v1205 = vadd.f32 %v1189, %v1203
        %1206 = vset.pattern.permute.xlu0 13
        %1207 = vperm.xlu0 %1206, %v988
        %v1208 = vpop.permute.xlu0 %1207
        %1210 = vset.pattern.permute.xlu0 13
        %1211 = vperm.xlu0 %1210, %v993
        %v1212 = vpop.permute.xlu0 %1211
        %vm1214 = vcmp.ge.f32.partialorder %v1208, %v988
        %vm1215 = vcmp.ge.f32.partialorder %v1212, %v993
        %v1216 = vsel %vm1214, 1, 0
        %v1217 = vsel %vm1215, 1, 0
        %v1218 = vcvt.s32.f32 %v1216
        %v1219 = vcvt.s32.f32 %v1217
        %v1220 = vadd.f32 %v1204, %v1218
        %v1221 = vadd.f32 %v1205, %v1219
        %1222 = vset.pattern.permute.xlu0 14
        %1223 = vperm.xlu0 %1222, %v988
        %v1224 = vpop.permute.xlu0 %1223
        %1226 = vset.pattern.permute.xlu0 14
        %1227 = vperm.xlu0 %1226, %v993
        %v1228 = vpop.permute.xlu0 %1227
        %vm1230 = vcmp.ge.f32.partialorder %v1224, %v988
        %vm1231 = vcmp.ge.f32.partialorder %v1228, %v993
        %v1232 = vsel %vm1230, 1, 0
        %v1233 = vsel %vm1231, 1, 0
        %v1234 = vcvt.s32.f32 %v1232
        %v1235 = vcvt.s32.f32 %v1233
        %v1236 = vadd.f32 %v1220, %v1234
        %v1237 = vadd.f32 %v1221, %v1235
        %1238 = vset.pattern.permute.xlu0 15
        %1239 = vperm.xlu0 %1238, %v988
        %v1240 = vpop.permute.xlu0 %1239
        %1242 = vset.pattern.permute.xlu0 15
        %1243 = vperm.xlu0 %1242, %v993
        %v1244 = vpop.permute.xlu0 %1243
        %vm1246 = vcmp.ge.f32.partialorder %v1240, %v988
        %vm1247 = vcmp.ge.f32.partialorder %v1244, %v993
        %v1248 = vsel %vm1246, 1, 0
        %v1249 = vsel %vm1247, 1, 0
        %v1250 = vcvt.s32.f32 %v1248
        %v1251 = vcvt.s32.f32 %v1249
        %v1252 = vadd.f32 %v1236, %v1250
        %v1253 = vadd.f32 %v1237, %v1251
        %vm1254 = vcmp.ge.f32.partialorder %v1252, 11.0
        %vm1255 = vcmp.ge.f32.partialorder %v1253, 11.0
        %v1256 = vsel %vm1254, %v988, -inf
        %v1257 = vsel %vm1255, %v993, -inf
        %vm1258 = vcmask 130048
        %v1259 = vsel %vm1258, %v1256, -inf
        %1260 = vmax.xlane.f32.xlu0 %v1259
        %v1261 = vpop.xlane.xlu0 %1260
        %v1262 = vsel %vm1258, %v1257, -inf
        %1263 = vmax.xlane.f32.xlu0 %v1262
        %v1264 = vpop.xlane.xlu0 %1263
        %vm1265 = vcmp.lt.f32.partialorder %v988, %v1261
        %vm1266 = vcmp.lt.f32.partialorder %v993, %v1264
        %v1267 = vmul.f32 %v988, 0.7
        %v1268 = vmul.f32 %v993, 0.7
        %v1269 = vsel %vm1265, -inf, %v1267
        %v1270 = vsel %vm1266, -inf, %v1268
        %v1271 = vsel %vm1258, %v1269, -inf
        %1272 = vmax.xlane.f32.xlu0 %v1271
        %v1273 = vpop.xlane.xlu0 %1272
        %v1274 = vsel %vm1258, %v1270, -inf
        %1275 = vmax.xlane.f32.xlu0 %v1274
        %v1276 = vpop.xlane.xlu0 %1275
        %v1277 = vsub.f32 %v1269, %v1273
        %v1278 = vsub.f32 %v1270, %v1276
        %v1279 = vmul.f32 %v1277, 1.442695
        %v1280 = vpow.pop %v1279
        %v1281 = vmul.f32 %v1278, 1.442695
        %v1282 = vpow.pop %v1281
        %v1283 = vsel %vm1258, %v1280, 0.0
        %1284 = vadd.xlane.f32.xlu0 %v1283
        %v1285 = vpop.xlane.xlu0 %1284
        %v1286 = vsel %vm1258, %v1282, 0.0
        %1287 = vadd.xlane.f32.xlu0 %v1286
        %v1288 = vpop.xlane.xlu0 %1287
        %v1289 = vrcp.pop %v1285
        %v1290 = vrcp.pop %v1288
        %v1291 = vmul.f32 %v1280, %v1289
        %v1292 = vmul.f32 %v1282, %v1290
        %v1294 = vsel %vm1258, %v1291, 0
        %v1297 = vsel %vm1258, %v1292, 0
        %1299 = vmatprep.subr.mxu0 0.0
        %1300 = vmatpush1.msra.mxu0 %v896
        %1301 = vmatprep.subr.mxu0 0.0
        %1302 = vmatpush1.msra.mxu0 %v901
        %1303 = vmatprep.subr.mxu0 0.0
        %1304 = vmatpush1.msra.mxu0 0.0
        %1305 = vmatprep.subr.mxu0 0.0
        %1306 = vmatpush1.msra.mxu0 0.0
        %1307 = vmatprep.subr.mxu0 0.0
        %1308 = vmatpush1.msra.mxu0 0.0
        %1309 = vmatprep.subr.mxu0 0.0
        %1310 = vmatpush1.msra.mxu0 0.0
        %1311 = vmatprep.subr.mxu0 0.0
        %1312 = vmatpush1.msra.mxu0 0.0
        %1313 = vmatprep.subr.mxu0 0.0
        %1314 = vmatpush1.msra.mxu0 0.0
        %1315 = vmatprep.subr.mxu0 0.0
        %1316 = vmatpush1.msra.mxu0 0.0
        %1317 = vmatprep.subr.mxu0 0.0
        %1318 = vmatpush1.msra.mxu0 0.0
        %1319 = vmatprep.subr.mxu0 0.0
        %1320 = vmatpush1.msra.mxu0 0.0
        %1321 = vmatprep.subr.mxu0 0.0
        %1322 = vmatpush1.msra.mxu0 0.0
        %1323 = vmatprep.subr.mxu0 0.0
        %1324 = vmatpush1.msra.mxu0 0.0
        %1325 = vmatprep.subr.mxu0 0.0
        %1326 = vmatpush1.msra.mxu0 0.0
        %1327 = vmatprep.subr.mxu0 0.0
        %1328 = vmatpush1.msra.mxu0 0.0
        %1329 = vmatprep.subr.mxu0 0.0
        %1330 = vmatpush1.msra.mxu0 0.0
        %1331 = vmatprep.subr.mxu0 0.0
        %1332 = vmatpush1.msra.mxu0 0.0
        %1333 = vmatprep.subr.mxu0 0.0
        %1334 = vmatpush1.msra.mxu0 0.0
        %1335 = vmatprep.subr.mxu0 0.0
        %1336 = vmatpush1.msra.mxu0 0.0
        %1337 = vmatprep.subr.mxu0 0.0
        %1338 = vmatpush1.msra.mxu0 0.0
        %1339 = vmatprep.subr.mxu0 0.0
        %1340 = vmatpush1.msra.mxu0 0.0
        %1341 = vmatprep.subr.mxu0 0.0
        %1342 = vmatpush1.msra.mxu0 0.0
        %1343 = vmatprep.subr.mxu0 0.0
        %1344 = vmatpush1.msra.mxu0 0.0
        %1345 = vmatprep.subr.mxu0 0.0
        %1346 = vmatpush1.msra.mxu0 0.0
        %1347 = vmatprep.subr.mxu0 0.0
        %1348 = vmatpush1.msra.mxu0 0.0
        %1349 = vmatprep.subr.mxu0 0.0
        %1350 = vmatpush1.msra.mxu0 0.0
        %1351 = vmatprep.subr.mxu0 0.0
        %1352 = vmatpush1.msra.mxu0 0.0
        %1353 = vmatprep.subr.mxu0 0.0
        %1354 = vmatpush1.msra.mxu0 0.0
        %1355 = vmatprep.subr.mxu0 0.0
        %1356 = vmatpush1.msra.mxu0 0.0
        %1357 = vmatprep.subr.mxu0 0.0
        %1358 = vmatpush1.msra.mxu0 0.0
        %1359 = vmatprep.subr.mxu0 0.0
        %1360 = vmatpush1.msra.mxu0 0.0
        %1361 = vmatprep.subr.mxu0 0.0
        %1362 = vmatpush1.msra.mxu0 0.0
        %1363 = vmatprep.mubr.f32.mxu0 0.0
        %1364 = vmatmul.mubr.f32.gmra.mrb[0].mxu0 %v1294
        %v1365 = vpop.f32.mrb[0].mxu0
        %v1366 = vadd.f32 0.0, %v1365
        %v1367 = vpop.f32.mrb[0].mxu0
        %1368 = vmatprep.mubr.f32.mxu0 0.0
        %1369 = vmatmul.mubr.f32.gmra.mrb[0].mxu0 %v1297
        %v1370 = vpop.f32.mrb[0].mxu0
        %v1371 = vadd.f32 0.0, %v1370
        %v1372 = vpop.f32.mrb[0].mxu0
        %1373 = vdwg.mxu0
        %1374 = vrot.lane.b32.xlu0 %v904, 120
        %v1375 = vpop.permute.xlu0 %1374
        %1376 = vrot.lane.b32.xlu0 %v905, 120
        %v1377 = vpop.permute.xlu0 %1376
        %1378 = vrot.lane.b32.xlu0 %v804, 120
        %v1379 = vpop.permute.xlu0 %1378
        %1380 = vrot.lane.b32.xlu0 %v809, 120
        %v1381 = vpop.permute.xlu0 %1380
        %v1382 = vsel %vm908, %v1375, 0
        %v1384 = vsel %vm908, %v1377, 0
        %v1386 = vsel %vm908, %v1379, 0
        %v1388 = vsel %vm908, %v1381, 0
        %1390 = vmatprep.subr.mxu0 0.0
        %1391 = vmatpush1.xpose.msra.mxu0 %v1386
        %1392 = vmatprep.subr.mxu0 0.0
        %1393 = vmatpush1.xpose.msra.mxu0 %v1388
        %1394 = vmatprep.subr.mxu0 0.0
        %1395 = vmatpush1.xpose.msra.mxu0 0.0
        %1396 = vmatprep.subr.mxu0 0.0
        %1397 = vmatpush1.xpose.msra.mxu0 0.0
        %1398 = vmatprep.subr.mxu0 0.0
        %1399 = vmatpush1.xpose.msra.mxu0 0.0
        %1400 = vmatprep.subr.mxu0 0.0
        %1401 = vmatpush1.xpose.msra.mxu0 0.0
        %1402 = vmatprep.subr.mxu0 0.0
        %1403 = vmatpush1.xpose.msra.mxu0 0.0
        %1404 = vmatprep.subr.mxu0 0.0
        %1405 = vmatpush1.xpose.msra.mxu0 0.0
        %1406 = vmatprep.subr.mxu0 0.0
        %1407 = vmatpush1.xpose.msra.mxu0 0.0
        %1408 = vmatprep.subr.mxu0 0.0
        %1409 = vmatpush1.xpose.msra.mxu0 0.0
        %1410 = vmatprep.subr.mxu0 0.0
        %1411 = vmatpush1.xpose.msra.mxu0 0.0
        %1412 = vmatprep.subr.mxu0 0.0
        %1413 = vmatpush1.xpose.msra.mxu0 0.0
        %1414 = vmatprep.subr.mxu0 0.0
        %1415 = vmatpush1.xpose.msra.mxu0 0.0
        %1416 = vmatprep.subr.mxu0 0.0
        %1417 = vmatpush1.xpose.msra.mxu0 0.0
        %1418 = vmatprep.subr.mxu0 0.0
        %1419 = vmatpush1.xpose.msra.mxu0 0.0
        %1420 = vmatprep.subr.mxu0 0.0
        %1421 = vmatpush1.xpose.msra.mxu0 0.0
        %1422 = vmatprep.subr.mxu0 0.0
        %1423 = vmatpush1.xpose.msra.mxu0 0.0
        %1424 = vmatprep.subr.mxu0 0.0
        %1425 = vmatpush1.xpose.msra.mxu0 0.0
        %1426 = vmatprep.subr.mxu0 0.0
        %1427 = vmatpush1.xpose.msra.mxu0 0.0
        %1428 = vmatprep.subr.mxu0 0.0
        %1429 = vmatpush1.xpose.msra.mxu0 0.0
        %1430 = vmatprep.subr.mxu0 0.0
        %1431 = vmatpush1.xpose.msra.mxu0 0.0
        %1432 = vmatprep.subr.mxu0 0.0
        %1433 = vmatpush1.xpose.msra.mxu0 0.0
        %1434 = vmatprep.subr.mxu0 0.0
        %1435 = vmatpush1.xpose.msra.mxu0 0.0
        %1436 = vmatprep.subr.mxu0 0.0
        %1437 = vmatpush1.xpose.msra.mxu0 0.0
        %1438 = vmatprep.subr.mxu0 0.0
        %1439 = vmatpush1.xpose.msra.mxu0 0.0
        %1440 = vmatprep.subr.mxu0 0.0
        %1441 = vmatpush1.xpose.msra.mxu0 0.0
        %1442 = vmatprep.subr.mxu0 0.0
        %1443 = vmatpush1.xpose.msra.mxu0 0.0
        %1444 = vmatprep.subr.mxu0 0.0
        %1445 = vmatpush1.xpose.msra.mxu0 0.0
        %1446 = vmatprep.subr.mxu0 0.0
        %1447 = vmatpush1.xpose.msra.mxu0 0.0
        %1448 = vmatprep.subr.mxu0 0.0
        %1449 = vmatpush1.xpose.msra.mxu0 0.0
        %1450 = vmatprep.subr.mxu0 0.0
        %1451 = vmatpush1.xpose.msra.mxu0 0.0
        %1452 = vmatprep.subr.mxu0 0.0
        %1453 = vmatpush1.xpose.msra.mxu0 0.0
        %1454 = vmatprep.mubr.f32.mxu0 0.0
        %1455 = vmatmul.mubr.f32.gmra.mrb[0].mxu0 %v1382
        %v1456 = vpop.f32.mrb[0].mxu0
        %v1457 = vadd.f32 %v906, %v1456
        %v1458 = vpop.f32.mrb[0].mxu0
        %1459 = vmatprep.mubr.f32.mxu0 0.0
        %1460 = vmatmul.mubr.f32.gmra.mrb[0].mxu0 %v1384
        %v1461 = vpop.f32.mrb[0].mxu0
        %v1462 = vadd.f32 %v907, %v1461
        %v1463 = vpop.f32.mrb[0].mxu0
        %1464 = vdwg.mxu0
        %1466 = vset.pattern.permute.xlu0 0
        %1467 = vperm.xlu0 %1466, %v1457
        %v1468 = vpop.permute.xlu0 %1467
        %1471 = vset.pattern.permute.xlu0 0
        %1472 = vperm.xlu0 %1471, %v1462
        %v1473 = vpop.permute.xlu0 %1472
        %vm1475 = vcmp.ge.f32.partialorder %v1468, %v1457
        %vm1476 = vcmp.ge.f32.partialorder %v1473, %v1462
        %v1477 = vsel %vm1475, 1, 0
        %v1478 = vsel %vm1476, 1, 0
        %v1479 = vcvt.s32.f32 %v1477
        %v1480 = vcvt.s32.f32 %v1478
        %v1481 = vadd.f32 %v1479, 0.0
        %v1482 = vadd.f32 %v1480, 0.0
        %1483 = vset.pattern.permute.xlu0 1
        %1484 = vperm.xlu0 %1483, %v1457
        %v1485 = vpop.permute.xlu0 %1484
        %1487 = vset.pattern.permute.xlu0 1
        %1488 = vperm.xlu0 %1487, %v1462
        %v1489 = vpop.permute.xlu0 %1488
        %vm1491 = vcmp.ge.f32.partialorder %v1485, %v1457
        %vm1492 = vcmp.ge.f32.partialorder %v1489, %v1462
        %v1493 = vsel %vm1491, 1, 0
        %v1494 = vsel %vm1492, 1, 0
        %v1495 = vcvt.s32.f32 %v1493
        %v1496 = vcvt.s32.f32 %v1494
        %v1497 = vadd.f32 %v1481, %v1495
        %v1498 = vadd.f32 %v1482, %v1496
        %1499 = vset.pattern.permute.xlu0 2
        %1500 = vperm.xlu0 %1499, %v1457
        %v1501 = vpop.permute.xlu0 %1500
        %1503 = vset.pattern.permute.xlu0 2
        %1504 = vperm.xlu0 %1503, %v1462
        %v1505 = vpop.permute.xlu0 %1504
        %vm1507 = vcmp.ge.f32.partialorder %v1501, %v1457
        %vm1508 = vcmp.ge.f32.partialorder %v1505, %v1462
        %v1509 = vsel %vm1507, 1, 0
        %v1510 = vsel %vm1508, 1, 0
        %v1511 = vcvt.s32.f32 %v1509
        %v1512 = vcvt.s32.f32 %v1510
        %v1513 = vadd.f32 %v1497, %v1511
        %v1514 = vadd.f32 %v1498, %v1512
        %1515 = vset.pattern.permute.xlu0 3
        %1516 = vperm.xlu0 %1515, %v1457
        %v1517 = vpop.permute.xlu0 %1516
        %1519 = vset.pattern.permute.xlu0 3
        %1520 = vperm.xlu0 %1519, %v1462
        %v1521 = vpop.permute.xlu0 %1520
        %vm1523 = vcmp.ge.f32.partialorder %v1517, %v1457
        %vm1524 = vcmp.ge.f32.partialorder %v1521, %v1462
        %v1525 = vsel %vm1523, 1, 0
        %v1526 = vsel %vm1524, 1, 0
        %v1527 = vcvt.s32.f32 %v1525
        %v1528 = vcvt.s32.f32 %v1526
        %v1529 = vadd.f32 %v1513, %v1527
        %v1530 = vadd.f32 %v1514, %v1528
        %1531 = vset.pattern.permute.xlu0 4
        %1532 = vperm.xlu0 %1531, %v1457
        %v1533 = vpop.permute.xlu0 %1532
        %1535 = vset.pattern.permute.xlu0 4
        %1536 = vperm.xlu0 %1535, %v1462
        %v1537 = vpop.permute.xlu0 %1536
        %vm1539 = vcmp.ge.f32.partialorder %v1533, %v1457
        %vm1540 = vcmp.ge.f32.partialorder %v1537, %v1462
        %v1541 = vsel %vm1539, 1, 0
        %v1542 = vsel %vm1540, 1, 0
        %v1543 = vcvt.s32.f32 %v1541
        %v1544 = vcvt.s32.f32 %v1542
        %v1545 = vadd.f32 %v1529, %v1543
        %v1546 = vadd.f32 %v1530, %v1544
        %1547 = vset.pattern.permute.xlu0 5
        %1548 = vperm.xlu0 %1547, %v1457
        %v1549 = vpop.permute.xlu0 %1548
        %1551 = vset.pattern.permute.xlu0 5
        %1552 = vperm.xlu0 %1551, %v1462
        %v1553 = vpop.permute.xlu0 %1552
        %vm1555 = vcmp.ge.f32.partialorder %v1549, %v1457
        %vm1556 = vcmp.ge.f32.partialorder %v1553, %v1462
        %v1557 = vsel %vm1555, 1, 0
        %v1558 = vsel %vm1556, 1, 0
        %v1559 = vcvt.s32.f32 %v1557
        %v1560 = vcvt.s32.f32 %v1558
        %v1561 = vadd.f32 %v1545, %v1559
        %v1562 = vadd.f32 %v1546, %v1560
        %1563 = vset.pattern.permute.xlu0 6
        %1564 = vperm.xlu0 %1563, %v1457
        %v1565 = vpop.permute.xlu0 %1564
        %1567 = vset.pattern.permute.xlu0 6
        %1568 = vperm.xlu0 %1567, %v1462
        %v1569 = vpop.permute.xlu0 %1568
        %vm1571 = vcmp.ge.f32.partialorder %v1565, %v1457
        %vm1572 = vcmp.ge.f32.partialorder %v1569, %v1462
        %v1573 = vsel %vm1571, 1, 0
        %v1574 = vsel %vm1572, 1, 0
        %v1575 = vcvt.s32.f32 %v1573
        %v1576 = vcvt.s32.f32 %v1574
        %v1577 = vadd.f32 %v1561, %v1575
        %v1578 = vadd.f32 %v1562, %v1576
        %1579 = vset.pattern.permute.xlu0 7
        %1580 = vperm.xlu0 %1579, %v1457
        %v1581 = vpop.permute.xlu0 %1580
        %1583 = vset.pattern.permute.xlu0 7
        %1584 = vperm.xlu0 %1583, %v1462
        %v1585 = vpop.permute.xlu0 %1584
        %vm1587 = vcmp.ge.f32.partialorder %v1581, %v1457
        %vm1588 = vcmp.ge.f32.partialorder %v1585, %v1462
        %v1589 = vsel %vm1587, 1, 0
        %v1590 = vsel %vm1588, 1, 0
        %v1591 = vcvt.s32.f32 %v1589
        %v1592 = vcvt.s32.f32 %v1590
        %v1593 = vadd.f32 %v1577, %v1591
        %v1594 = vadd.f32 %v1578, %v1592
        %1595 = vset.pattern.permute.xlu0 8
        %1596 = vperm.xlu0 %1595, %v1457
        %v1597 = vpop.permute.xlu0 %1596
        %1599 = vset.pattern.permute.xlu0 8
        %1600 = vperm.xlu0 %1599, %v1462
        %v1601 = vpop.permute.xlu0 %1600
        %vm1603 = vcmp.ge.f32.partialorder %v1597, %v1457
        %vm1604 = vcmp.ge.f32.partialorder %v1601, %v1462
        %v1605 = vsel %vm1603, 1, 0
        %v1606 = vsel %vm1604, 1, 0
        %v1607 = vcvt.s32.f32 %v1605
        %v1608 = vcvt.s32.f32 %v1606
        %v1609 = vadd.f32 %v1593, %v1607
        %v1610 = vadd.f32 %v1594, %v1608
        %1611 = vset.pattern.permute.xlu0 9
        %1612 = vperm.xlu0 %1611, %v1457
        %v1613 = vpop.permute.xlu0 %1612
        %1615 = vset.pattern.permute.xlu0 9
        %1616 = vperm.xlu0 %1615, %v1462
        %v1617 = vpop.permute.xlu0 %1616
        %vm1619 = vcmp.ge.f32.partialorder %v1613, %v1457
        %vm1620 = vcmp.ge.f32.partialorder %v1617, %v1462
        %v1621 = vsel %vm1619, 1, 0
        %v1622 = vsel %vm1620, 1, 0
        %v1623 = vcvt.s32.f32 %v1621
        %v1624 = vcvt.s32.f32 %v1622
        %v1625 = vadd.f32 %v1609, %v1623
        %v1626 = vadd.f32 %v1610, %v1624
        %1627 = vset.pattern.permute.xlu0 10
        %1628 = vperm.xlu0 %1627, %v1457
        %v1629 = vpop.permute.xlu0 %1628
        %1631 = vset.pattern.permute.xlu0 10
        %1632 = vperm.xlu0 %1631, %v1462
        %v1633 = vpop.permute.xlu0 %1632
        %vm1635 = vcmp.ge.f32.partialorder %v1629, %v1457
        %vm1636 = vcmp.ge.f32.partialorder %v1633, %v1462
        %v1637 = vsel %vm1635, 1, 0
        %v1638 = vsel %vm1636, 1, 0
        %v1639 = vcvt.s32.f32 %v1637
        %v1640 = vcvt.s32.f32 %v1638
        %v1641 = vadd.f32 %v1625, %v1639
        %v1642 = vadd.f32 %v1626, %v1640
        %1643 = vset.pattern.permute.xlu0 11
        %1644 = vperm.xlu0 %1643, %v1457
        %v1645 = vpop.permute.xlu0 %1644
        %1647 = vset.pattern.permute.xlu0 11
        %1648 = vperm.xlu0 %1647, %v1462
        %v1649 = vpop.permute.xlu0 %1648
        %vm1651 = vcmp.ge.f32.partialorder %v1645, %v1457
        %vm1652 = vcmp.ge.f32.partialorder %v1649, %v1462
        %v1653 = vsel %vm1651, 1, 0
        %v1654 = vsel %vm1652, 1, 0
        %v1655 = vcvt.s32.f32 %v1653
        %v1656 = vcvt.s32.f32 %v1654
        %v1657 = vadd.f32 %v1641, %v1655
        %v1658 = vadd.f32 %v1642, %v1656
        %1659 = vset.pattern.permute.xlu0 12
        %1660 = vperm.xlu0 %1659, %v1457
        %v1661 = vpop.permute.xlu0 %1660
        %1663 = vset.pattern.permute.xlu0 12
        %1664 = vperm.xlu0 %1663, %v1462
        %v1665 = vpop.permute.xlu0 %1664
        %vm1667 = vcmp.ge.f32.partialorder %v1661, %v1457
        %vm1668 = vcmp.ge.f32.partialorder %v1665, %v1462
        %v1669 = vsel %vm1667, 1, 0
        %v1670 = vsel %vm1668, 1, 0
        %v1671 = vcvt.s32.f32 %v1669
        %v1672 = vcvt.s32.f32 %v1670
        %v1673 = vadd.f32 %v1657, %v1671
        %v1674 = vadd.f32 %v1658, %v1672
        %1675 = vset.pattern.permute.xlu0 13
        %1676 = vperm.xlu0 %1675, %v1457
        %v1677 = vpop.permute.xlu0 %1676
        %1679 = vset.pattern.permute.xlu0 13
        %1680 = vperm.xlu0 %1679, %v1462
        %v1681 = vpop.permute.xlu0 %1680
        %vm1683 = vcmp.ge.f32.partialorder %v1677, %v1457
        %vm1684 = vcmp.ge.f32.partialorder %v1681, %v1462
        %v1685 = vsel %vm1683, 1, 0
        %v1686 = vsel %vm1684, 1, 0
        %v1687 = vcvt.s32.f32 %v1685
        %v1688 = vcvt.s32.f32 %v1686
        %v1689 = vadd.f32 %v1673, %v1687
        %v1690 = vadd.f32 %v1674, %v1688
        %1691 = vset.pattern.permute.xlu0 14
        %1692 = vperm.xlu0 %1691, %v1457
        %v1693 = vpop.permute.xlu0 %1692
        %1695 = vset.pattern.permute.xlu0 14
        %1696 = vperm.xlu0 %1695, %v1462
        %v1697 = vpop.permute.xlu0 %1696
        %vm1699 = vcmp.ge.f32.partialorder %v1693, %v1457
        %vm1700 = vcmp.ge.f32.partialorder %v1697, %v1462
        %v1701 = vsel %vm1699, 1, 0
        %v1702 = vsel %vm1700, 1, 0
        %v1703 = vcvt.s32.f32 %v1701
        %v1704 = vcvt.s32.f32 %v1702
        %v1705 = vadd.f32 %v1689, %v1703
        %v1706 = vadd.f32 %v1690, %v1704
        %1707 = vset.pattern.permute.xlu0 15
        %1708 = vperm.xlu0 %1707, %v1457
        %v1709 = vpop.permute.xlu0 %1708
        %1711 = vset.pattern.permute.xlu0 15
        %1712 = vperm.xlu0 %1711, %v1462
        %v1713 = vpop.permute.xlu0 %1712
        %vm1715 = vcmp.ge.f32.partialorder %v1709, %v1457
        %vm1716 = vcmp.ge.f32.partialorder %v1713, %v1462
        %v1717 = vsel %vm1715, 1, 0
        %v1718 = vsel %vm1716, 1, 0
        %v1719 = vcvt.s32.f32 %v1717
        %v1720 = vcvt.s32.f32 %v1718
        %v1721 = vadd.f32 %v1705, %v1719
        %v1722 = vadd.f32 %v1706, %v1720
        %vm1723 = vcmp.ge.f32.partialorder %v1721, 11.0
        %vm1724 = vcmp.ge.f32.partialorder %v1722, 11.0
        %v1725 = vsel %vm1723, %v1457, -inf
        %v1726 = vsel %vm1724, %v1462, -inf
        %v1727 = vsel %vm1258, %v1725, -inf
        %1728 = vmax.xlane.f32.xlu0 %v1727
        %v1729 = vpop.xlane.xlu0 %1728
        %v1730 = vsel %vm1258, %v1726, -inf
        %1731 = vmax.xlane.f32.xlu0 %v1730
        %v1732 = vpop.xlane.xlu0 %1731
        %vm1733 = vcmp.lt.f32.partialorder %v1457, %v1729
        %vm1734 = vcmp.lt.f32.partialorder %v1462, %v1732
        %v1735 = vmul.f32 %v1457, 0.7
        %v1736 = vmul.f32 %v1462, 0.7
        %v1737 = vsel %vm1733, -inf, %v1735
        %v1738 = vsel %vm1734, -inf, %v1736
        %v1739 = vsel %vm1258, %v1737, -inf
        %1740 = vmax.xlane.f32.xlu0 %v1739
        %v1741 = vpop.xlane.xlu0 %1740
        %v1742 = vsel %vm1258, %v1738, -inf
        %1743 = vmax.xlane.f32.xlu0 %v1742
        %v1744 = vpop.xlane.xlu0 %1743
        %v1745 = vsub.f32 %v1737, %v1741
        %v1746 = vsub.f32 %v1738, %v1744
        %v1747 = vmul.f32 %v1745, 1.442695
        %v1748 = vpow.pop %v1747
        %v1749 = vmul.f32 %v1746, 1.442695
        %v1750 = vpow.pop %v1749
        %v1751 = vsel %vm1258, %v1748, 0.0
        %1752 = vadd.xlane.f32.xlu0 %v1751
        %v1753 = vpop.xlane.xlu0 %1752
        %v1754 = vsel %vm1258, %v1750, 0.0
        %1755 = vadd.xlane.f32.xlu0 %v1754
        %v1756 = vpop.xlane.xlu0 %1755
        %v1757 = vrcp.pop %v1753
        %v1758 = vrcp.pop %v1756
        %v1759 = vmul.f32 %v1748, %v1757
        %v1760 = vmul.f32 %v1750, %v1758
        %1763 = vrot.lane.b32.xlu0 %v896, 120
        %v1764 = vpop.permute.xlu0 %1763
        %1765 = vrot.lane.b32.xlu0 %v901, 120
        %v1766 = vpop.permute.xlu0 %1765
        %v1770 = vsel %vm1258, %v1759, 0
        %v1773 = vsel %vm1258, %v1760, 0
        %1775 = vmatprep.subr.mxu0 0.0
        %1776 = vmatpush1.msra.mxu0 %v1764
        %1777 = vmatprep.subr.mxu0 0.0
        %1778 = vmatpush1.msra.mxu0 %v1766
        %1779 = vmatprep.subr.mxu0 0.0
        %1780 = vmatpush1.msra.mxu0 0.0
        %1781 = vmatprep.subr.mxu0 0.0
        %1782 = vmatpush1.msra.mxu0 0.0
        %1783 = vmatprep.subr.mxu0 0.0
        %1784 = vmatpush1.msra.mxu0 0.0
        %1785 = vmatprep.subr.mxu0 0.0
        %1786 = vmatpush1.msra.mxu0 0.0
        %1787 = vmatprep.subr.mxu0 0.0
        %1788 = vmatpush1.msra.mxu0 0.0
        %1789 = vmatprep.subr.mxu0 0.0
        %1790 = vmatpush1.msra.mxu0 0.0
        %1791 = vmatprep.subr.mxu0 0.0
        %1792 = vmatpush1.msra.mxu0 0.0
        %1793 = vmatprep.subr.mxu0 0.0
        %1794 = vmatpush1.msra.mxu0 0.0
        %1795 = vmatprep.subr.mxu0 0.0
        %1796 = vmatpush1.msra.mxu0 0.0
        %1797 = vmatprep.subr.mxu0 0.0
        %1798 = vmatpush1.msra.mxu0 0.0
        %1799 = vmatprep.subr.mxu0 0.0
        %1800 = vmatpush1.msra.mxu0 0.0
        %1801 = vmatprep.subr.mxu0 0.0
        %1802 = vmatpush1.msra.mxu0 0.0
        %1803 = vmatprep.subr.mxu0 0.0
        %1804 = vmatpush1.msra.mxu0 0.0
        %1805 = vmatprep.subr.mxu0 0.0
        %1806 = vmatpush1.msra.mxu0 0.0
        %1807 = vmatprep.subr.mxu0 0.0
        %1808 = vmatpush1.msra.mxu0 0.0
        %1809 = vmatprep.subr.mxu0 0.0
        %1810 = vmatpush1.msra.mxu0 0.0
        %1811 = vmatprep.subr.mxu0 0.0
        %1812 = vmatpush1.msra.mxu0 0.0
        %1813 = vmatprep.subr.mxu0 0.0
        %1814 = vmatpush1.msra.mxu0 0.0
        %1815 = vmatprep.subr.mxu0 0.0
        %1816 = vmatpush1.msra.mxu0 0.0
        %1817 = vmatprep.subr.mxu0 0.0
        %1818 = vmatpush1.msra.mxu0 0.0
        %1819 = vmatprep.subr.mxu0 0.0
        %1820 = vmatpush1.msra.mxu0 0.0
        %1821 = vmatprep.subr.mxu0 0.0
        %1822 = vmatpush1.msra.mxu0 0.0
        %1823 = vmatprep.subr.mxu0 0.0
        %1824 = vmatpush1.msra.mxu0 0.0
        %1825 = vmatprep.subr.mxu0 0.0
        %1826 = vmatpush1.msra.mxu0 0.0
        %1827 = vmatprep.subr.mxu0 0.0
        %1828 = vmatpush1.msra.mxu0 0.0
        %1829 = vmatprep.subr.mxu0 0.0
        %1830 = vmatpush1.msra.mxu0 0.0
        %1831 = vmatprep.subr.mxu0 0.0
        %1832 = vmatpush1.msra.mxu0 0.0
        %1833 = vmatprep.subr.mxu0 0.0
        %1834 = vmatpush1.msra.mxu0 0.0
        %1835 = vmatprep.subr.mxu0 0.0
        %1836 = vmatpush1.msra.mxu0 0.0
        %1837 = vmatprep.subr.mxu0 0.0
        %1838 = vmatpush1.msra.mxu0 0.0
        %1839 = vmatprep.mubr.f32.mxu0 0.0
        %1840 = vmatmul.mubr.f32.gmra.mrb[0].mxu0 %v1770
        %v1841 = vpop.f32.mrb[0].mxu0
        %v1842 = vadd.f32 0.0, %v1841
        %v1843 = vpop.f32.mrb[0].mxu0
        %1844 = vmatprep.mubr.f32.mxu0 0.0
        %1845 = vmatmul.mubr.f32.gmra.mrb[0].mxu0 %v1773
        %v1846 = vpop.f32.mrb[0].mxu0
        %v1847 = vadd.f32 0.0, %v1846
        %v1848 = vpop.f32.mrb[0].mxu0
        %1849 = vdwg.mxu0
        %1850 = vrot.lane.b32.xlu0 %v904, 112
        %v1851 = vpop.permute.xlu0 %1850
        %1852 = vrot.lane.b32.xlu0 %v905, 112
        %v1853 = vpop.permute.xlu0 %1852
        %1854 = vrot.lane.b32.xlu0 %v804, 112
        %v1855 = vpop.permute.xlu0 %1854
        %1856 = vrot.lane.b32.xlu0 %v809, 112
        %v1857 = vpop.permute.xlu0 %1856
        %v1858 = vsel %vm908, %v1851, 0
        %v1860 = vsel %vm908, %v1853, 0
        %v1862 = vsel %vm908, %v1855, 0
        %v1864 = vsel %vm908, %v1857, 0
        %1866 = vmatprep.subr.mxu0 0.0
        %1867 = vmatpush1.xpose.msra.mxu0 %v1862
        %1868 = vmatprep.subr.mxu0 0.0
        %1869 = vmatpush1.xpose.msra.mxu0 %v1864
        %1870 = vmatprep.subr.mxu0 0.0
        %1871 = vmatpush1.xpose.msra.mxu0 0.0
        %1872 = vmatprep.subr.mxu0 0.0
        %1873 = vmatpush1.xpose.msra.mxu0 0.0
        %1874 = vmatprep.subr.mxu0 0.0
        %1875 = vmatpush1.xpose.msra.mxu0 0.0
        %1876 = vmatprep.subr.mxu0 0.0
        %1877 = vmatpush1.xpose.msra.mxu0 0.0
        %1878 = vmatprep.subr.mxu0 0.0
        %1879 = vmatpush1.xpose.msra.mxu0 0.0
        %1880 = vmatprep.subr.mxu0 0.0
        %1881 = vmatpush1.xpose.msra.mxu0 0.0
        %1882 = vmatprep.subr.mxu0 0.0
        %1883 = vmatpush1.xpose.msra.mxu0 0.0
        %1884 = vmatprep.subr.mxu0 0.0
        %1885 = vmatpush1.xpose.msra.mxu0 0.0
        %1886 = vmatprep.subr.mxu0 0.0
        %1887 = vmatpush1.xpose.msra.mxu0 0.0
        %1888 = vmatprep.subr.mxu0 0.0
        %1889 = vmatpush1.xpose.msra.mxu0 0.0
        %1890 = vmatprep.subr.mxu0 0.0
        %1891 = vmatpush1.xpose.msra.mxu0 0.0
        %1892 = vmatprep.subr.mxu0 0.0
        %1893 = vmatpush1.xpose.msra.mxu0 0.0
        %1894 = vmatprep.subr.mxu0 0.0
        %1895 = vmatpush1.xpose.msra.mxu0 0.0
        %1896 = vmatprep.subr.mxu0 0.0
        %1897 = vmatpush1.xpose.msra.mxu0 0.0
        %1898 = vmatprep.subr.mxu0 0.0
        %1899 = vmatpush1.xpose.msra.mxu0 0.0
        %1900 = vmatprep.subr.mxu0 0.0
        %1901 = vmatpush1.xpose.msra.mxu0 0.0
        %1902 = vmatprep.subr.mxu0 0.0
        %1903 = vmatpush1.xpose.msra.mxu0 0.0
        %1904 = vmatprep.subr.mxu0 0.0
        %1905 = vmatpush1.xpose.msra.mxu0 0.0
        %1906 = vmatprep.subr.mxu0 0.0
        %1907 = vmatpush1.xpose.msra.mxu0 0.0
        %1908 = vmatprep.subr.mxu0 0.0
        %1909 = vmatpush1.xpose.msra.mxu0 0.0
        %1910 = vmatprep.subr.mxu0 0.0
        %1911 = vmatpush1.xpose.msra.mxu0 0.0
        %1912 = vmatprep.subr.mxu0 0.0
        %1913 = vmatpush1.xpose.msra.mxu0 0.0
        %1914 = vmatprep.subr.mxu0 0.0
        %1915 = vmatpush1.xpose.msra.mxu0 0.0
        %1916 = vmatprep.subr.mxu0 0.0
        %1917 = vmatpush1.xpose.msra.mxu0 0.0
        %1918 = vmatprep.subr.mxu0 0.0
        %1919 = vmatpush1.xpose.msra.mxu0 0.0
        %1920 = vmatprep.subr.mxu0 0.0
        %1921 = vmatpush1.xpose.msra.mxu0 0.0
        %1922 = vmatprep.subr.mxu0 0.0
        %1923 = vmatpush1.xpose.msra.mxu0 0.0
        %1924 = vmatprep.subr.mxu0 0.0
        %1925 = vmatpush1.xpose.msra.mxu0 0.0
        %1926 = vmatprep.subr.mxu0 0.0
        %1927 = vmatpush1.xpose.msra.mxu0 0.0
        %1928 = vmatprep.subr.mxu0 0.0
        %1929 = vmatpush1.xpose.msra.mxu0 0.0
        %1930 = vmatprep.mubr.f32.mxu0 0.0
        %1931 = vmatmul.mubr.f32.gmra.mrb[0].mxu0 %v1858
        %v1932 = vpop.f32.mrb[0].mxu0
        %v1933 = vadd.f32 %v906, %v1932
        %v1934 = vpop.f32.mrb[0].mxu0
        %1935 = vmatprep.mubr.f32.mxu0 0.0
        %1936 = vmatmul.mubr.f32.gmra.mrb[0].mxu0 %v1860
        %v1937 = vpop.f32.mrb[0].mxu0
        %v1938 = vadd.f32 %v907, %v1937
        %v1939 = vpop.f32.mrb[0].mxu0
        %1940 = vdwg.mxu0
        %1942 = vset.pattern.permute.xlu0 0
        %1943 = vperm.xlu0 %1942, %v1933
        %v1944 = vpop.permute.xlu0 %1943
        %1947 = vset.pattern.permute.xlu0 0
        %1948 = vperm.xlu0 %1947, %v1938
        %v1949 = vpop.permute.xlu0 %1948
        %vm1951 = vcmp.ge.f32.partialorder %v1944, %v1933
        %vm1952 = vcmp.ge.f32.partialorder %v1949, %v1938
        %v1953 = vsel %vm1951, 1, 0
        %v1954 = vsel %vm1952, 1, 0
        %v1955 = vcvt.s32.f32 %v1953
        %v1956 = vcvt.s32.f32 %v1954
        %v1957 = vadd.f32 %v1955, 0.0
        %v1958 = vadd.f32 %v1956, 0.0
        %1959 = vset.pattern.permute.xlu0 1
        %1960 = vperm.xlu0 %1959, %v1933
        %v1961 = vpop.permute.xlu0 %1960
        %1963 = vset.pattern.permute.xlu0 1
        %1964 = vperm.xlu0 %1963, %v1938
        %v1965 = vpop.permute.xlu0 %1964
        %vm1967 = vcmp.ge.f32.partialorder %v1961, %v1933
        %vm1968 = vcmp.ge.f32.partialorder %v1965, %v1938
        %v1969 = vsel %vm1967, 1, 0
        %v1970 = vsel %vm1968, 1, 0
        %v1971 = vcvt.s32.f32 %v1969
        %v1972 = vcvt.s32.f32 %v1970
        %v1973 = vadd.f32 %v1957, %v1971
        %v1974 = vadd.f32 %v1958, %v1972
        %1975 = vset.pattern.permute.xlu0 2
        %1976 = vperm.xlu0 %1975, %v1933
        %v1977 = vpop.permute.xlu0 %1976
        %1979 = vset.pattern.permute.xlu0 2
        %1980 = vperm.xlu0 %1979, %v1938
        %v1981 = vpop.permute.xlu0 %1980
        %vm1983 = vcmp.ge.f32.partialorder %v1977, %v1933
        %vm1984 = vcmp.ge.f32.partialorder %v1981, %v1938
        %v1985 = vsel %vm1983, 1, 0
        %v1986 = vsel %vm1984, 1, 0
        %v1987 = vcvt.s32.f32 %v1985
        %v1988 = vcvt.s32.f32 %v1986
        %v1989 = vadd.f32 %v1973, %v1987
        %v1990 = vadd.f32 %v1974, %v1988
        %1991 = vset.pattern.permute.xlu0 3
        %1992 = vperm.xlu0 %1991, %v1933
        %v1993 = vpop.permute.xlu0 %1992
        %1995 = vset.pattern.permute.xlu0 3
        %1996 = vperm.xlu0 %1995, %v1938
        %v1997 = vpop.permute.xlu0 %1996
        %vm1999 = vcmp.ge.f32.partialorder %v1993, %v1933
        %vm2000 = vcmp.ge.f32.partialorder %v1997, %v1938
        %v2001 = vsel %vm1999, 1, 0
        %v2002 = vsel %vm2000, 1, 0
        %v2003 = vcvt.s32.f32 %v2001
        %v2004 = vcvt.s32.f32 %v2002
        %v2005 = vadd.f32 %v1989, %v2003
        %v2006 = vadd.f32 %v1990, %v2004
        %2007 = vset.pattern.permute.xlu0 4
        %2008 = vperm.xlu0 %2007, %v1933
        %v2009 = vpop.permute.xlu0 %2008
        %2011 = vset.pattern.permute.xlu0 4
        %2012 = vperm.xlu0 %2011, %v1938
        %v2013 = vpop.permute.xlu0 %2012
        %vm2015 = vcmp.ge.f32.partialorder %v2009, %v1933
        %vm2016 = vcmp.ge.f32.partialorder %v2013, %v1938
        %v2017 = vsel %vm2015, 1, 0
        %v2018 = vsel %vm2016, 1, 0
        %v2019 = vcvt.s32.f32 %v2017
        %v2020 = vcvt.s32.f32 %v2018
        %v2021 = vadd.f32 %v2005, %v2019
        %v2022 = vadd.f32 %v2006, %v2020
        %2023 = vset.pattern.permute.xlu0 5
        %2024 = vperm.xlu0 %2023, %v1933
        %v2025 = vpop.permute.xlu0 %2024
        %2027 = vset.pattern.permute.xlu0 5
        %2028 = vperm.xlu0 %2027, %v1938
        %v2029 = vpop.permute.xlu0 %2028
        %vm2031 = vcmp.ge.f32.partialorder %v2025, %v1933
        %vm2032 = vcmp.ge.f32.partialorder %v2029, %v1938
        %v2033 = vsel %vm2031, 1, 0
        %v2034 = vsel %vm2032, 1, 0
        %v2035 = vcvt.s32.f32 %v2033
        %v2036 = vcvt.s32.f32 %v2034
        %v2037 = vadd.f32 %v2021, %v2035
        %v2038 = vadd.f32 %v2022, %v2036
        %2039 = vset.pattern.permute.xlu0 6
        %2040 = vperm.xlu0 %2039, %v1933
        %v2041 = vpop.permute.xlu0 %2040
        %2043 = vset.pattern.permute.xlu0 6
        %2044 = vperm.xlu0 %2043, %v1938
        %v2045 = vpop.permute.xlu0 %2044
        %vm2047 = vcmp.ge.f32.partialorder %v2041, %v1933
        %vm2048 = vcmp.ge.f32.partialorder %v2045, %v1938
        %v2049 = vsel %vm2047, 1, 0
        %v2050 = vsel %vm2048, 1, 0
        %v2051 = vcvt.s32.f32 %v2049
        %v2052 = vcvt.s32.f32 %v2050
        %v2053 = vadd.f32 %v2037, %v2051
        %v2054 = vadd.f32 %v2038, %v2052
        %2055 = vset.pattern.permute.xlu0 7
        %2056 = vperm.xlu0 %2055, %v1933
        %v2057 = vpop.permute.xlu0 %2056
        %2059 = vset.pattern.permute.xlu0 7
        %2060 = vperm.xlu0 %2059, %v1938
        %v2061 = vpop.permute.xlu0 %2060
        %vm2063 = vcmp.ge.f32.partialorder %v2057, %v1933
        %vm2064 = vcmp.ge.f32.partialorder %v2061, %v1938
        %v2065 = vsel %vm2063, 1, 0
        %v2066 = vsel %vm2064, 1, 0
        %v2067 = vcvt.s32.f32 %v2065
        %v2068 = vcvt.s32.f32 %v2066
        %v2069 = vadd.f32 %v2053, %v2067
        %v2070 = vadd.f32 %v2054, %v2068
        %2071 = vset.pattern.permute.xlu0 8
        %2072 = vperm.xlu0 %2071, %v1933
        %v2073 = vpop.permute.xlu0 %2072
        %2075 = vset.pattern.permute.xlu0 8
        %2076 = vperm.xlu0 %2075, %v1938
        %v2077 = vpop.permute.xlu0 %2076
        %vm2079 = vcmp.ge.f32.partialorder %v2073, %v1933
        %vm2080 = vcmp.ge.f32.partialorder %v2077, %v1938
        %v2081 = vsel %vm2079, 1, 0
        %v2082 = vsel %vm2080, 1, 0
        %v2083 = vcvt.s32.f32 %v2081
        %v2084 = vcvt.s32.f32 %v2082
        %v2085 = vadd.f32 %v2069, %v2083
        %v2086 = vadd.f32 %v2070, %v2084
        %2087 = vset.pattern.permute.xlu0 9
        %2088 = vperm.xlu0 %2087, %v1933
        %v2089 = vpop.permute.xlu0 %2088
        %2091 = vset.pattern.permute.xlu0 9
        %2092 = vperm.xlu0 %2091, %v1938
        %v2093 = vpop.permute.xlu0 %2092
        %vm2095 = vcmp.ge.f32.partialorder %v2089, %v1933
        %vm2096 = vcmp.ge.f32.partialorder %v2093, %v1938
        %v2097 = vsel %vm2095, 1, 0
        %v2098 = vsel %vm2096, 1, 0
        %v2099 = vcvt.s32.f32 %v2097
        %v2100 = vcvt.s32.f32 %v2098
        %v2101 = vadd.f32 %v2085, %v2099
        %v2102 = vadd.f32 %v2086, %v2100
        %2103 = vset.pattern.permute.xlu0 10
        %2104 = vperm.xlu0 %2103, %v1933
        %v2105 = vpop.permute.xlu0 %2104
        %2107 = vset.pattern.permute.xlu0 10
        %2108 = vperm.xlu0 %2107, %v1938
        %v2109 = vpop.permute.xlu0 %2108
        %vm2111 = vcmp.ge.f32.partialorder %v2105, %v1933
        %vm2112 = vcmp.ge.f32.partialorder %v2109, %v1938
        %v2113 = vsel %vm2111, 1, 0
        %v2114 = vsel %vm2112, 1, 0
        %v2115 = vcvt.s32.f32 %v2113
        %v2116 = vcvt.s32.f32 %v2114
        %v2117 = vadd.f32 %v2101, %v2115
        %v2118 = vadd.f32 %v2102, %v2116
        %2119 = vset.pattern.permute.xlu0 11
        %2120 = vperm.xlu0 %2119, %v1933
        %v2121 = vpop.permute.xlu0 %2120
        %2123 = vset.pattern.permute.xlu0 11
        %2124 = vperm.xlu0 %2123, %v1938
        %v2125 = vpop.permute.xlu0 %2124
        %vm2127 = vcmp.ge.f32.partialorder %v2121, %v1933
        %vm2128 = vcmp.ge.f32.partialorder %v2125, %v1938
        %v2129 = vsel %vm2127, 1, 0
        %v2130 = vsel %vm2128, 1, 0
        %v2131 = vcvt.s32.f32 %v2129
        %v2132 = vcvt.s32.f32 %v2130
        %v2133 = vadd.f32 %v2117, %v2131
        %v2134 = vadd.f32 %v2118, %v2132
        %2135 = vset.pattern.permute.xlu0 12
        %2136 = vperm.xlu0 %2135, %v1933
        %v2137 = vpop.permute.xlu0 %2136
        %2139 = vset.pattern.permute.xlu0 12
        %2140 = vperm.xlu0 %2139, %v1938
        %v2141 = vpop.permute.xlu0 %2140
        %vm2143 = vcmp.ge.f32.partialorder %v2137, %v1933
        %vm2144 = vcmp.ge.f32.partialorder %v2141, %v1938
        %v2145 = vsel %vm2143, 1, 0
        %v2146 = vsel %vm2144, 1, 0
        %v2147 = vcvt.s32.f32 %v2145
        %v2148 = vcvt.s32.f32 %v2146
        %v2149 = vadd.f32 %v2133, %v2147
        %v2150 = vadd.f32 %v2134, %v2148
        %2151 = vset.pattern.permute.xlu0 13
        %2152 = vperm.xlu0 %2151, %v1933
        %v2153 = vpop.permute.xlu0 %2152
        %2155 = vset.pattern.permute.xlu0 13
        %2156 = vperm.xlu0 %2155, %v1938
        %v2157 = vpop.permute.xlu0 %2156
        %vm2159 = vcmp.ge.f32.partialorder %v2153, %v1933
        %vm2160 = vcmp.ge.f32.partialorder %v2157, %v1938
        %v2161 = vsel %vm2159, 1, 0
        %v2162 = vsel %vm2160, 1, 0
        %v2163 = vcvt.s32.f32 %v2161
        %v2164 = vcvt.s32.f32 %v2162
        %v2165 = vadd.f32 %v2149, %v2163
        %v2166 = vadd.f32 %v2150, %v2164
        %2167 = vset.pattern.permute.xlu0 14
        %2168 = vperm.xlu0 %2167, %v1933
        %v2169 = vpop.permute.xlu0 %2168
        %2171 = vset.pattern.permute.xlu0 14
        %2172 = vperm.xlu0 %2171, %v1938
        %v2173 = vpop.permute.xlu0 %2172
        %vm2175 = vcmp.ge.f32.partialorder %v2169, %v1933
        %vm2176 = vcmp.ge.f32.partialorder %v2173, %v1938
        %v2177 = vsel %vm2175, 1, 0
        %v2178 = vsel %vm2176, 1, 0
        %v2179 = vcvt.s32.f32 %v2177
        %v2180 = vcvt.s32.f32 %v2178
        %v2181 = vadd.f32 %v2165, %v2179
        %v2182 = vadd.f32 %v2166, %v2180
        %2183 = vset.pattern.permute.xlu0 15
        %2184 = vperm.xlu0 %2183, %v1933
        %v2185 = vpop.permute.xlu0 %2184
        %2187 = vset.pattern.permute.xlu0 15
        %2188 = vperm.xlu0 %2187, %v1938
        %v2189 = vpop.permute.xlu0 %2188
        %vm2191 = vcmp.ge.f32.partialorder %v2185, %v1933
        %vm2192 = vcmp.ge.f32.partialorder %v2189, %v1938
        %v2193 = vsel %vm2191, 1, 0
        %v2194 = vsel %vm2192, 1, 0
        %v2195 = vcvt.s32.f32 %v2193
        %v2196 = vcvt.s32.f32 %v2194
        %v2197 = vadd.f32 %v2181, %v2195
        %v2198 = vadd.f32 %v2182, %v2196
        %vm2199 = vcmp.ge.f32.partialorder %v2197, 11.0
        %vm2200 = vcmp.ge.f32.partialorder %v2198, 11.0
        %v2201 = vsel %vm2199, %v1933, -inf
        %v2202 = vsel %vm2200, %v1938, -inf
        %v2203 = vsel %vm1258, %v2201, -inf
        %2204 = vmax.xlane.f32.xlu0 %v2203
        %v2205 = vpop.xlane.xlu0 %2204
        %v2206 = vsel %vm1258, %v2202, -inf
        %2207 = vmax.xlane.f32.xlu0 %v2206
        %v2208 = vpop.xlane.xlu0 %2207
        %vm2209 = vcmp.lt.f32.partialorder %v1933, %v2205
        %vm2210 = vcmp.lt.f32.partialorder %v1938, %v2208
        %v2211 = vmul.f32 %v1933, 0.7
        %v2212 = vmul.f32 %v1938, 0.7
        %v2213 = vsel %vm2209, -inf, %v2211
        %v2214 = vsel %vm2210, -inf, %v2212
        %v2215 = vsel %vm1258, %v2213, -inf
        %2216 = vmax.xlane.f32.xlu0 %v2215
        %v2217 = vpop.xlane.xlu0 %2216
        %v2218 = vsel %vm1258, %v2214, -inf
        %2219 = vmax.xlane.f32.xlu0 %v2218
        %v2220 = vpop.xlane.xlu0 %2219
        %v2221 = vsub.f32 %v2213, %v2217
        %v2222 = vsub.f32 %v2214, %v2220
        %v2223 = vmul.f32 %v2221, 1.442695
        %v2224 = vpow.pop %v2223
        %v2225 = vmul.f32 %v2222, 1.442695
        %v2226 = vpow.pop %v2225
        %v2227 = vsel %vm1258, %v2224, 0.0
        %2228 = vadd.xlane.f32.xlu0 %v2227
        %v2229 = vpop.xlane.xlu0 %2228
        %v2230 = vsel %vm1258, %v2226, 0.0
        %2231 = vadd.xlane.f32.xlu0 %v2230
        %v2232 = vpop.xlane.xlu0 %2231
        %v2233 = vrcp.pop %v2229
        %v2234 = vrcp.pop %v2232
        %v2235 = vmul.f32 %v2224, %v2233
        %v2236 = vmul.f32 %v2226, %v2234
        %2237 = vrot.lane.b32.xlu0 %v896, 112
        %v2238 = vpop.permute.xlu0 %2237
        %2239 = vrot.lane.b32.xlu0 %v901, 112
        %v2240 = vpop.permute.xlu0 %2239
        %v2244 = vsel %vm1258, %v2235, 0
        %v2247 = vsel %vm1258, %v2236, 0
        %2249 = vmatprep.subr.mxu0 0.0
        %2250 = vmatpush1.msra.mxu0 %v2238
        %2251 = vmatprep.subr.mxu0 0.0
        %2252 = vmatpush1.msra.mxu0 %v2240
        %2253 = vmatprep.subr.mxu0 0.0
        %2254 = vmatpush1.msra.mxu0 0.0
        %2255 = vmatprep.subr.mxu0 0.0
        %2256 = vmatpush1.msra.mxu0 0.0
        %2257 = vmatprep.subr.mxu0 0.0
        %2258 = vmatpush1.msra.mxu0 0.0
        %2259 = vmatprep.subr.mxu0 0.0
        %2260 = vmatpush1.msra.mxu0 0.0
        %2261 = vmatprep.subr.mxu0 0.0
        %2262 = vmatpush1.msra.mxu0 0.0
        %2263 = vmatprep.subr.mxu0 0.0
        %2264 = vmatpush1.msra.mxu0 0.0
        %2265 = vmatprep.subr.mxu0 0.0
        %2266 = vmatpush1.msra.mxu0 0.0
        %2267 = vmatprep.subr.mxu0 0.0
        %2268 = vmatpush1.msra.mxu0 0.0
        %2269 = vmatprep.subr.mxu0 0.0
        %2270 = vmatpush1.msra.mxu0 0.0
        %2271 = vmatprep.subr.mxu0 0.0
        %2272 = vmatpush1.msra.mxu0 0.0
        %2273 = vmatprep.subr.mxu0 0.0
        %2274 = vmatpush1.msra.mxu0 0.0
        %2275 = vmatprep.subr.mxu0 0.0
        %2276 = vmatpush1.msra.mxu0 0.0
        %2277 = vmatprep.subr.mxu0 0.0
        %2278 = vmatpush1.msra.mxu0 0.0
        %2279 = vmatprep.subr.mxu0 0.0
        %2280 = vmatpush1.msra.mxu0 0.0
        %2281 = vmatprep.subr.mxu0 0.0
        %2282 = vmatpush1.msra.mxu0 0.0
        %2283 = vmatprep.subr.mxu0 0.0
        %2284 = vmatpush1.msra.mxu0 0.0
        %2285 = vmatprep.subr.mxu0 0.0
        %2286 = vmatpush1.msra.mxu0 0.0
        %2287 = vmatprep.subr.mxu0 0.0
        %2288 = vmatpush1.msra.mxu0 0.0
        %2289 = vmatprep.subr.mxu0 0.0
        %2290 = vmatpush1.msra.mxu0 0.0
        %2291 = vmatprep.subr.mxu0 0.0
        %2292 = vmatpush1.msra.mxu0 0.0
        %2293 = vmatprep.subr.mxu0 0.0
        %2294 = vmatpush1.msra.mxu0 0.0
        %2295 = vmatprep.subr.mxu0 0.0
        %2296 = vmatpush1.msra.mxu0 0.0
        %2297 = vmatprep.subr.mxu0 0.0
        %2298 = vmatpush1.msra.mxu0 0.0
        %2299 = vmatprep.subr.mxu0 0.0
        %2300 = vmatpush1.msra.mxu0 0.0
        %2301 = vmatprep.subr.mxu0 0.0
        %2302 = vmatpush1.msra.mxu0 0.0
        %2303 = vmatprep.subr.mxu0 0.0
        %2304 = vmatpush1.msra.mxu0 0.0
        %2305 = vmatprep.subr.mxu0 0.0
        %2306 = vmatpush1.msra.mxu0 0.0
        %2307 = vmatprep.subr.mxu0 0.0
        %2308 = vmatpush1.msra.mxu0 0.0
        %2309 = vmatprep.subr.mxu0 0.0
        %2310 = vmatpush1.msra.mxu0 0.0
        %2311 = vmatprep.subr.mxu0 0.0
        %2312 = vmatpush1.msra.mxu0 0.0
        %2313 = vmatprep.mubr.f32.mxu0 0.0
        %2314 = vmatmul.mubr.f32.gmra.mrb[0].mxu0 %v2244
        %v2315 = vpop.f32.mrb[0].mxu0
        %v2316 = vadd.f32 0.0, %v2315
        %v2317 = vpop.f32.mrb[0].mxu0
        %2318 = vmatprep.mubr.f32.mxu0 0.0
        %2319 = vmatmul.mubr.f32.gmra.mrb[0].mxu0 %v2247
        %v2320 = vpop.f32.mrb[0].mxu0
        %v2321 = vadd.f32 0.0, %v2320
        %v2322 = vpop.f32.mrb[0].mxu0
        %2323 = vdwg.mxu0
        %2324 = vrot.lane.b32.xlu0 %v904, 104
        %v2325 = vpop.permute.xlu0 %2324
        %2326 = vrot.lane.b32.xlu0 %v905, 104
        %v2327 = vpop.permute.xlu0 %2326
        %2328 = vrot.lane.b32.xlu0 %v804, 104
        %v2329 = vpop.permute.xlu0 %2328
        %2330 = vrot.lane.b32.xlu0 %v809, 104
        %v2331 = vpop.permute.xlu0 %2330
        %v2332 = vsel %vm908, %v2325, 0
        %v2334 = vsel %vm908, %v2327, 0
        %v2336 = vsel %vm908, %v2329, 0
        %v2338 = vsel %vm908, %v2331, 0
        %2340 = vmatprep.subr.mxu0 0.0
        %2341 = vmatpush1.xpose.msra.mxu0 %v2336
        %2342 = vmatprep.subr.mxu0 0.0
        %2343 = vmatpush1.xpose.msra.mxu0 %v2338
        %2344 = vmatprep.subr.mxu0 0.0
        %2345 = vmatpush1.xpose.msra.mxu0 0.0
        %2346 = vmatprep.subr.mxu0 0.0
        %2347 = vmatpush1.xpose.msra.mxu0 0.0
        %2348 = vmatprep.subr.mxu0 0.0
        %2349 = vmatpush1.xpose.msra.mxu0 0.0
        %2350 = vmatprep.subr.mxu0 0.0
        %2351 = vmatpush1.xpose.msra.mxu0 0.0
        %2352 = vmatprep.subr.mxu0 0.0
        %2353 = vmatpush1.xpose.msra.mxu0 0.0
        %2354 = vmatprep.subr.mxu0 0.0
        %2355 = vmatpush1.xpose.msra.mxu0 0.0
        %2356 = vmatprep.subr.mxu0 0.0
        %2357 = vmatpush1.xpose.msra.mxu0 0.0
        %2358 = vmatprep.subr.mxu0 0.0
        %2359 = vmatpush1.xpose.msra.mxu0 0.0
        %2360 = vmatprep.subr.mxu0 0.0
        %2361 = vmatpush1.xpose.msra.mxu0 0.0
        %2362 = vmatprep.subr.mxu0 0.0
        %2363 = vmatpush1.xpose.msra.mxu0 0.0
        %2364 = vmatprep.subr.mxu0 0.0
        %2365 = vmatpush1.xpose.msra.mxu0 0.0
        %2366 = vmatprep.subr.mxu0 0.0
        %2367 = vmatpush1.xpose.msra.mxu0 0.0
        %2368 = vmatprep.subr.mxu0 0.0
        %2369 = vmatpush1.xpose.msra.mxu0 0.0
        %2370 = vmatprep.subr.mxu0 0.0
        %2371 = vmatpush1.xpose.msra.mxu0 0.0
        %2372 = vmatprep.subr.mxu0 0.0
        %2373 = vmatpush1.xpose.msra.mxu0 0.0
        %2374 = vmatprep.subr.mxu0 0.0
        %2375 = vmatpush1.xpose.msra.mxu0 0.0
        %2376 = vmatprep.subr.mxu0 0.0
        %2377 = vmatpush1.xpose.msra.mxu0 0.0
        %2378 = vmatprep.subr.mxu0 0.0
        %2379 = vmatpush1.xpose.msra.mxu0 0.0
        %2380 = vmatprep.subr.mxu0 0.0
        %2381 = vmatpush1.xpose.msra.mxu0 0.0
        %2382 = vmatprep.subr.mxu0 0.0
        %2383 = vmatpush1.xpose.msra.mxu0 0.0
        %2384 = vmatprep.subr.mxu0 0.0
        %2385 = vmatpush1.xpose.msra.mxu0 0.0
        %2386 = vmatprep.subr.mxu0 0.0
        %2387 = vmatpush1.xpose.msra.mxu0 0.0
        %2388 = vmatprep.subr.mxu0 0.0
        %2389 = vmatpush1.xpose.msra.mxu0 0.0
        %2390 = vmatprep.subr.mxu0 0.0
        %2391 = vmatpush1.xpose.msra.mxu0 0.0
        %2392 = vmatprep.subr.mxu0 0.0
        %2393 = vmatpush1.xpose.msra.mxu0 0.0
        %2394 = vmatprep.subr.mxu0 0.0
        %2395 = vmatpush1.xpose.msra.mxu0 0.0
        %2396 = vmatprep.subr.mxu0 0.0
        %2397 = vmatpush1.xpose.msra.mxu0 0.0
        %2398 = vmatprep.subr.mxu0 0.0
        %2399 = vmatpush1.xpose.msra.mxu0 0.0
        %2400 = vmatprep.subr.mxu0 0.0
        %2401 = vmatpush1.xpose.msra.mxu0 0.0
        %2402 = vmatprep.subr.mxu0 0.0
        %2403 = vmatpush1.xpose.msra.mxu0 0.0
        %2404 = vmatprep.mubr.f32.mxu0 0.0
        %2405 = vmatmul.mubr.f32.gmra.mrb[0].mxu0 %v2332
        %v2406 = vpop.f32.mrb[0].mxu0
        %v2407 = vadd.f32 %v906, %v2406
        %v2408 = vpop.f32.mrb[0].mxu0
        %2409 = vmatprep.mubr.f32.mxu0 0.0
        %2410 = vmatmul.mubr.f32.gmra.mrb[0].mxu0 %v2334
        %v2411 = vpop.f32.mrb[0].mxu0
        %v2412 = vadd.f32 %v907, %v2411
        %v2413 = vpop.f32.mrb[0].mxu0
        %2414 = vdwg.mxu0
        %2416 = vset.pattern.permute.xlu0 0
        %2417 = vperm.xlu0 %2416, %v2407
        %v2418 = vpop.permute.xlu0 %2417
        %2421 = vset.pattern.permute.xlu0 0
        %2422 = vperm.xlu0 %2421, %v2412
        %v2423 = vpop.permute.xlu0 %2422
        %vm2425 = vcmp.ge.f32.partialorder %v2418, %v2407
        %vm2426 = vcmp.ge.f32.partialorder %v2423, %v2412
        %v2427 = vsel %vm2425, 1, 0
        %v2428 = vsel %vm2426, 1, 0
        %v2429 = vcvt.s32.f32 %v2427
        %v2430 = vcvt.s32.f32 %v2428
        %v2431 = vadd.f32 %v2429, 0.0
        %v2432 = vadd.f32 %v2430, 0.0
        %2433 = vset.pattern.permute.xlu0 1
        %2434 = vperm.xlu0 %2433, %v2407
        %v2435 = vpop.permute.xlu0 %2434
        %2437 = vset.pattern.permute.xlu0 1
        %2438 = vperm.xlu0 %2437, %v2412
        %v2439 = vpop.permute.xlu0 %2438
        %vm2441 = vcmp.ge.f32.partialorder %v2435, %v2407
        %vm2442 = vcmp.ge.f32.partialorder %v2439, %v2412
        %v2443 = vsel %vm2441, 1, 0
        %v2444 = vsel %vm2442, 1, 0
        %v2445 = vcvt.s32.f32 %v2443
        %v2446 = vcvt.s32.f32 %v2444
        %v2447 = vadd.f32 %v2431, %v2445
        %v2448 = vadd.f32 %v2432, %v2446
        %2449 = vset.pattern.permute.xlu0 2
        %2450 = vperm.xlu0 %2449, %v2407
        %v2451 = vpop.permute.xlu0 %2450
        %2453 = vset.pattern.permute.xlu0 2
        %2454 = vperm.xlu0 %2453, %v2412
        %v2455 = vpop.permute.xlu0 %2454
        %vm2457 = vcmp.ge.f32.partialorder %v2451, %v2407
        %vm2458 = vcmp.ge.f32.partialorder %v2455, %v2412
        %v2459 = vsel %vm2457, 1, 0
        %v2460 = vsel %vm2458, 1, 0
        %v2461 = vcvt.s32.f32 %v2459
        %v2462 = vcvt.s32.f32 %v2460
        %v2463 = vadd.f32 %v2447, %v2461
        %v2464 = vadd.f32 %v2448, %v2462
        %2465 = vset.pattern.permute.xlu0 3
        %2466 = vperm.xlu0 %2465, %v2407
        %v2467 = vpop.permute.xlu0 %2466
        %2469 = vset.pattern.permute.xlu0 3
        %2470 = vperm.xlu0 %2469, %v2412
        %v2471 = vpop.permute.xlu0 %2470
        %vm2473 = vcmp.ge.f32.partialorder %v2467, %v2407
        %vm2474 = vcmp.ge.f32.partialorder %v2471, %v2412
        %v2475 = vsel %vm2473, 1, 0
        %v2476 = vsel %vm2474, 1, 0
        %v2477 = vcvt.s32.f32 %v2475
        %v2478 = vcvt.s32.f32 %v2476
        %v2479 = vadd.f32 %v2463, %v2477
        %v2480 = vadd.f32 %v2464, %v2478
        %2481 = vset.pattern.permute.xlu0 4
        %2482 = vperm.xlu0 %2481, %v2407
        %v2483 = vpop.permute.xlu0 %2482
        %2485 = vset.pattern.permute.xlu0 4
        %2486 = vperm.xlu0 %2485, %v2412
        %v2487 = vpop.permute.xlu0 %2486
        %vm2489 = vcmp.ge.f32.partialorder %v2483, %v2407
        %vm2490 = vcmp.ge.f32.partialorder %v2487, %v2412
        %v2491 = vsel %vm2489, 1, 0
        %v2492 = vsel %vm2490, 1, 0
        %v2493 = vcvt.s32.f32 %v2491
        %v2494 = vcvt.s32.f32 %v2492
        %v2495 = vadd.f32 %v2479, %v2493
        %v2496 = vadd.f32 %v2480, %v2494
        %2497 = vset.pattern.permute.xlu0 5
        %2498 = vperm.xlu0 %2497, %v2407
        %v2499 = vpop.permute.xlu0 %2498
        %2501 = vset.pattern.permute.xlu0 5
        %2502 = vperm.xlu0 %2501, %v2412
        %v2503 = vpop.permute.xlu0 %2502
        %vm2505 = vcmp.ge.f32.partialorder %v2499, %v2407
        %vm2506 = vcmp.ge.f32.partialorder %v2503, %v2412
        %v2507 = vsel %vm2505, 1, 0
        %v2508 = vsel %vm2506, 1, 0
        %v2509 = vcvt.s32.f32 %v2507
        %v2510 = vcvt.s32.f32 %v2508
        %v2511 = vadd.f32 %v2495, %v2509
        %v2512 = vadd.f32 %v2496, %v2510
        %2513 = vset.pattern.permute.xlu0 6
        %2514 = vperm.xlu0 %2513, %v2407
        %v2515 = vpop.permute.xlu0 %2514
        %2517 = vset.pattern.permute.xlu0 6
        %2518 = vperm.xlu0 %2517, %v2412
        %v2519 = vpop.permute.xlu0 %2518
        %vm2521 = vcmp.ge.f32.partialorder %v2515, %v2407
        %vm2522 = vcmp.ge.f32.partialorder %v2519, %v2412
        %v2523 = vsel %vm2521, 1, 0
        %v2524 = vsel %vm2522, 1, 0
        %v2525 = vcvt.s32.f32 %v2523
        %v2526 = vcvt.s32.f32 %v2524
        %v2527 = vadd.f32 %v2511, %v2525
        %v2528 = vadd.f32 %v2512, %v2526
        %2529 = vset.pattern.permute.xlu0 7
        %2530 = vperm.xlu0 %2529, %v2407
        %v2531 = vpop.permute.xlu0 %2530
        %2533 = vset.pattern.permute.xlu0 7
        %2534 = vperm.xlu0 %2533, %v2412
        %v2535 = vpop.permute.xlu0 %2534
        %vm2537 = vcmp.ge.f32.partialorder %v2531, %v2407
        %vm2538 = vcmp.ge.f32.partialorder %v2535, %v2412
        %v2539 = vsel %vm2537, 1, 0
        %v2540 = vsel %vm2538, 1, 0
        %v2541 = vcvt.s32.f32 %v2539
        %v2542 = vcvt.s32.f32 %v2540
        %v2543 = vadd.f32 %v2527, %v2541
        %v2544 = vadd.f32 %v2528, %v2542
        %2545 = vset.pattern.permute.xlu0 8
        %2546 = vperm.xlu0 %2545, %v2407
        %v2547 = vpop.permute.xlu0 %2546
        %2549 = vset.pattern.permute.xlu0 8
        %2550 = vperm.xlu0 %2549, %v2412
        %v2551 = vpop.permute.xlu0 %2550
        %vm2553 = vcmp.ge.f32.partialorder %v2547, %v2407
        %vm2554 = vcmp.ge.f32.partialorder %v2551, %v2412
        %v2555 = vsel %vm2553, 1, 0
        %v2556 = vsel %vm2554, 1, 0
        %v2557 = vcvt.s32.f32 %v2555
        %v2558 = vcvt.s32.f32 %v2556
        %v2559 = vadd.f32 %v2543, %v2557
        %v2560 = vadd.f32 %v2544, %v2558
        %2561 = vset.pattern.permute.xlu0 9
        %2562 = vperm.xlu0 %2561, %v2407
        %v2563 = vpop.permute.xlu0 %2562
        %2565 = vset.pattern.permute.xlu0 9
        %2566 = vperm.xlu0 %2565, %v2412
        %v2567 = vpop.permute.xlu0 %2566
        %vm2569 = vcmp.ge.f32.partialorder %v2563, %v2407
        %vm2570 = vcmp.ge.f32.partialorder %v2567, %v2412
        %v2571 = vsel %vm2569, 1, 0
        %v2572 = vsel %vm2570, 1, 0
        %v2573 = vcvt.s32.f32 %v2571
        %v2574 = vcvt.s32.f32 %v2572
        %v2575 = vadd.f32 %v2559, %v2573
        %v2576 = vadd.f32 %v2560, %v2574
        %2577 = vset.pattern.permute.xlu0 10
        %2578 = vperm.xlu0 %2577, %v2407
        %v2579 = vpop.permute.xlu0 %2578
        %2581 = vset.pattern.permute.xlu0 10
        %2582 = vperm.xlu0 %2581, %v2412
        %v2583 = vpop.permute.xlu0 %2582
        %vm2585 = vcmp.ge.f32.partialorder %v2579, %v2407
        %vm2586 = vcmp.ge.f32.partialorder %v2583, %v2412
        %v2587 = vsel %vm2585, 1, 0
        %v2588 = vsel %vm2586, 1, 0
        %v2589 = vcvt.s32.f32 %v2587
        %v2590 = vcvt.s32.f32 %v2588
        %v2591 = vadd.f32 %v2575, %v2589
        %v2592 = vadd.f32 %v2576, %v2590
        %2593 = vset.pattern.permute.xlu0 11
        %2594 = vperm.xlu0 %2593, %v2407
        %v2595 = vpop.permute.xlu0 %2594
        %2597 = vset.pattern.permute.xlu0 11
        %2598 = vperm.xlu0 %2597, %v2412
        %v2599 = vpop.permute.xlu0 %2598
        %vm2601 = vcmp.ge.f32.partialorder %v2595, %v2407
        %vm2602 = vcmp.ge.f32.partialorder %v2599, %v2412
        %v2603 = vsel %vm2601, 1, 0
        %v2604 = vsel %vm2602, 1, 0
        %v2605 = vcvt.s32.f32 %v2603
        %v2606 = vcvt.s32.f32 %v2604
        %v2607 = vadd.f32 %v2591, %v2605
        %v2608 = vadd.f32 %v2592, %v2606
        %2609 = vset.pattern.permute.xlu0 12
        %2610 = vperm.xlu0 %2609, %v2407
        %v2611 = vpop.permute.xlu0 %2610
        %2613 = vset.pattern.permute.xlu0 12
        %2614 = vperm.xlu0 %2613, %v2412
        %v2615 = vpop.permute.xlu0 %2614
        %vm2617 = vcmp.ge.f32.partialorder %v2611, %v2407
        %vm2618 = vcmp.ge.f32.partialorder %v2615, %v2412
        %v2619 = vsel %vm2617, 1, 0
        %v2620 = vsel %vm2618, 1, 0
        %v2621 = vcvt.s32.f32 %v2619
        %v2622 = vcvt.s32.f32 %v2620
        %v2623 = vadd.f32 %v2607, %v2621
        %v2624 = vadd.f32 %v2608, %v2622
        %2625 = vset.pattern.permute.xlu0 13
        %2626 = vperm.xlu0 %2625, %v2407
        %v2627 = vpop.permute.xlu0 %2626
        %2629 = vset.pattern.permute.xlu0 13
        %2630 = vperm.xlu0 %2629, %v2412
        %v2631 = vpop.permute.xlu0 %2630
        %vm2633 = vcmp.ge.f32.partialorder %v2627, %v2407
        %vm2634 = vcmp.ge.f32.partialorder %v2631, %v2412
        %v2635 = vsel %vm2633, 1, 0
        %v2636 = vsel %vm2634, 1, 0
        %v2637 = vcvt.s32.f32 %v2635
        %v2638 = vcvt.s32.f32 %v2636
        %v2639 = vadd.f32 %v2623, %v2637
        %v2640 = vadd.f32 %v2624, %v2638
        %2641 = vset.pattern.permute.xlu0 14
        %2642 = vperm.xlu0 %2641, %v2407
        %v2643 = vpop.permute.xlu0 %2642
        %2645 = vset.pattern.permute.xlu0 14
        %2646 = vperm.xlu0 %2645, %v2412
        %v2647 = vpop.permute.xlu0 %2646
        %vm2649 = vcmp.ge.f32.partialorder %v2643, %v2407
        %vm2650 = vcmp.ge.f32.partialorder %v2647, %v2412
        %v2651 = vsel %vm2649, 1, 0
        %v2652 = vsel %vm2650, 1, 0
        %v2653 = vcvt.s32.f32 %v2651
        %v2654 = vcvt.s32.f32 %v2652
        %v2655 = vadd.f32 %v2639, %v2653
        %v2656 = vadd.f32 %v2640, %v2654
        %2657 = vset.pattern.permute.xlu0 15
        %2658 = vperm.xlu0 %2657, %v2407
        %v2659 = vpop.permute.xlu0 %2658
        %2661 = vset.pattern.permute.xlu0 15
        %2662 = vperm.xlu0 %2661, %v2412
        %v2663 = vpop.permute.xlu0 %2662
        %vm2665 = vcmp.ge.f32.partialorder %v2659, %v2407
        %vm2666 = vcmp.ge.f32.partialorder %v2663, %v2412
        %v2667 = vsel %vm2665, 1, 0
        %v2668 = vsel %vm2666, 1, 0
        %v2669 = vcvt.s32.f32 %v2667
        %v2670 = vcvt.s32.f32 %v2668
        %v2671 = vadd.f32 %v2655, %v2669
        %v2672 = vadd.f32 %v2656, %v2670
        %vm2673 = vcmp.ge.f32.partialorder %v2671, 11.0
        %vm2674 = vcmp.ge.f32.partialorder %v2672, 11.0
        %v2675 = vsel %vm2673, %v2407, -inf
        %v2676 = vsel %vm2674, %v2412, -inf
        %v2677 = vsel %vm1258, %v2675, -inf
        %2678 = vmax.xlane.f32.xlu0 %v2677
        %v2679 = vpop.xlane.xlu0 %2678
        %v2680 = vsel %vm1258, %v2676, -inf
        %2681 = vmax.xlane.f32.xlu0 %v2680
        %v2682 = vpop.xlane.xlu0 %2681
        %vm2683 = vcmp.lt.f32.partialorder %v2407, %v2679
        %vm2684 = vcmp.lt.f32.partialorder %v2412, %v2682
        %v2685 = vmul.f32 %v2407, 0.7
        %v2686 = vmul.f32 %v2412, 0.7
        %v2687 = vsel %vm2683, -inf, %v2685
        %v2688 = vsel %vm2684, -inf, %v2686
        %v2689 = vsel %vm1258, %v2687, -inf
        %2690 = vmax.xlane.f32.xlu0 %v2689
        %v2691 = vpop.xlane.xlu0 %2690
        %v2692 = vsel %vm1258, %v2688, -inf
        %2693 = vmax.xlane.f32.xlu0 %v2692
        %v2694 = vpop.xlane.xlu0 %2693
        %v2695 = vsub.f32 %v2687, %v2691
        %v2696 = vsub.f32 %v2688, %v2694
        %v2697 = vmul.f32 %v2695, 1.442695
        %v2698 = vpow.pop %v2697
        %v2699 = vmul.f32 %v2696, 1.442695
        %v2700 = vpow.pop %v2699
        %v2701 = vsel %vm1258, %v2698, 0.0
        %2702 = vadd.xlane.f32.xlu0 %v2701
        %v2703 = vpop.xlane.xlu0 %2702
        %v2704 = vsel %vm1258, %v2700, 0.0
        %2705 = vadd.xlane.f32.xlu0 %v2704
        %v2706 = vpop.xlane.xlu0 %2705
        %v2707 = vrcp.pop %v2703
        %v2708 = vrcp.pop %v2706
        %v2709 = vmul.f32 %v2698, %v2707
        %v2710 = vmul.f32 %v2700, %v2708
        %2711 = vrot.lane.b32.xlu0 %v896, 104
        %v2712 = vpop.permute.xlu0 %2711
        %2713 = vrot.lane.b32.xlu0 %v901, 104
        %v2714 = vpop.permute.xlu0 %2713
        %v2718 = vsel %vm1258, %v2709, 0
        %v2721 = vsel %vm1258, %v2710, 0
        %2723 = vmatprep.subr.mxu0 0.0
        %2724 = vmatpush1.msra.mxu0 %v2712
        %2725 = vmatprep.subr.mxu0 0.0
        %2726 = vmatpush1.msra.mxu0 %v2714
        %2727 = vmatprep.subr.mxu0 0.0
        %2728 = vmatpush1.msra.mxu0 0.0
        %2729 = vmatprep.subr.mxu0 0.0
        %2730 = vmatpush1.msra.mxu0 0.0
        %2731 = vmatprep.subr.mxu0 0.0
        %2732 = vmatpush1.msra.mxu0 0.0
        %2733 = vmatprep.subr.mxu0 0.0
        %2734 = vmatpush1.msra.mxu0 0.0
        %2735 = vmatprep.subr.mxu0 0.0
        %2736 = vmatpush1.msra.mxu0 0.0
        %2737 = vmatprep.subr.mxu0 0.0
        %2738 = vmatpush1.msra.mxu0 0.0
        %2739 = vmatprep.subr.mxu0 0.0
        %2740 = vmatpush1.msra.mxu0 0.0
        %2741 = vmatprep.subr.mxu0 0.0
        %2742 = vmatpush1.msra.mxu0 0.0
        %2743 = vmatprep.subr.mxu0 0.0
        %2744 = vmatpush1.msra.mxu0 0.0
        %2745 = vmatprep.subr.mxu0 0.0
        %2746 = vmatpush1.msra.mxu0 0.0
        %2747 = vmatprep.subr.mxu0 0.0
        %2748 = vmatpush1.msra.mxu0 0.0
        %2749 = vmatprep.subr.mxu0 0.0
        %2750 = vmatpush1.msra.mxu0 0.0
        %2751 = vmatprep.subr.mxu0 0.0
        %2752 = vmatpush1.msra.mxu0 0.0
        %2753 = vmatprep.subr.mxu0 0.0
        %2754 = vmatpush1.msra.mxu0 0.0
        %2755 = vmatprep.subr.mxu0 0.0
        %2756 = vmatpush1.msra.mxu0 0.0
        %2757 = vmatprep.subr.mxu0 0.0
        %2758 = vmatpush1.msra.mxu0 0.0
        %2759 = vmatprep.subr.mxu0 0.0
        %2760 = vmatpush1.msra.mxu0 0.0
        %2761 = vmatprep.subr.mxu0 0.0
        %2762 = vmatpush1.msra.mxu0 0.0
        %2763 = vmatprep.subr.mxu0 0.0
        %2764 = vmatpush1.msra.mxu0 0.0
        %2765 = vmatprep.subr.mxu0 0.0
        %2766 = vmatpush1.msra.mxu0 0.0
        %2767 = vmatprep.subr.mxu0 0.0
        %2768 = vmatpush1.msra.mxu0 0.0
        %2769 = vmatprep.subr.mxu0 0.0
        %2770 = vmatpush1.msra.mxu0 0.0
        %2771 = vmatprep.subr.mxu0 0.0
        %2772 = vmatpush1.msra.mxu0 0.0
        %2773 = vmatprep.subr.mxu0 0.0
        %2774 = vmatpush1.msra.mxu0 0.0
        %2775 = vmatprep.subr.mxu0 0.0
        %2776 = vmatpush1.msra.mxu0 0.0
        %2777 = vmatprep.subr.mxu0 0.0
        %2778 = vmatpush1.msra.mxu0 0.0
        %2779 = vmatprep.subr.mxu0 0.0
        %2780 = vmatpush1.msra.mxu0 0.0
        %2781 = vmatprep.subr.mxu0 0.0
        %2782 = vmatpush1.msra.mxu0 0.0
        %2783 = vmatprep.subr.mxu0 0.0
        %2784 = vmatpush1.msra.mxu0 0.0
        %2785 = vmatprep.subr.mxu0 0.0
        %2786 = vmatpush1.msra.mxu0 0.0
        %2787 = vmatprep.mubr.f32.mxu0 0.0
        %2788 = vmatmul.mubr.f32.gmra.mrb[0].mxu0 %v2718
        %v2789 = vpop.f32.mrb[0].mxu0
        %v2790 = vadd.f32 0.0, %v2789
        %v2791 = vpop.f32.mrb[0].mxu0
        %2792 = vmatprep.mubr.f32.mxu0 0.0
        %2793 = vmatmul.mubr.f32.gmra.mrb[0].mxu0 %v2721
        %v2794 = vpop.f32.mrb[0].mxu0
        %v2795 = vadd.f32 0.0, %v2794
        %v2796 = vpop.f32.mrb[0].mxu0
        %2797 = vdwg.mxu0
        %2800 = vrot.lane.b32.xlu0 %v1842, 8
        %v2801 = vpop.permute.xlu0 %2800
        %2802 = vrot.lane.b32.xlu0 %v1847, 8
        %v2803 = vpop.permute.xlu0 %2802
        %2808 = vrot.lane.b32.xlu0 %v2316, 16
        %v2809 = vpop.permute.xlu0 %2808
        %2810 = vrot.lane.b32.xlu0 %v2321, 16
        %v2811 = vpop.permute.xlu0 %2810
        %2816 = vrot.lane.b32.xlu0 %v2790, 24
        %v2817 = vpop.permute.xlu0 %2816
        %2818 = vrot.lane.b32.xlu0 %v2795, 24
        %v2819 = vpop.permute.xlu0 %2818
        %v2822 = vsel %vm908, %v1366, %v2801
        %v2823 = vsel %vm908, %v1371, %v2803
        %v2824 = vsel %vm1258, %v2822, %v2809
        %v2825 = vsel %vm1258, %v2823, %v2811
        %vm2826 = vcmask 195584
        %v2827 = vsel %vm2826, %v2824, %v2817
        %v2828 = vsel %vm2826, %v2825, %v2819
        %v2829 = vld [vmem:[%s10] sm:$0xff]
        %v2830 = vld [vmem:[%s10 + $0x8] sm:$0xff]
        %v2831 = vld [vmem:[%s10 + $0x10] sm:$0xff]
        %v2832 = vld [vmem:[%s10 + $0x18] sm:$0xff]
        %v2833 = vld [vmem:[%s11] sm:$0x1]
        %v2835 = vlaneseq
        %v2836 = vshrl.u32 %v2835, 7
        %v2837 = vsub.s32 0, %v2836
        %v2838 = vrot.slane %v2833, %v2837
        %v2841 = vsel %vm638, %v2827, 0
        %v2844 = vsel %vm638, %v2828, 0
        %2846 = vmatprep.subr.mxu0 0.0
        %2847 = vmatpush1.msra.mxu0 %v2829
        %2848 = vmatprep.subr.mxu0 0.0
        %2849 = vmatpush1.msra.mxu0 %v2830
        %2850 = vmatprep.subr.mxu0 0.0
        %2851 = vmatpush1.msra.mxu0 %v2831
        %2852 = vmatprep.subr.mxu0 0.0
        %2853 = vmatpush1.msra.mxu0 %v2832
        %2854 = vmatprep.subr.mxu0 0.0
        %2855 = vmatpush1.msra.mxu0 0.0
        %2856 = vmatprep.subr.mxu0 0.0
        %2857 = vmatpush1.msra.mxu0 0.0
        %2858 = vmatprep.subr.mxu0 0.0
        %2859 = vmatpush1.msra.mxu0 0.0
        %2860 = vmatprep.subr.mxu0 0.0
        %2861 = vmatpush1.msra.mxu0 0.0
        %2862 = vmatprep.subr.mxu0 0.0
        %2863 = vmatpush1.msra.mxu0 0.0
        %2864 = vmatprep.subr.mxu0 0.0
        %2865 = vmatpush1.msra.mxu0 0.0
        %2866 = vmatprep.subr.mxu0 0.0
        %2867 = vmatpush1.msra.mxu0 0.0
        %2868 = vmatprep.subr.mxu0 0.0
        %2869 = vmatpush1.msra.mxu0 0.0
        %2870 = vmatprep.subr.mxu0 0.0
        %2871 = vmatpush1.msra.mxu0 0.0
        %2872 = vmatprep.subr.mxu0 0.0
        %2873 = vmatpush1.msra.mxu0 0.0
        %2874 = vmatprep.subr.mxu0 0.0
        %2875 = vmatpush1.msra.mxu0 0.0
        %2876 = vmatprep.subr.mxu0 0.0
        %2877 = vmatpush1.msra.mxu0 0.0
        %2878 = vmatprep.subr.mxu0 0.0
        %2879 = vmatpush1.msra.mxu0 0.0
        %2880 = vmatprep.subr.mxu0 0.0
        %2881 = vmatpush1.msra.mxu0 0.0
        %2882 = vmatprep.subr.mxu0 0.0
        %2883 = vmatpush1.msra.mxu0 0.0
        %2884 = vmatprep.subr.mxu0 0.0
        %2885 = vmatpush1.msra.mxu0 0.0
        %2886 = vmatprep.subr.mxu0 0.0
        %2887 = vmatpush1.msra.mxu0 0.0
        %2888 = vmatprep.subr.mxu0 0.0
        %2889 = vmatpush1.msra.mxu0 0.0
        %2890 = vmatprep.subr.mxu0 0.0
        %2891 = vmatpush1.msra.mxu0 0.0
        %2892 = vmatprep.subr.mxu0 0.0
        %2893 = vmatpush1.msra.mxu0 0.0
        %2894 = vmatprep.subr.mxu0 0.0
        %2895 = vmatpush1.msra.mxu0 0.0
        %2896 = vmatprep.subr.mxu0 0.0
        %2897 = vmatpush1.msra.mxu0 0.0
        %2898 = vmatprep.subr.mxu0 0.0
        %2899 = vmatpush1.msra.mxu0 0.0
        %2900 = vmatprep.subr.mxu0 0.0
        %2901 = vmatpush1.msra.mxu0 0.0
        %2902 = vmatprep.subr.mxu0 0.0
        %2903 = vmatpush1.msra.mxu0 0.0
        %2904 = vmatprep.subr.mxu0 0.0
        %2905 = vmatpush1.msra.mxu0 0.0
        %2906 = vmatprep.subr.mxu0 0.0
        %2907 = vmatpush1.msra.mxu0 0.0
        %2908 = vmatprep.subr.mxu0 0.0
        %2909 = vmatpush1.msra.mxu0 0.0
        %2910 = vmatprep.mubr.f32.mxu0 0.0
        %2911 = vmatmul.mubr.f32.gmra.mrb[0].mxu0 %v2841
        %v2912 = vpop.f32.mrb[0].mxu0
        %v2913 = vadd.f32 %v2838, %v2912
        %v2914 = vpop.f32.mrb[0].mxu0
        %2915 = vmatprep.mubr.f32.mxu0 0.0
        %2916 = vmatmul.mubr.f32.gmra.mrb[0].mxu0 %v2844
        %v2917 = vpop.f32.mrb[0].mxu0
        %v2918 = vadd.f32 %v2838, %v2917
        %v2919 = vpop.f32.mrb[0].mxu0
        %2920 = vdwg.mxu0
        %v2921 = vadd.f32 %v621, %v2913
        %v2922 = vadd.f32 %v622, %v2918
        %v2923 = vsel %vm638, %v2921, 0.0
        %2924 = vadd.xlane.f32.xlu0 %v2923
        %v2925 = vpop.xlane.xlu0 %2924
        %v2926 = vsel %vm638, %v2922, 0.0
        %2927 = vadd.xlane.f32.xlu0 %v2926
        %v2928 = vpop.xlane.xlu0 %2927
        %v2929 = vrcp.pop 32.0
        %v2930 = vmul.f32 %v2925, %v2929
        %v2931 = vmul.f32 %v2928, %v2929
        %v2932 = vsub.f32 %v2921, %v2930
        %v2933 = vsub.f32 %v2922, %v2931
        %v2934 = vmul.f32 %v2932, %v2932
        %v2935 = vmul.f32 %v2933, %v2933
        %v2936 = vsel %vm638, %v2934, 0.0
        %2937 = vadd.xlane.f32.xlu0 %v2936
        %v2938 = vpop.xlane.xlu0 %2937
        %v2939 = vsel %vm638, %v2935, 0.0
        %2940 = vadd.xlane.f32.xlu0 %v2939
        %v2941 = vpop.xlane.xlu0 %2940
        %v2942 = vmul.f32 %v2938, %v2929
        %v2943 = vmul.f32 %v2941, %v2929
        %v2944 = vadd.f32 %v2942, 1e-05
        %v2945 = vadd.f32 %v2943, 1e-05
        %v2946 = vrsqrt.pop %v2944
        %v2947 = vrsqrt.pop %v2945
        %v2948 = vmul.f32 %v2932, %v2946
        %v2949 = vmul.f32 %v2933, %v2947
        %v2950 = vld [vmem:[%s12] sm:$0x1]
        %v2952 = vlaneseq
        %v2953 = vshrl.u32 %v2952, 7
        %v2954 = vsub.s32 0, %v2953
        %v2955 = vrot.slane %v2950, %v2954
        %v2957 = vmul.f32 %v2948, %v2955
        %v2958 = vmul.f32 %v2949, %v2955
        %v2959 = vld [vmem:[%s13] sm:$0x1]
        %v2961 = vlaneseq
        %v2962 = vshrl.u32 %v2961, 7
        %v2963 = vsub.s32 0, %v2962
        %v2964 = vrot.slane %v2959, %v2963
        %v2966 = vadd.f32 %v2957, %v2964
        %v2967 = vadd.f32 %v2958, %v2964
        %2968 = vst.msk [vmem:[%s620] sm:$0xff] %vm638, %v2966
        %2969 = vst.msk [vmem:[%s620 + $0x8] sm:$0xff] %vm638, %v2967
        %s2970 = sand.u32 %s353, 1
        %s2971 = scalar_lea.sflag [#allocation4], %s2970
        %s2972 = sand.u32 %s353, 1
        %s2973 = smul.addr %s2972, 16
        %s2974 = scalar_lea.vmem [#allocation14], %s2973
        // Predicated region
        $region105: #{tpu_custom_call.1} parent=75 // pred_check
          %p2975 = pneg %p363
        $region106: #{tpu_custom_call.1} parent=75 // pred_check_branch
          %2977 = sbr.rel (%p2975) target = $region108
        $region107: #{tpu_custom_call.1} parent=75 // pred_region
          %s2979 = ssub.s32 256, 256
          %2980 = vsyncadd %s2971, %s2979
          %s2981 = smul.addr %s36, 2
          %s2982 = smul.addr %s2981, 128
          %s2983 = scalar_lea.hbm %s14, %s2982
          %s2984 = sshll.u32 %s2974, 4
          %s2985 = int_to_ptr.vmem [resolvable:$true] %s2984
          %2990 = dma.vmem_to_hbm [thread:$0]  %s2985, 256, %s2983, %s2971, 128, 128, 8
        $region108: #{tpu_custom_call.1} parent=75 // pred_fallthru
          _
      $region76: #{tpu_custom_call.1} parent=5 // pred_fallthru
        _
      %p2991 = scmp.le.s32.totalorder 2, %s31
      // Predicated region
      $region109: #{tpu_custom_call.1} parent=5 // pred_check
        %p2992 = pneg %p2991
      $region110: #{tpu_custom_call.1} parent=5 // pred_check_branch
        %2994 = sbr.rel (%p2992) target = $region112
      $region111: #{tpu_custom_call.1} parent=5 // pred_region
        %s2995 = ssub.s32 %s31, 2
        // Predicated region
        $region113: #{tpu_custom_call.1} parent=111 // pred_check
          %p2996 = pneg %p369
        $region114: #{tpu_custom_call.1} parent=111 // pred_check_branch
          %2998 = sbr.rel (%p2996) target = $region116
        $region115: #{tpu_custom_call.1} parent=111 // pred_region
          %s2999 = sand.u32 %s354, 1
          %s3000 = scalar_lea.sflag [#allocation4], %s2999
          %s3001 = sand.u32 %s354, 1
          %s3002 = smul.addr %s3001, 16
          %s3003 = scalar_lea.vmem [#allocation14], %s3002
          %3004 = dma.done %s3000, 256
        $region116: #{tpu_custom_call.1} parent=111 // pred_fallthru
          _
      $region112: #{tpu_custom_call.1} parent=5 // pred_fallthru
        _
    $region6: #{tpu_custom_call.1} parent=1 // loop_footer
      %s35 = sadd.s32 1, %s31
    $region7: #{tpu_custom_call.1} parent=1 // loop_footer_branch
      %30 = sbr.rel target = $region3
    $region8: #{tpu_custom_call.1} parent=1 // loop_exit
      _
    %3005 = vsyncpa [#allocation3], 1
    %s3006 = scalar_lea.sflag [#allocation3], 1
    %3007 = vsyncpa %s3006, 1
    %3008 = vsyncpa [#allocation6], 1
    %s3009 = scalar_lea.sflag [#allocation6], 1
    %3010 = vsyncpa %s3009, 1
    %3011 = vsyncpa [#allocation9], 1
    %3012 = vsyncpa [#allocation12], 1
    %3013 = vsyncpa [#allocation4], 1
    %s3014 = scalar_lea.sflag [#allocation4], 1
    %3015 = vsyncpa %s3014, 1

</llo_original>
